<compile_context>
chip_gen: v5e
topology: v5e:2x2
jax: 0.10.0
libtpu: 0.0.40
codegen_flags: <defaults>
</compile_context>

<pallas_src>
import math
from functools import partial

import jax
import jax.numpy as jnp
from jax.experimental import pallas as pl
from jax.experimental.pallas import tpu as pltpu

INV_SQRT2 = 1.0 / math.sqrt(2.0)
LANE = 128


def _silu(x):
    return x * jax.nn.sigmoid(x)


def _ceil_to(x, m):
    return -(-x // m) * m


def atom_embedding_kernel(scale_ref, idx_ref, m_st_ref, rbf_ref,
                          w_rbf_ref, w1_ref, w_res_ref, out_ref, acc_ref,
                          *, n_residual):
    """Grid = (atom tiles, edge tiles).  acc_ref: (TN, emb_edge) f32 scratch."""
    i = pl.program_id(0)                 # atom tile
    k = pl.program_id(1)                 # edge tile (reduction axis)
    tn = acc_ref.shape[0]
    te = m_st_ref.shape[0]

    # ---- init accumulator for this atom tile -------------------------------
    @pl.when(k == 0)
    def _init():
        acc_ref[...] = jnp.zeros_like(acc_ref)

    # ---- edge stage: x = m_st * (rbf @ W_rbf) for this edge tile -----------
    rbf_proj = jnp.dot(rbf_ref[...], w_rbf_ref[...],
                       preferred_element_type=jnp.float32)        # (TE, C) f32
    x = (m_st_ref[...].astype(jnp.float32) * rbf_proj)            # (TE, C) f32
    x = x.astype(jnp.bfloat16)                                    # bf16 MXU path

    # ---- tiled scatter-add: onehot(TN, TE) @ x(TE, C) ----------------------
    # atom ids covered by this atom tile vs. target indices of this edge tile.
    atom_ids = jax.lax.broadcasted_iota(jnp.int32, (tn, te), 0) + i * tn
    onehot = (atom_ids == idx_ref[...]).astype(jnp.bfloat16)      # (TN, TE), exact 0/1
    acc_ref[...] += jnp.dot(onehot, x, preferred_element_type=jnp.float32)

    # ---- atom stage: ScaleFactor + Dense/act + residual stack --------------
    @pl.when(k == pl.num_programs(1) - 1)
    def _finalize():
        x2 = acc_ref[...] * scale_ref[...]                        # (TN, C) * (1, 1)
        y = _silu(jnp.dot(x2.astype(jnp.bfloat16), w1_ref[...],
                          preferred_element_type=jnp.float32))    # (TN, A) f32
        for r in range(n_residual):                               # unrolled
            t = _silu(jnp.dot(y.astype(jnp.bfloat16), w_res_ref[2 * r],
                              preferred_element_type=jnp.float32))
            t = _silu(jnp.dot(t.astype(jnp.bfloat16), w_res_ref[2 * r + 1],
                              preferred_element_type=jnp.float32))
            y = (y + t) * INV_SQRT2
        out_ref[...] = y.astype(out_ref.dtype)


def atom_embedding(h, m_st, rbf, idx_t, params, *, tn=128, te=256):
    """h: (N, emb_atom) -- only N is used, as in the PyTorch forward.

    For real workloads pick larger edge tiles (te ~ 2k-8k on v6e's 128 MiB VMEM,
    ~1k-2k on v7x's 64 MiB) and keep tn a multiple of 128.
    """
    N, emb_atom = h.shape
    E, emb_edge = m_st.shape
    emb_rbf = rbf.shape[1]
    w_rbf, w1, w_res, scale = params["w_rbf"], params["w1"], params["w_res"], params["scale"]
    n_residual = w_res.shape[0] // 2

    # lane-dense / tile-aligned padded sizes
    A = _ceil_to(emb_atom, LANE)        # atom feature dim
    C = _ceil_to(emb_edge, LANE)        # edge feature dim
    R = _ceil_to(emb_rbf, LANE)         # rbf feature dim (contraction)
    Np = _ceil_to(N, tn)
    Ep = _ceil_to(E, te)

    cdt = jnp.bfloat16                  # compute dtype for MXU operands

    def pad2(x, rows, cols, dt):
        return jnp.pad(x, ((0, rows - x.shape[0]), (0, cols - x.shape[1]))).astype(dt)

    m_st_p  = pad2(m_st, Ep, C, cdt)
    rbf_p   = pad2(rbf, Ep, R, cdt)
    w_rbf_p = pad2(w_rbf, R, C, cdt)
    w1_p    = pad2(w1, C, A, cdt)
    w_res_p = jnp.pad(w_res, ((0, 0), (0, A - emb_atom), (0, A - emb_atom))).astype(cdt)
    # padded edges point at sentinel atom Np (>= any real/padded atom id) -> match nothing
    idx_p   = jnp.pad(idx_t.astype(jnp.int32), (0, Ep - E),
                      constant_values=Np).reshape(1, Ep)
    scale_p = jnp.asarray(scale, jnp.float32).reshape(1, 1)

    grid = (Np // tn, Ep // te)
    kernel = partial(atom_embedding_kernel, n_residual=n_residual)

    out = pl.pallas_call(
        kernel,
        grid=grid,
        in_specs=[
            pl.BlockSpec((1, 1), lambda i, k: (0, 0)),                      # scale
            pl.BlockSpec((1, te), lambda i, k: (0, k)),                     # idx_t tile
            pl.BlockSpec((te, C), lambda i, k: (k, 0)),                     # m_st tile
            pl.BlockSpec((te, R), lambda i, k: (k, 0)),                     # rbf tile
            pl.BlockSpec((R, C), lambda i, k: (0, 0)),                      # w_rbf (resident)
            pl.BlockSpec((C, A), lambda i, k: (0, 0)),                      # w1 (resident)
            pl.BlockSpec((2 * n_residual, A, A), lambda i, k: (0, 0, 0)),   # w_res (resident)
        ],
        out_specs=pl.BlockSpec((tn, A), lambda i, k: (i, 0)),               # lane-dense tile
        out_shape=jax.ShapeDtypeStruct((Np, A), jnp.float32),
        scratch_shapes=[pltpu.VMEM((tn, C), jnp.float32)],                  # scatter accumulator
        compiler_params=pltpu.CompilerParams(
            dimension_semantics=("parallel", "arbitrary")),
    )(scale_p, idx_p, m_st_p, rbf_p, w_rbf_p, w1_p, w_res_p)

    return out[:N, :emb_atom]


def init_params(key, emb_size_atom, emb_size_edge, emb_size_rbf, n_residual):
    """Deterministic synthetic weights, stored bf16 (in, out) per the perf review."""
    ks = jax.random.split(key, 2 + 2 * n_residual)

    def dense(k, fan_in, fan_out):
        w = jax.random.normal(k, (fan_in, fan_out), jnp.float32) / math.sqrt(fan_in)
        return w.astype(jnp.bfloat16)

    w_rbf = dense(ks[0], emb_size_rbf, emb_size_edge)
    w1 = dense(ks[1], emb_size_edge, emb_size_atom)
    w_res = jnp.stack([dense(ks[2 + i], emb_size_atom, emb_size_atom)
                       for i in range(2 * n_residual)])
    scale = jnp.array([1.0], jnp.float32)   # ScaleFactor initial value
    return dict(w_rbf=w_rbf, w1=w1, w_res=w_res, scale=scale)


def reference_jax(h, m_st, rbf, idx_t, params):
    """Pure-JAX f32 reference mirroring the PyTorch forward (same bf16 weight values)."""
    f32 = lambda a: jnp.asarray(a, jnp.float32)
    N = h.shape[0]
    x = f32(m_st) * (f32(rbf) @ f32(params["w_rbf"]))
    x2 = jnp.zeros((N, x.shape[1]), jnp.float32).at[idx_t].add(x)
    x = x2 * f32(params["scale"])[0]
    y = jax.nn.silu(x @ f32(params["w1"]))
    n_residual = params["w_res"].shape[0] // 2
    for r in range(n_residual):
        t = jax.nn.silu(y @ f32(params["w_res"][2 * r]))
        t = jax.nn.silu(t @ f32(params["w_res"][2 * r + 1]))
        y = (y + t) * INV_SQRT2
    return y


if __name__ == "__main__":
    # Small, deliberately unaligned shapes (wrapper pads to 128-lane / tile multiples).
    N, E = 200, 500
    emb_size_atom, emb_size_edge, emb_size_rbf = 64, 64, 16
    n_residual = 2

    key = jax.random.PRNGKey(0)
    k_h, k_m, k_r, k_i, k_p = jax.random.split(key, 5)

    h = jax.random.normal(k_h, (N, emb_size_atom), jnp.float32)
    m_st = jax.random.normal(k_m, (E, emb_size_edge), jnp.float32).astype(jnp.bfloat16)
    rbf = jax.random.normal(k_r, (E, emb_size_rbf), jnp.float32).astype(jnp.bfloat16)
    idx_t = jax.random.randint(k_i, (E,), 0, N, jnp.int32)

    params = init_params(k_p, emb_size_atom, emb_size_edge, emb_size_rbf, n_residual)

    out = jax.block_until_ready(
        atom_embedding(h, m_st, rbf, idx_t, params, tn=128, te=256))
    ref = reference_jax(h, m_st, rbf, idx_t, params)

    assert out.shape == (N, emb_size_atom)
    # Tolerance relaxed vs. the strict-f32 reference: the kernel keeps bf16 edge
    # features / activations on the MXU path (f32 accumulation) per the perf review.
    rel_err = jnp.linalg.norm(out - ref) / jnp.linalg.norm(ref)
    assert rel_err < 2e-2, f"relative error too large: {rel_err}"
    assert jnp.allclose(out, ref, atol=1e-1, rtol=1e-1), "mismatch vs reference"

    print("KERNEL_OK")
</pallas_src>

<mosaic_0001>
module attributes {stable_mosaic.version = 11 : i64} {
  func.func @atom_embedding_kernel(%arg0: i32, %arg1: i32, %arg2: memref<1x1xf32, #tpu.memory_space<vmem>>, %arg3: memref<1x256xi32, #tpu.memory_space<vmem>>, %arg4: memref<256x128xbf16, #tpu.memory_space<vmem>>, %arg5: memref<256x128xbf16, #tpu.memory_space<vmem>>, %arg6: memref<128x128xbf16, #tpu.memory_space<vmem>>, %arg7: memref<128x128xbf16, #tpu.memory_space<vmem>>, %arg8: memref<4x128x128xbf16, #tpu.memory_space<vmem>>, %arg9: memref<128x128xf32, #tpu.memory_space<vmem>>, %arg10: memref<128x128xf32, #tpu.memory_space<vmem>>) attributes {dimension_semantics = [#tpu.dimension_semantics<parallel>, #tpu.dimension_semantics<arbitrary>], iteration_bounds = array<i64: 2, 2>, scalar_prefetch = 0 : i64, scratch_operands = 1 : i64, tpu.core_type = #tpu.core_type<tc>, window_params = [{pipeline_mode = #tpu.pipeline_mode<synchronous>, transform_indices = @transform_0, window_bounds = array<i64: 1, 1>}, {transform_indices = @transform_1, window_bounds = array<i64: 1, 256>}, {transform_indices = @transform_2, window_bounds = array<i64: 256, 128>}, {transform_indices = @transform_3, window_bounds = array<i64: 256, 128>}, {pipeline_mode = #tpu.pipeline_mode<synchronous>, transform_indices = @transform_4, window_bounds = array<i64: 128, 128>}, {pipeline_mode = #tpu.pipeline_mode<synchronous>, transform_indices = @transform_5, window_bounds = array<i64: 128, 128>}, {pipeline_mode = #tpu.pipeline_mode<synchronous>, transform_indices = @transform_6, window_bounds = array<i64: 4, 128, 128>}, {transform_indices = @transform_7, window_bounds = array<i64: 128, 128>}]} {
    %c0_i32 = arith.constant 0 : i32
    %0 = arith.cmpi eq, %arg1, %c0_i32 : i32
    %1 = arith.extui %0 : i1 to i32
    %c0_i32_0 = arith.constant 0 : i32
    %2 = arith.cmpi ne, %1, %c0_i32_0 : i32
    scf.if %2 {
      %cst_14 = arith.constant 0.000000e+00 : f32
      %27 = vector.broadcast %cst_14 : f32 to vector<128x128xf32>
      %c0_15 = arith.constant 0 : index
      %c0_16 = arith.constant 0 : index
      %28 = vector.load %arg10[%c0_15, %c0_16] : memref<128x128xf32, #tpu.memory_space<vmem>>, vector<128x128xf32>
      tpu.vector_store %arg10[%c0_15, %c0_16], %27 {strides = array<i32>} : memref<128x128xf32, #tpu.memory_space<vmem>>, vector<128x128xf32>,
    } else {
    }
    %c0 = arith.constant 0 : index
    %c0_1 = arith.constant 0 : index
    %3 = vector.load %arg5[%c0, %c0_1] : memref<256x128xbf16, #tpu.memory_space<vmem>>, vector<256x128xbf16>
    %c0_2 = arith.constant 0 : index
    %c0_3 = arith.constant 0 : index
    %4 = vector.load %arg6[%c0_2, %c0_3] : memref<128x128xbf16, #tpu.memory_space<vmem>>, vector<128x128xbf16>
    %cst = arith.constant dense<0.000000e+00> : vector<256x128xf32>
    %5 = tpu.matmul %3, %4, %cst {dimension_numbers = #tpu.dot_dimension_numbers<[1], [0], [0], [1], [0, 0, 1, 1], [], []>} : vector<256x128xbf16>, vector<128x128xbf16>, vector<256x128xf32> -> vector<256x128xf32>
    %c0_4 = arith.constant 0 : index
    %c0_5 = arith.constant 0 : index
    %6 = vector.load %arg4[%c0_4, %c0_5] : memref<256x128xbf16, #tpu.memory_space<vmem>>, vector<256x128xbf16>
    %7 = arith.extf %6 : vector<256x128xbf16> to vector<256x128xf32>
    %8 = arith.mulf %7, %5 : vector<256x128xf32>
    %9 = arith.truncf %8 : vector<256x128xf32> to vector<256x128xbf16>
    %10 = tpu.iota {dimensions = array<i32: 0>} : vector<128x256xi32>
    %c128_i32 = arith.constant 128 : i32
    %11 = arith.muli %arg0, %c128_i32 : i32
    %12 = vector.broadcast %11 : i32 to vector<128x256xi32>
    %13 = arith.addi %10, %12 : vector<128x256xi32>
    %c0_6 = arith.constant 0 : index
    %c0_7 = arith.constant 0 : index
    %14 = vector.load %arg3[%c0_6, %c0_7] : memref<1x256xi32, #tpu.memory_space<vmem>>, vector<1x256xi32>
    %15 = vector.broadcast %14 : vector<1x256xi32> to vector<128x256xi32>
    %16 = arith.cmpi eq, %13, %15 : vector<128x256xi32>
    %17 = arith.extui %16 : vector<128x256xi1> to vector<128x256xi32>
    %18 = arith.sitofp %17 : vector<128x256xi32> to vector<128x256xf32>
    %19 = arith.truncf %18 : vector<128x256xf32> to vector<128x256xbf16>
    %c0_8 = arith.constant 0 : index
    %c0_9 = arith.constant 0 : index
    %20 = vector.load %arg10[%c0_8, %c0_9] : memref<128x128xf32, #tpu.memory_space<vmem>>, vector<128x128xf32>
    %cst_10 = arith.constant dense<0.000000e+00> : vector<128x128xf32>
    %21 = tpu.matmul %19, %9, %cst_10 {dimension_numbers = #tpu.dot_dimension_numbers<[1], [0], [0], [1], [0, 0, 1, 1], [], []>} : vector<128x256xbf16>, vector<256x128xbf16>, vector<128x128xf32> -> vector<128x128xf32>
    %22 = arith.addf %20, %21 : vector<128x128xf32>
    %c0_11 = arith.constant 0 : index
    %c0_12 = arith.constant 0 : index
    %23 = vector.load %arg10[%c0_11, %c0_12] : memref<128x128xf32, #tpu.memory_space<vmem>>, vector<128x128xf32>
    tpu.vector_store %arg10[%c0_11, %c0_12], %22 {strides = array<i32>} : memref<128x128xf32, #tpu.memory_space<vmem>>, vector<128x128xf32>,
    %c1_i32 = arith.constant 1 : i32
    %24 = arith.cmpi eq, %arg1, %c1_i32 : i32
    %25 = arith.extui %24 : i1 to i32
    %c0_i32_13 = arith.constant 0 : i32
    %26 = arith.cmpi ne, %25, %c0_i32_13 : i32
    scf.if %26 {
      %c0_14 = arith.constant 0 : index
      %c0_15 = arith.constant 0 : index
      %27 = vector.load %arg10[%c0_14, %c0_15] : memref<128x128xf32, #tpu.memory_space<vmem>>, vector<128x128xf32>
      %c0_16 = arith.constant 0 : index
      %c0_17 = arith.constant 0 : index
      %28 = vector.load %arg2[%c0_16, %c0_17] : memref<1x1xf32, #tpu.memory_space<vmem>>, vector<1x1xf32>
      %29 = vector.broadcast %28 : vector<1x1xf32> to vector<128x128xf32>
      %30 = arith.mulf %27, %29 : vector<128x128xf32>
      %31 = arith.truncf %30 : vector<128x128xf32> to vector<128x128xbf16>
      %c0_18 = arith.constant 0 : index
      %c0_19 = arith.constant 0 : index
      %32 = vector.load %arg7[%c0_18, %c0_19] : memref<128x128xbf16, #tpu.memory_space<vmem>>, vector<128x128xbf16>
      %cst_20 = arith.constant dense<0.000000e+00> : vector<128x128xf32>
      %33 = tpu.matmul %31, %32, %cst_20 {dimension_numbers = #tpu.dot_dimension_numbers<[1], [0], [0], [1], [0, 0, 1, 1], [], []>} : vector<128x128xbf16>, vector<128x128xbf16>, vector<128x128xf32> -> vector<128x128xf32>
      %34 = arith.negf %33 : vector<128x128xf32>
      %35 = math.exp %34 : vector<128x128xf32>
      %cst_21 = arith.constant 1.000000e+00 : f32
      %36 = vector.broadcast %cst_21 : f32 to vector<128x128xf32>
      %37 = arith.addf %36, %35 : vector<128x128xf32>
      %38 = arith.divf %36, %37 : vector<128x128xf32>
      %39 = arith.mulf %33, %38 : vector<128x128xf32>
      %40 = arith.truncf %39 : vector<128x128xf32> to vector<128x128xbf16>
      %c0_22 = arith.constant 0 : index
      %c0_23 = arith.constant 0 : index
      %c0_24 = arith.constant 0 : index
      %41 = vector.load %arg8[%c0_22, %c0_23, %c0_24] : memref<4x128x128xbf16, #tpu.memory_space<vmem>>, vector<1x128x128xbf16>
      %42 = vector.shape_cast %41 : vector<1x128x128xbf16> to vector<128x128xbf16>
      %cst_25 = arith.constant dense<0.000000e+00> : vector<128x128xf32>
      %43 = tpu.matmul %40, %42, %cst_25 {dimension_numbers = #tpu.dot_dimension_numbers<[1], [0], [0], [1], [0, 0, 1, 1], [], []>} : vector<128x128xbf16>, vector<128x128xbf16>, vector<128x128xf32> -> vector<128x128xf32>
      %44 = arith.negf %43 : vector<128x128xf32>
      %45 = math.exp %44 : vector<128x128xf32>
      %cst_26 = arith.constant 1.000000e+00 : f32
      %46 = vector.broadcast %cst_26 : f32 to vector<128x128xf32>
      %47 = arith.addf %46, %45 : vector<128x128xf32>
      %48 = arith.divf %46, %47 : vector<128x128xf32>
      %49 = arith.mulf %43, %48 : vector<128x128xf32>
      %50 = arith.truncf %49 : vector<128x128xf32> to vector<128x128xbf16>
      %c1 = arith.constant 1 : index
      %c0_27 = arith.constant 0 : index
      %c0_28 = arith.constant 0 : index
      %51 = vector.load %arg8[%c1, %c0_27, %c0_28] : memref<4x128x128xbf16, #tpu.memory_space<vmem>>, vector<1x128x128xbf16>
      %52 = vector.shape_cast %51 : vector<1x128x128xbf16> to vector<128x128xbf16>
      %cst_29 = arith.constant dense<0.000000e+00> : vector<128x128xf32>
      %53 = tpu.matmul %50, %52, %cst_29 {dimension_numbers = #tpu.dot_dimension_numbers<[1], [0], [0], [1], [0, 0, 1, 1], [], []>} : vector<128x128xbf16>, vector<128x128xbf16>, vector<128x128xf32> -> vector<128x128xf32>
      %54 = arith.negf %53 : vector<128x128xf32>
      %55 = math.exp %54 : vector<128x128xf32>
      %cst_30 = arith.constant 1.000000e+00 : f32
      %56 = vector.broadcast %cst_30 : f32 to vector<128x128xf32>
      %57 = arith.addf %56, %55 : vector<128x128xf32>
      %58 = arith.divf %56, %57 : vector<128x128xf32>
      %59 = arith.mulf %53, %58 : vector<128x128xf32>
      %60 = arith.addf %39, %59 : vector<128x128xf32>
      %cst_31 = arith.constant 0.707106769 : f32
      %61 = vector.broadcast %cst_31 : f32 to vector<128x128xf32>
      %62 = arith.mulf %60, %61 : vector<128x128xf32>
      %63 = arith.truncf %62 : vector<128x128xf32> to vector<128x128xbf16>
      %c2 = arith.constant 2 : index
      %c0_32 = arith.constant 0 : index
      %c0_33 = arith.constant 0 : index
      %64 = vector.load %arg8[%c2, %c0_32, %c0_33] : memref<4x128x128xbf16, #tpu.memory_space<vmem>>, vector<1x128x128xbf16>
      %65 = vector.shape_cast %64 : vector<1x128x128xbf16> to vector<128x128xbf16>
      %cst_34 = arith.constant dense<0.000000e+00> : vector<128x128xf32>
      %66 = tpu.matmul %63, %65, %cst_34 {dimension_numbers = #tpu.dot_dimension_numbers<[1], [0], [0], [1], [0, 0, 1, 1], [], []>} : vector<128x128xbf16>, vector<128x128xbf16>, vector<128x128xf32> -> vector<128x128xf32>
      %67 = arith.negf %66 : vector<128x128xf32>
      %68 = math.exp %67 : vector<128x128xf32>
      %cst_35 = arith.constant 1.000000e+00 : f32
      %69 = vector.broadcast %cst_35 : f32 to vector<128x128xf32>
      %70 = arith.addf %69, %68 : vector<128x128xf32>
      %71 = arith.divf %69, %70 : vector<128x128xf32>
      %72 = arith.mulf %66, %71 : vector<128x128xf32>
      %73 = arith.truncf %72 : vector<128x128xf32> to vector<128x128xbf16>
      %c3 = arith.constant 3 : index
      %c0_36 = arith.constant 0 : index
      %c0_37 = arith.constant 0 : index
      %74 = vector.load %arg8[%c3, %c0_36, %c0_37] : memref<4x128x128xbf16, #tpu.memory_space<vmem>>, vector<1x128x128xbf16>
      %75 = vector.shape_cast %74 : vector<1x128x128xbf16> to vector<128x128xbf16>
      %cst_38 = arith.constant dense<0.000000e+00> : vector<128x128xf32>
      %76 = tpu.matmul %73, %75, %cst_38 {dimension_numbers = #tpu.dot_dimension_numbers<[1], [0], [0], [1], [0, 0, 1, 1], [], []>} : vector<128x128xbf16>, vector<128x128xbf16>, vector<128x128xf32> -> vector<128x128xf32>
      %77 = arith.negf %76 : vector<128x128xf32>
      %78 = math.exp %77 : vector<128x128xf32>
      %cst_39 = arith.constant 1.000000e+00 : f32
      %79 = vector.broadcast %cst_39 : f32 to vector<128x128xf32>
      %80 = arith.addf %79, %78 : vector<128x128xf32>
      %81 = arith.divf %79, %80 : vector<128x128xf32>
      %82 = arith.mulf %76, %81 : vector<128x128xf32>
      %83 = arith.addf %62, %82 : vector<128x128xf32>
      %cst_40 = arith.constant 0.707106769 : f32
      %84 = vector.broadcast %cst_40 : f32 to vector<128x128xf32>
      %85 = arith.mulf %83, %84 : vector<128x128xf32>
      %c0_41 = arith.constant 0 : index
      %c0_42 = arith.constant 0 : index
      %86 = vector.load %arg9[%c0_41, %c0_42] : memref<128x128xf32, #tpu.memory_space<vmem>>, vector<128x128xf32>
      tpu.vector_store %arg9[%c0_41, %c0_42], %85 {strides = array<i32>} : memref<128x128xf32, #tpu.memory_space<vmem>>, vector<128x128xf32>,
    } else {
    }
    return
  }
  func.func @transform_0(%arg0: i32, %arg1: i32) -> (i32, i32) {
    %c0_i32 = arith.constant 0 : i32
    %c0_i32_0 = arith.constant 0 : i32
    %c0_i32_1 = arith.constant 0 : i32
    return %c0_i32, %c0_i32_0 : i32, i32
  }
  func.func @transform_1(%arg0: i32, %arg1: i32) -> (i32, i32) {
    %c0_i32 = arith.constant 0 : i32
    %c0_i32_0 = arith.constant 0 : i32
    return %c0_i32, %arg1 : i32, i32
  }
  func.func @transform_2(%arg0: i32, %arg1: i32) -> (i32, i32) {
    %c0_i32 = arith.constant 0 : i32
    %c0_i32_0 = arith.constant 0 : i32
    return %arg1, %c0_i32 : i32, i32
  }
  func.func @transform_3(%arg0: i32, %arg1: i32) -> (i32, i32) {
    %c0_i32 = arith.constant 0 : i32
    %c0_i32_0 = arith.constant 0 : i32
    return %arg1, %c0_i32 : i32, i32
  }
  func.func @transform_4(%arg0: i32, %arg1: i32) -> (i32, i32) {
    %c0_i32 = arith.constant 0 : i32
    %c0_i32_0 = arith.constant 0 : i32
    %c0_i32_1 = arith.constant 0 : i32
    return %c0_i32, %c0_i32_0 : i32, i32
  }
  func.func @transform_5(%arg0: i32, %arg1: i32) -> (i32, i32) {
    %c0_i32 = arith.constant 0 : i32
    %c0_i32_0 = arith.constant 0 : i32
    %c0_i32_1 = arith.constant 0 : i32
    return %c0_i32, %c0_i32_0 : i32, i32
  }
  func.func @transform_6(%arg0: i32, %arg1: i32) -> (i32, i32, i32) {
    %c0_i32 = arith.constant 0 : i32
    %c0_i32_0 = arith.constant 0 : i32
    %c0_i32_1 = arith.constant 0 : i32
    %c0_i32_2 = arith.constant 0 : i32
    return %c0_i32, %c0_i32_0, %c0_i32_1 : i32, i32, i32
  }
  func.func @transform_7(%arg0: i32, %arg1: i32) -> (i32, i32) {
    %c0_i32 = arith.constant 0 : i32
    %c0_i32_0 = arith.constant 0 : i32
    return %arg0, %c0_i32 : i32, i32
  }
}

</mosaic_0001>

<llo_original>
// kernel: tpu_custom_call.1
$region0: #{tpu_custom_call.1}
  #allocation0 [shape = 'u32[]', space=smem, size = 0x4, offset = 0x4, fixed_abs, tag = 'smem constant byte address 0x4 - core index']
  #allocation1 [shape = 'u32[72,128]{1,0:T(1,128)}', space=vmem, size = 0x9000, scoped, tag = 'internal scratch']
  #allocation2 [shape = 'f32[128,128]{1,0:T(8,128)}', space=vmem, size = 0x10000, scoped, tag = 'scratch operand']
  #allocation3 [shape = 'f32[1,1]{1,0:T(1,128)S(1)}', space=vmem, size = 0x200, scoped, tag = 'scoped memory for tpu_custom_call.1']
  %s0 = inlined_call_operand.<no memory space> [shape: f32[1,1], index: 0, kind: input, shape index: {}]
  %s1 = inlined_call_operand.hbm [shape: s32[1,512], index: 1, kind: input, shape index: {}]
  %s2 = inlined_call_operand.hbm [shape: bf16[512,128], index: 2, kind: input, shape index: {}]
  %s3 = inlined_call_operand.hbm [shape: bf16[512,128], index: 3, kind: input, shape index: {}]
  %s4 = inlined_call_operand.hbm [shape: bf16[128,128], index: 4, kind: input, shape index: {}]
  %s5 = inlined_call_operand.hbm [shape: bf16[128,128], index: 5, kind: input, shape index: {}]
  %s6 = inlined_call_operand.hbm [shape: bf16[4,128,128], index: 6, kind: input, shape index: {}]
  %s7 = inlined_call_operand.hbm [shape: f32[256,128], index: 7, kind: output, shape index: {}]
  %s8 = sld [smem:[#allocation0]]
  $region93: #{tpu_custom_call.1} parent=0
    _
  %s10 = ssub.s32 1, %s8
  %s11 = scalar_select 0, %s10, %s8
  %v12 = vstv %s0
  %13 = vst [vmem:[#allocation3] sm:$0x1] %v12
  $region1: #{tpu_custom_call.1} parent=0
    #allocation4 [shape = 'u8[2048]{0}', space=vmem, size = 0x800, scoped, tag = 'input window, operand 1']
    #allocation5 [shape = 's32[2]{0}', space=sflag, size = 0x8, scoped, tag = 'scoped memory for tpu_custom_call.1']
    #allocation6 [shape = 's32[2]{0}', space=sflag, size = 0x8, scoped, tag = 'scoped memory for tpu_custom_call.1']
    #allocation7 [shape = 'u8[131072]{0}', space=vmem, size = 0x20000, scoped, tag = 'input window, operand 2']
    #allocation8 [shape = 's32[2]{0}', space=sflag, size = 0x8, scoped, tag = 'scoped memory for tpu_custom_call.1']
    #allocation9 [shape = 'u8[131072]{0}', space=vmem, size = 0x20000, scoped, tag = 'input window, operand 3']
    #allocation10 [shape = 'u8[32768]{0}', space=vmem, size = 0x8000, scoped, tag = 'input window, operand 4, single buffered']
    #allocation11 [shape = 's32[1]{0}', space=sflag, size = 0x4, scoped, tag = 'scoped memory for tpu_custom_call.1']
    #allocation12 [shape = 'u8[32768]{0}', space=vmem, size = 0x8000, scoped, tag = 'input window, operand 5, single buffered']
    #allocation13 [shape = 'u8[131072]{0}', space=vmem, size = 0x20000, scoped, tag = 'input window, operand 6, single buffered']
    #allocation14 [shape = 's32[1]{0}', space=sflag, size = 0x4, scoped, tag = 'scoped memory for tpu_custom_call.1']
    #allocation15 [shape = 'u8[131072]{0}', space=vmem, size = 0x20000, scoped, tag = 'output window, operand 0']
    %14 = vsyncpa [#allocation5], 0
    %s15 = scalar_lea.sflag [#allocation5], 1
    %16 = vsyncpa %s15, 0
    %17 = vsyncpa [#allocation8], 0
    %s18 = scalar_lea.sflag [#allocation8], 1
    %19 = vsyncpa %s18, 0
    %20 = vsyncpa [#allocation11], 0
    %21 = vsyncpa [#allocation14], 0
    %22 = vsyncpa [#allocation6], 0
    %s23 = scalar_lea.sflag [#allocation6], 1
    %24 = vsyncpa %s23, 0
    loop: start=0, step=1, limit=6
    $region2: #{tpu_custom_call.1} parent=1 // loop_pre_header
      _
    $region3: #{tpu_custom_call.1} parent=1 // loop_header
      %s26 = sphi 0, %s30
      %p27 = scmp.ge.s32.totalorder %s26, 6
      %s33 = sphi 0, %s45
      %s34 = sphi 0, %s41
      %s35 = sphi 0, %s33
      %s36 = sphi 0, %s34
      %s37 = sphi 0, %s35
      %s38 = sphi 0, %s36
      %s46 = sphi 0, %s46
      %s48 = sphi 0, %s46
      %s49 = sphi 0, %s48
      %s63 = sphi 0, %s49
      %s69 = sphi 0, %s71
      %s72 = sphi 0, %s69
      %s73 = sphi 0, %s72
      %s89 = sphi 0, %s73
      %s95 = sphi 0, %s97
      %s98 = sphi 0, %s95
      %s99 = sphi 0, %s98
      %s115 = sphi 0, %s99
      %s121 = sphi 0, %s123
      %s124 = sphi 0, %s121
      %s125 = sphi 0, %s124
      %s141 = sphi 0, %s125
      %s145 = sphi 0, %s145
      %s147 = sphi 0, %s145
      %s148 = sphi 0, %s147
      %s162 = sphi 0, %s148
      %s166 = sphi 0, %s166
      %s168 = sphi 0, %s166
      %s169 = sphi 0, %s168
      %s183 = sphi 0, %s169
      %s187 = sphi 0, %s187
      %s189 = sphi 0, %s187
      %s190 = sphi 0, %s189
      %s204 = sphi 0, %s190
      %s210 = sphi 0, %s212
      %s213 = sphi 0, %s210
      %s214 = sphi 0, %s213
      %s230 = sphi 0, %s214
    $region4: #{tpu_custom_call.1} parent=1 // loop_header_branch
      %29 = sbr.rel (%p27) target = $region8
    $region5: #{tpu_custom_call.1} parent=1 // loop_body
      %s31 = ssub.s32 %s26, 1
      %s32 = ssub.s32 %s26, 2
      %s39 = sadd.s32 1, %s34
      %p40 = scmp.ge.s32.totalorder %s39, 2
      %s41 = scalar_select %p40, 0, %s39
      %s42 = sadd.s32 1, %s33
      %s43 = scalar_select %p40, %s42, %s33
      %p44 = scmp.ge.s32.totalorder %s43, 2
      %s45 = scalar_select %p44, 0, %s43
      %s47 = sadd.s32 %s46, 1
      %p50 = scmp.eq.s32.totalorder %s26, 3
      %p51 = scmp.ne.s32.totalorder %s46, %s48
      %p52 = scmp.eq.s32.totalorder %s26, 0
      %p53 = por %p51, %p52
      %p54 = scmp.ne.s32.totalorder %s46, %s48
      %p55 = scmp.eq.s32.totalorder %s31, 3
      %p56 = por %p54, %p55
      %p57 = scmp.ne.s32.totalorder %s48, %s49
      %p58 = scmp.eq.s32.totalorder %s31, 0
      %p59 = por %p57, %p58
      %p60 = scmp.ne.s32.totalorder %s48, %s49
      %p61 = scmp.eq.s32.totalorder %s32, 3
      %p62 = por %p60, %p61
      %p64 = scmp.ne.s32.totalorder %s49, %s63
      %p65 = scmp.eq.s32.totalorder %s32, 0
      %p66 = por %p64, %p65
      %s67 = ssub.s32 %s34, %s41
      %p68 = scmp.eq.s32.totalorder %s67, 0
      %s70 = sadd.s32 %s69, 1
      %s71 = scalar_select %p68, %s69, %s70
      %p74 = pneg %p68
      %p75 = scmp.eq.s32.totalorder %s26, 3
      %p76 = por %p74, %p75
      %p77 = scmp.ne.s32.totalorder %s69, %s72
      %p78 = scmp.eq.s32.totalorder %s26, 0
      %p79 = por %p77, %p78
      %p80 = scmp.ne.s32.totalorder %s69, %s72
      %p81 = scmp.eq.s32.totalorder %s31, 3
      %p82 = por %p80, %p81
      %p83 = scmp.ne.s32.totalorder %s72, %s73
      %p84 = scmp.eq.s32.totalorder %s31, 0
      %p85 = por %p83, %p84
      %p86 = scmp.ne.s32.totalorder %s72, %s73
      %p87 = scmp.eq.s32.totalorder %s32, 3
      %p88 = por %p86, %p87
      %p90 = scmp.ne.s32.totalorder %s73, %s89
      %p91 = scmp.eq.s32.totalorder %s32, 0
      %p92 = por %p90, %p91
      %s93 = ssub.s32 %s34, %s41
      %p94 = scmp.eq.s32.totalorder %s93, 0
      %s96 = sadd.s32 %s95, 1
      %s97 = scalar_select %p94, %s95, %s96
      %p100 = pneg %p94
      %p101 = scmp.eq.s32.totalorder %s26, 3
      %p102 = por %p100, %p101
      %p103 = scmp.ne.s32.totalorder %s95, %s98
      %p104 = scmp.eq.s32.totalorder %s26, 0
      %p105 = por %p103, %p104
      %p106 = scmp.ne.s32.totalorder %s95, %s98
      %p107 = scmp.eq.s32.totalorder %s31, 3
      %p108 = por %p106, %p107
      %p109 = scmp.ne.s32.totalorder %s98, %s99
      %p110 = scmp.eq.s32.totalorder %s31, 0
      %p111 = por %p109, %p110
      %p112 = scmp.ne.s32.totalorder %s98, %s99
      %p113 = scmp.eq.s32.totalorder %s32, 3
      %p114 = por %p112, %p113
      %p116 = scmp.ne.s32.totalorder %s99, %s115
      %p117 = scmp.eq.s32.totalorder %s32, 0
      %p118 = por %p116, %p117
      %s119 = ssub.s32 %s34, %s41
      %p120 = scmp.eq.s32.totalorder %s119, 0
      %s122 = sadd.s32 %s121, 1
      %s123 = scalar_select %p120, %s121, %s122
      %p126 = pneg %p120
      %p127 = scmp.eq.s32.totalorder %s26, 3
      %p128 = por %p126, %p127
      %p129 = scmp.ne.s32.totalorder %s121, %s124
      %p130 = scmp.eq.s32.totalorder %s26, 0
      %p131 = por %p129, %p130
      %p132 = scmp.ne.s32.totalorder %s121, %s124
      %p133 = scmp.eq.s32.totalorder %s31, 3
      %p134 = por %p132, %p133
      %p135 = scmp.ne.s32.totalorder %s124, %s125
      %p136 = scmp.eq.s32.totalorder %s31, 0
      %p137 = por %p135, %p136
      %p138 = scmp.ne.s32.totalorder %s124, %s125
      %p139 = scmp.eq.s32.totalorder %s32, 3
      %p140 = por %p138, %p139
      %p142 = scmp.ne.s32.totalorder %s125, %s141
      %p143 = scmp.eq.s32.totalorder %s32, 0
      %p144 = por %p142, %p143
      %s146 = sadd.s32 %s145, 1
      %p149 = scmp.eq.s32.totalorder %s26, 3
      %p150 = scmp.ne.s32.totalorder %s145, %s147
      %p151 = scmp.eq.s32.totalorder %s26, 0
      %p152 = por %p150, %p151
      %p153 = scmp.ne.s32.totalorder %s145, %s147
      %p154 = scmp.eq.s32.totalorder %s31, 3
      %p155 = por %p153, %p154
      %p156 = scmp.ne.s32.totalorder %s147, %s148
      %p157 = scmp.eq.s32.totalorder %s31, 0
      %p158 = por %p156, %p157
      %p159 = scmp.ne.s32.totalorder %s147, %s148
      %p160 = scmp.eq.s32.totalorder %s32, 3
      %p161 = por %p159, %p160
      %p163 = scmp.ne.s32.totalorder %s148, %s162
      %p164 = scmp.eq.s32.totalorder %s32, 0
      %p165 = por %p163, %p164
      %s167 = sadd.s32 %s166, 1
      %p170 = scmp.eq.s32.totalorder %s26, 3
      %p171 = scmp.ne.s32.totalorder %s166, %s168
      %p172 = scmp.eq.s32.totalorder %s26, 0
      %p173 = por %p171, %p172
      %p174 = scmp.ne.s32.totalorder %s166, %s168
      %p175 = scmp.eq.s32.totalorder %s31, 3
      %p176 = por %p174, %p175
      %p177 = scmp.ne.s32.totalorder %s168, %s169
      %p178 = scmp.eq.s32.totalorder %s31, 0
      %p179 = por %p177, %p178
      %p180 = scmp.ne.s32.totalorder %s168, %s169
      %p181 = scmp.eq.s32.totalorder %s32, 3
      %p182 = por %p180, %p181
      %p184 = scmp.ne.s32.totalorder %s169, %s183
      %p185 = scmp.eq.s32.totalorder %s32, 0
      %p186 = por %p184, %p185
      %s188 = sadd.s32 %s187, 1
      %p191 = scmp.eq.s32.totalorder %s26, 3
      %p192 = scmp.ne.s32.totalorder %s187, %s189
      %p193 = scmp.eq.s32.totalorder %s26, 0
      %p194 = por %p192, %p193
      %p195 = scmp.ne.s32.totalorder %s187, %s189
      %p196 = scmp.eq.s32.totalorder %s31, 3
      %p197 = por %p195, %p196
      %p198 = scmp.ne.s32.totalorder %s189, %s190
      %p199 = scmp.eq.s32.totalorder %s31, 0
      %p200 = por %p198, %p199
      %p201 = scmp.ne.s32.totalorder %s189, %s190
      %p202 = scmp.eq.s32.totalorder %s32, 3
      %p203 = por %p201, %p202
      %p205 = scmp.ne.s32.totalorder %s190, %s204
      %p206 = scmp.eq.s32.totalorder %s32, 0
      %p207 = por %p205, %p206
      %s208 = ssub.s32 %s33, %s45
      %p209 = scmp.eq.s32.totalorder %s208, 0
      %s211 = sadd.s32 %s210, 1
      %s212 = scalar_select %p209, %s210, %s211
      %p215 = pneg %p209
      %p216 = scmp.eq.s32.totalorder %s26, 3
      %p217 = por %p215, %p216
      %p218 = scmp.ne.s32.totalorder %s210, %s213
      %p219 = scmp.eq.s32.totalorder %s26, 0
      %p220 = por %p218, %p219
      %p221 = scmp.ne.s32.totalorder %s210, %s213
      %p222 = scmp.eq.s32.totalorder %s31, 3
      %p223 = por %p221, %p222
      %p224 = scmp.ne.s32.totalorder %s213, %s214
      %p225 = scmp.eq.s32.totalorder %s31, 0
      %p226 = por %p224, %p225
      %p227 = scmp.ne.s32.totalorder %s213, %s214
      %p228 = scmp.eq.s32.totalorder %s32, 3
      %p229 = por %p227, %p228
      %p231 = scmp.ne.s32.totalorder %s214, %s230
      %p232 = scmp.eq.s32.totalorder %s32, 0
      %p233 = por %p231, %p232
      %p234 = scmp.le.s32.totalorder 1, %s26
      %p235 = scmp.lt.s32.totalorder %s26, 5
      %p236 = pnand %p234, %p235
      %p237 = pneg %p236
      // Predicated region
      $region9: #{tpu_custom_call.1} parent=5 // pred_check
        _
      $region10: #{tpu_custom_call.1} parent=5 // pred_check_branch
        %239 = sbr.rel (%p236) target = $region12
      $region11: #{tpu_custom_call.1} parent=5 // pred_region
        %s240 = ssub.s32 %s26, 1
        // Predicated region
        $region13: #{tpu_custom_call.1} parent=11 // pred_check
          %p241 = pneg %p59
        $region14: #{tpu_custom_call.1} parent=11 // pred_check_branch
          %243 = sbr.rel (%p241) target = $region16
        $region15: #{tpu_custom_call.1} parent=11 // pred_region
          _
        $region16: #{tpu_custom_call.1} parent=11 // pred_fallthru
          _
        // Predicated region
        $region17: #{tpu_custom_call.1} parent=11 // pred_check
          %p244 = pneg %p158
        $region18: #{tpu_custom_call.1} parent=11 // pred_check_branch
          %246 = sbr.rel (%p244) target = $region20
        $region19: #{tpu_custom_call.1} parent=11 // pred_region
          %248 = vsyncadd [#allocation11], 0
          %s249 = sshll.u32 %s4, 4
          %s250 = int_to_ptr.hbm [resolvable:$true] %s249
          %s251 = sshll.u32 [#allocation10], 4
          %s252 = int_to_ptr.vmem [resolvable:$true] %s251
          %257 = dma.hbm_to_vmem [thread:$0]  %s250, 1024, %s252, [#allocation11], 64, 64, 4
        $region20: #{tpu_custom_call.1} parent=11 // pred_fallthru
          _
        // Predicated region
        $region21: #{tpu_custom_call.1} parent=11 // pred_check
          %p258 = pneg %p179
        $region22: #{tpu_custom_call.1} parent=11 // pred_check_branch
          %260 = sbr.rel (%p258) target = $region24
        $region23: #{tpu_custom_call.1} parent=11 // pred_region
          %262 = vsyncadd [#allocation11], 0
          %s263 = sshll.u32 %s5, 4
          %s264 = int_to_ptr.hbm [resolvable:$true] %s263
          %s265 = sshll.u32 [#allocation12], 4
          %s266 = int_to_ptr.vmem [resolvable:$true] %s265
          %271 = dma.hbm_to_vmem [thread:$0]  %s264, 1024, %s266, [#allocation11], 64, 64, 4
        $region24: #{tpu_custom_call.1} parent=11 // pred_fallthru
          _
        // Predicated region
        $region25: #{tpu_custom_call.1} parent=11 // pred_check
          %p272 = pneg %p200
        $region26: #{tpu_custom_call.1} parent=11 // pred_check_branch
          %274 = sbr.rel (%p272) target = $region28
        $region27: #{tpu_custom_call.1} parent=11 // pred_region
          %276 = vsyncadd [#allocation14], 0
          %s277 = sshll.u32 %s6, 4
          %s278 = int_to_ptr.hbm [resolvable:$true] %s277
          %s279 = sshll.u32 [#allocation13], 4
          %s280 = int_to_ptr.vmem [resolvable:$true] %s279
          %285 = dma.hbm_to_vmem [thread:$0]  %s278, 4096, %s280, [#allocation14], 64, 64, 4
        $region28: #{tpu_custom_call.1} parent=11 // pred_fallthru
          _
      $region12: #{tpu_custom_call.1} parent=5 // pred_fallthru
        _
      %p286 = scmp.lt.s32.totalorder %s26, 4
      // Predicated region
      $region29: #{tpu_custom_call.1} parent=5 // pred_check
        %p287 = pneg %p286
      $region30: #{tpu_custom_call.1} parent=5 // pred_check_branch
        %289 = sbr.rel (%p287) target = $region32
      $region31: #{tpu_custom_call.1} parent=5 // pred_region
        // Predicated region
        $region33: #{tpu_custom_call.1} parent=31 // pred_check
          %p290 = pneg %p79
        $region34: #{tpu_custom_call.1} parent=31 // pred_check_branch
          %292 = sbr.rel (%p290) target = $region36
        $region35: #{tpu_custom_call.1} parent=31 // pred_region
          %s293 = sand.u32 %s69, 1
          %s294 = scalar_lea.sflag [#allocation5], %s293
          %s295 = sand.u32 %s69, 1
          %s296 = smul.addr %s295, 2
          %s297 = scalar_lea.vmem [#allocation4], %s296
          %s298 = smul.u32 2, %s34
          %300 = vsyncadd %s294, 0
          %s301 = scalar_lea.hbm %s1, %s298
          %s303 = sshll.u32 %s301, 4
          %s304 = int_to_ptr.hbm [resolvable:$true] %s303
          %s305 = sshll.u32 %s297, 4
          %s306 = int_to_ptr.vmem [resolvable:$true] %s305
          %308 = dma.hbm_to_vmem [thread:$0]  %s304, 32, %s306, %s294
        $region36: #{tpu_custom_call.1} parent=31 // pred_fallthru
          _
        // Predicated region
        $region37: #{tpu_custom_call.1} parent=31 // pred_check
          %p309 = pneg %p105
        $region38: #{tpu_custom_call.1} parent=31 // pred_check_branch
          %311 = sbr.rel (%p309) target = $region40
        $region39: #{tpu_custom_call.1} parent=31 // pred_region
          %s312 = sand.u32 %s26, 1
          %s313 = scalar_lea.sflag [#allocation8], %s312
          %s314 = sand.u32 %s95, 1
          %s315 = smul.addr %s314, 128
          %s316 = scalar_lea.vmem [#allocation7], %s315
          %s317 = smul.u32 32, %s34
          %319 = vsyncadd %s313, 0
          %s320 = smul.addr %s317, 4
          %s321 = scalar_lea.hbm %s2, %s320
          %s322 = sshll.u32 %s321, 4
          %s323 = int_to_ptr.hbm [resolvable:$true] %s322
          %s324 = sshll.u32 %s316, 4
          %s325 = int_to_ptr.vmem [resolvable:$true] %s324
          %330 = dma.hbm_to_vmem [thread:$0]  %s323, 2048, %s325, %s313, 64, 64, 4
        $region40: #{tpu_custom_call.1} parent=31 // pred_fallthru
          _
        // Predicated region
        $region41: #{tpu_custom_call.1} parent=31 // pred_check
          %p331 = pneg %p131
        $region42: #{tpu_custom_call.1} parent=31 // pred_check_branch
          %333 = sbr.rel (%p331) target = $region44
        $region43: #{tpu_custom_call.1} parent=31 // pred_region
          %s334 = sand.u32 %s26, 1
          %s335 = scalar_lea.sflag [#allocation8], %s334
          %s336 = sand.u32 %s121, 1
          %s337 = smul.addr %s336, 128
          %s338 = scalar_lea.vmem [#allocation9], %s337
          %s339 = smul.u32 32, %s34
          %341 = vsyncadd %s335, 0
          %s342 = smul.addr %s339, 4
          %s343 = scalar_lea.hbm %s3, %s342
          %s344 = sshll.u32 %s343, 4
          %s345 = int_to_ptr.hbm [resolvable:$true] %s344
          %s346 = sshll.u32 %s338, 4
          %s347 = int_to_ptr.vmem [resolvable:$true] %s346
          %352 = dma.hbm_to_vmem [thread:$0]  %s345, 2048, %s347, %s335, 64, 64, 4
        $region44: #{tpu_custom_call.1} parent=31 // pred_fallthru
          _
      $region32: #{tpu_custom_call.1} parent=5 // pred_fallthru
        _
      %p353 = scmp.le.s32.totalorder 1, %s26
      %p354 = scmp.lt.s32.totalorder %s26, 5
      %p355 = pnand %p353, %p354
      %p356 = pneg %p355
      // Predicated region
      $region45: #{tpu_custom_call.1} parent=5 // pred_check
        _
      $region46: #{tpu_custom_call.1} parent=5 // pred_check_branch
        %358 = sbr.rel (%p355) target = $region48
      $region47: #{tpu_custom_call.1} parent=5 // pred_region
        %s359 = ssub.s32 %s26, 1
        %s360 = sand.u32 %s72, 1
        %s361 = scalar_lea.sflag [#allocation5], %s360
        %s362 = sand.u32 %s72, 1
        %s363 = smul.addr %s362, 2
        %s364 = scalar_lea.vmem [#allocation4], %s363
        // Predicated region
        $region49: #{tpu_custom_call.1} parent=47 // pred_check
          %p365 = pneg %p85
        $region50: #{tpu_custom_call.1} parent=47 // pred_check_branch
          %367 = sbr.rel (%p365) target = $region52
        $region51: #{tpu_custom_call.1} parent=47 // pred_region
          %369 = dma.done %s361, 32
        $region52: #{tpu_custom_call.1} parent=47 // pred_fallthru
          _
        %s370 = sand.u32 %s31, 1
        %s371 = scalar_lea.sflag [#allocation8], %s370
        %s372 = sand.u32 %s98, 1
        %s373 = smul.addr %s372, 128
        %s374 = scalar_lea.vmem [#allocation7], %s373
        // Predicated region
        $region53: #{tpu_custom_call.1} parent=47 // pred_check
          %p375 = pneg %p111
        $region54: #{tpu_custom_call.1} parent=47 // pred_check_branch
          %377 = sbr.rel (%p375) target = $region56
        $region55: #{tpu_custom_call.1} parent=47 // pred_region
          %379 = dma.done %s371, 2048
        $region56: #{tpu_custom_call.1} parent=47 // pred_fallthru
          _
        %s380 = sand.u32 %s31, 1
        %s381 = scalar_lea.sflag [#allocation8], %s380
        %s382 = sand.u32 %s124, 1
        %s383 = smul.addr %s382, 128
        %s384 = scalar_lea.vmem [#allocation9], %s383
        // Predicated region
        $region57: #{tpu_custom_call.1} parent=47 // pred_check
          %p385 = pneg %p137
        $region58: #{tpu_custom_call.1} parent=47 // pred_check_branch
          %387 = sbr.rel (%p385) target = $region60
        $region59: #{tpu_custom_call.1} parent=47 // pred_region
          %389 = dma.done %s381, 2048
        $region60: #{tpu_custom_call.1} parent=47 // pred_fallthru
          _
        // Predicated region
        $region61: #{tpu_custom_call.1} parent=47 // pred_check
          %p390 = pneg %p158
        $region62: #{tpu_custom_call.1} parent=47 // pred_check_branch
          %392 = sbr.rel (%p390) target = $region64
        $region63: #{tpu_custom_call.1} parent=47 // pred_region
          %394 = dma.done [#allocation11], 1024
        $region64: #{tpu_custom_call.1} parent=47 // pred_fallthru
          _
        // Predicated region
        $region65: #{tpu_custom_call.1} parent=47 // pred_check
          %p395 = pneg %p179
        $region66: #{tpu_custom_call.1} parent=47 // pred_check_branch
          %397 = sbr.rel (%p395) target = $region68
        $region67: #{tpu_custom_call.1} parent=47 // pred_region
          %399 = dma.done [#allocation11], 1024
        $region68: #{tpu_custom_call.1} parent=47 // pred_fallthru
          _
        // Predicated region
        $region69: #{tpu_custom_call.1} parent=47 // pred_check
          %p400 = pneg %p200
        $region70: #{tpu_custom_call.1} parent=47 // pred_check_branch
          %402 = sbr.rel (%p400) target = $region72
        $region71: #{tpu_custom_call.1} parent=47 // pred_region
          %404 = dma.done [#allocation14], 4096
        $region72: #{tpu_custom_call.1} parent=47 // pred_fallthru
          _
        %p405 = pneg %p59
        %p406 = pneg %p56
        %s407 = sand.u32 %s72, 1
        %s408 = scalar_lea.sflag [#allocation5], %s407
        %s409 = sand.u32 %s72, 1
        %s410 = smul.addr %s409, 2
        %s411 = scalar_lea.vmem [#allocation4], %s410
        %p412 = pneg %p85
        %p413 = pneg %p82
        %s414 = sand.u32 %s31, 1
        %s415 = scalar_lea.sflag [#allocation8], %s414
        %s416 = sand.u32 %s98, 1
        %s417 = smul.addr %s416, 128
        %s418 = scalar_lea.vmem [#allocation7], %s417
        %p419 = pneg %p111
        %p420 = pneg %p108
        %s421 = sand.u32 %s31, 1
        %s422 = scalar_lea.sflag [#allocation8], %s421
        %s423 = sand.u32 %s124, 1
        %s424 = smul.addr %s423, 128
        %s425 = scalar_lea.vmem [#allocation9], %s424
        %p426 = pneg %p137
        %p427 = pneg %p134
        %p428 = pneg %p158
        %p429 = pneg %p155
        %p430 = pneg %p179
        %p431 = pneg %p176
        %p432 = pneg %p200
        %p433 = pneg %p197
        %p434 = pneg %p226
        %p435 = pneg %p223
        %s436 = sand.u32 %s213, 1
        %s437 = scalar_lea.sflag [#allocation6], %s436
        %s438 = sand.u32 %s213, 1
        %s439 = smul.addr %s438, 128
        %s440 = scalar_lea.vmem [#allocation15], %s439
        %s441 = smul.u32 2, %s36
        %s442 = smul.u32 32, %s36
        %s443 = smul.u32 32, %s36
        %s444 = smul.u32 16, %s35
        %p445 = scmp.eq.s32.totalorder %s36, 0
        // Predicated region
        $region73: #{tpu_custom_call.1} parent=47 // pred_check
          %p446 = pneg %p445
        $region74: #{tpu_custom_call.1} parent=47 // pred_check_branch
          %448 = sbr.rel (%p446) target = $region76
        $region75: #{tpu_custom_call.1} parent=47 // pred_region
          %449 = vst [vmem:[#allocation2] sm:$0xff] 0.0
          %450 = vst [vmem:[#allocation2 + $0x8] sm:$0xff] 0.0
          %451 = vst [vmem:[#allocation2 + $0x10] sm:$0xff] 0.0
          %452 = vst [vmem:[#allocation2 + $0x18] sm:$0xff] 0.0
          %453 = vst [vmem:[#allocation2 + $0x20] sm:$0xff] 0.0
          %454 = vst [vmem:[#allocation2 + $0x28] sm:$0xff] 0.0
          %455 = vst [vmem:[#allocation2 + $0x30] sm:$0xff] 0.0
          %456 = vst [vmem:[#allocation2 + $0x38] sm:$0xff] 0.0
          %457 = vst [vmem:[#allocation2 + $0x40] sm:$0xff] 0.0
          %458 = vst [vmem:[#allocation2 + $0x48] sm:$0xff] 0.0
          %459 = vst [vmem:[#allocation2 + $0x50] sm:$0xff] 0.0
          %460 = vst [vmem:[#allocation2 + $0x58] sm:$0xff] 0.0
          %461 = vst [vmem:[#allocation2 + $0x60] sm:$0xff] 0.0
          %462 = vst [vmem:[#allocation2 + $0x68] sm:$0xff] 0.0
          %463 = vst [vmem:[#allocation2 + $0x70] sm:$0xff] 0.0
          %464 = vst [vmem:[#allocation2 + $0x78] sm:$0xff] 0.0
        $region76: #{tpu_custom_call.1} parent=47 // pred_fallthru
          _
        %v465 = vld [vmem:[%s384] sm:$0xf]
        %v466 = vld [vmem:[%s384 + $0x4] sm:$0xf]
        %v467 = vld [vmem:[%s384 + $0x8] sm:$0xf]
        %v468 = vld [vmem:[%s384 + $0xc] sm:$0xf]
        %v469 = vld [vmem:[%s384 + $0x10] sm:$0xf]
        %v470 = vld [vmem:[%s384 + $0x14] sm:$0xf]
        %v471 = vld [vmem:[%s384 + $0x18] sm:$0xf]
        %v472 = vld [vmem:[%s384 + $0x1c] sm:$0xf]
        %v473 = vld [vmem:[%s384 + $0x20] sm:$0xf]
        %v474 = vld [vmem:[%s384 + $0x24] sm:$0xf]
        %v475 = vld [vmem:[%s384 + $0x28] sm:$0xf]
        %v476 = vld [vmem:[%s384 + $0x2c] sm:$0xf]
        %v477 = vld [vmem:[%s384 + $0x30] sm:$0xf]
        %v478 = vld [vmem:[%s384 + $0x34] sm:$0xf]
        %v479 = vld [vmem:[%s384 + $0x38] sm:$0xf]
        %v480 = vld [vmem:[%s384 + $0x3c] sm:$0xf]
        %v481 = vld [vmem:[%s384 + $0x40] sm:$0xf]
        %v482 = vld [vmem:[%s384 + $0x44] sm:$0xf]
        %v483 = vld [vmem:[%s384 + $0x48] sm:$0xf]
        %v484 = vld [vmem:[%s384 + $0x4c] sm:$0xf]
        %v485 = vld [vmem:[%s384 + $0x50] sm:$0xf]
        %v486 = vld [vmem:[%s384 + $0x54] sm:$0xf]
        %v487 = vld [vmem:[%s384 + $0x58] sm:$0xf]
        %v488 = vld [vmem:[%s384 + $0x5c] sm:$0xf]
        %v489 = vld [vmem:[%s384 + $0x60] sm:$0xf]
        %v490 = vld [vmem:[%s384 + $0x64] sm:$0xf]
        %v491 = vld [vmem:[%s384 + $0x68] sm:$0xf]
        %v492 = vld [vmem:[%s384 + $0x6c] sm:$0xf]
        %v493 = vld [vmem:[%s384 + $0x70] sm:$0xf]
        %v494 = vld [vmem:[%s384 + $0x74] sm:$0xf]
        %v495 = vld [vmem:[%s384 + $0x78] sm:$0xf]
        %v496 = vld [vmem:[%s384 + $0x7c] sm:$0xf]
        %v497 = vld [vmem:[#allocation10] sm:$0xf]
        %v498 = vld [vmem:[#allocation10 + $0x4] sm:$0xf]
        %v499 = vld [vmem:[#allocation10 + $0x8] sm:$0xf]
        %v500 = vld [vmem:[#allocation10 + $0xc] sm:$0xf]
        %v501 = vld [vmem:[#allocation10 + $0x10] sm:$0xf]
        %v502 = vld [vmem:[#allocation10 + $0x14] sm:$0xf]
        %v503 = vld [vmem:[#allocation10 + $0x18] sm:$0xf]
        %v504 = vld [vmem:[#allocation10 + $0x1c] sm:$0xf]
        %v505 = vld [vmem:[#allocation10 + $0x20] sm:$0xf]
        %v506 = vld [vmem:[#allocation10 + $0x24] sm:$0xf]
        %v507 = vld [vmem:[#allocation10 + $0x28] sm:$0xf]
        %v508 = vld [vmem:[#allocation10 + $0x2c] sm:$0xf]
        %v509 = vld [vmem:[#allocation10 + $0x30] sm:$0xf]
        %v510 = vld [vmem:[#allocation10 + $0x34] sm:$0xf]
        %v511 = vld [vmem:[#allocation10 + $0x38] sm:$0xf]
        %v512 = vld [vmem:[#allocation10 + $0x3c] sm:$0xf]
        %v545 = vunpack.c.l.b16 %v465
        %v546 = vunpack.c.l.b16 %v466
        %v547 = vunpack.c.l.b16 %v467
        %v548 = vunpack.c.l.b16 %v468
        %v549 = vunpack.c.l.b16 %v469
        %v550 = vunpack.c.l.b16 %v470
        %v551 = vunpack.c.l.b16 %v471
        %v552 = vunpack.c.l.b16 %v472
        %v553 = vunpack.c.l.b16 %v473
        %v554 = vunpack.c.l.b16 %v474
        %v555 = vunpack.c.l.b16 %v475
        %v556 = vunpack.c.l.b16 %v476
        %v557 = vunpack.c.l.b16 %v477
        %v558 = vunpack.c.l.b16 %v478
        %v559 = vunpack.c.l.b16 %v479
        %v560 = vunpack.c.l.b16 %v480
        %v561 = vunpack.c.l.b16 %v481
        %v562 = vunpack.c.l.b16 %v482
        %v563 = vunpack.c.l.b16 %v483
        %v564 = vunpack.c.l.b16 %v484
        %v565 = vunpack.c.l.b16 %v485
        %v566 = vunpack.c.l.b16 %v486
        %v567 = vunpack.c.l.b16 %v487
        %v568 = vunpack.c.l.b16 %v488
        %v569 = vunpack.c.l.b16 %v489
        %v570 = vunpack.c.l.b16 %v490
        %v571 = vunpack.c.l.b16 %v491
        %v572 = vunpack.c.l.b16 %v492
        %v573 = vunpack.c.l.b16 %v493
        %v574 = vunpack.c.l.b16 %v494
        %v575 = vunpack.c.l.b16 %v495
        %v576 = vunpack.c.l.b16 %v496
        %v577 = vpack.c.b16 %v546, %v545
        %v578 = vpack.c.b16 %v548, %v547
        %v579 = vpack.c.b16 %v550, %v549
        %v580 = vpack.c.b16 %v552, %v551
        %v581 = vpack.c.b16 %v554, %v553
        %v582 = vpack.c.b16 %v556, %v555
        %v583 = vpack.c.b16 %v558, %v557
        %v584 = vpack.c.b16 %v560, %v559
        %v585 = vpack.c.b16 %v562, %v561
        %v586 = vpack.c.b16 %v564, %v563
        %v587 = vpack.c.b16 %v566, %v565
        %v588 = vpack.c.b16 %v568, %v567
        %v589 = vpack.c.b16 %v570, %v569
        %v590 = vpack.c.b16 %v572, %v571
        %v591 = vpack.c.b16 %v574, %v573
        %v592 = vpack.c.b16 %v576, %v575
        %v625 = vunpack.c.l.b16 %v497
        %v626 = vunpack.c.l.b16 %v498
        %v627 = vunpack.c.l.b16 %v499
        %v628 = vunpack.c.l.b16 %v500
        %v629 = vunpack.c.l.b16 %v501
        %v630 = vunpack.c.l.b16 %v502
        %v631 = vunpack.c.l.b16 %v503
        %v632 = vunpack.c.l.b16 %v504
        %v633 = vunpack.c.l.b16 %v505
        %v634 = vunpack.c.l.b16 %v506
        %v635 = vunpack.c.l.b16 %v507
        %v636 = vunpack.c.l.b16 %v508
        %v637 = vunpack.c.l.b16 %v509
        %v638 = vunpack.c.l.b16 %v510
        %v639 = vunpack.c.l.b16 %v511
        %v640 = vunpack.c.l.b16 %v512
        %v641 = vpack.c.b16 %v626, %v625
        %v642 = vpack.c.b16 %v628, %v627
        %v643 = vpack.c.b16 %v630, %v629
        %v644 = vpack.c.b16 %v632, %v631
        %v645 = vpack.c.b16 %v634, %v633
        %v646 = vpack.c.b16 %v636, %v635
        %v647 = vpack.c.b16 %v638, %v637
        %v648 = vpack.c.b16 %v640, %v639
        %657 = vmatpush.bf16.msra.mxu0 %v648
        %658 = vmatpush.bf16.msra.mxu0 %v647
        %659 = vmatpush.bf16.msra.mxu0 %v646
        %660 = vmatpush.bf16.msra.mxu0 %v645
        %661 = vmatpush.bf16.msra.mxu0 %v644
        %662 = vmatpush.bf16.msra.mxu0 %v643
        %663 = vmatpush.bf16.msra.mxu0 %v642
        %664 = vmatpush.bf16.msra.mxu0 %v641
        %665 = vmatmul.bf16.gmra.mxu0 %v577
        %v666 = vpop.f32.mrf.mxu0
        %v667 = vadd.f32 0.0, %v666
        %v668 = vpop.f32.mrf.mxu0
        %v669 = vadd.f32 0.0, %v668
        %670 = vmatmul.bf16.gmra.mxu0 %v578
        %v671 = vpop.f32.mrf.mxu0
        %v672 = vadd.f32 0.0, %v671
        %v673 = vpop.f32.mrf.mxu0
        %v674 = vadd.f32 0.0, %v673
        %675 = vmatmul.bf16.gmra.mxu0 %v579
        %v676 = vpop.f32.mrf.mxu0
        %v677 = vadd.f32 0.0, %v676
        %v678 = vpop.f32.mrf.mxu0
        %v679 = vadd.f32 0.0, %v678
        %680 = vmatmul.bf16.gmra.mxu0 %v580
        %v681 = vpop.f32.mrf.mxu0
        %v682 = vadd.f32 0.0, %v681
        %v683 = vpop.f32.mrf.mxu0
        %v684 = vadd.f32 0.0, %v683
        %685 = vmatmul.bf16.gmra.mxu0 %v581
        %v686 = vpop.f32.mrf.mxu0
        %v687 = vadd.f32 0.0, %v686
        %v688 = vpop.f32.mrf.mxu0
        %v689 = vadd.f32 0.0, %v688
        %690 = vmatmul.bf16.gmra.mxu0 %v582
        %v691 = vpop.f32.mrf.mxu0
        %v692 = vadd.f32 0.0, %v691
        %v693 = vpop.f32.mrf.mxu0
        %v694 = vadd.f32 0.0, %v693
        %695 = vmatmul.bf16.gmra.mxu0 %v583
        %v696 = vpop.f32.mrf.mxu0
        %v697 = vadd.f32 0.0, %v696
        %v698 = vpop.f32.mrf.mxu0
        %v699 = vadd.f32 0.0, %v698
        %700 = vmatmul.bf16.gmra.mxu0 %v584
        %v701 = vpop.f32.mrf.mxu0
        %v702 = vadd.f32 0.0, %v701
        %v703 = vpop.f32.mrf.mxu0
        %v704 = vadd.f32 0.0, %v703
        %705 = vmatmul.bf16.gmra.mxu0 %v585
        %v706 = vpop.f32.mrf.mxu0
        %v707 = vadd.f32 0.0, %v706
        %v708 = vpop.f32.mrf.mxu0
        %v709 = vadd.f32 0.0, %v708
        %710 = vmatmul.bf16.gmra.mxu0 %v586
        %v711 = vpop.f32.mrf.mxu0
        %v712 = vadd.f32 0.0, %v711
        %v713 = vpop.f32.mrf.mxu0
        %v714 = vadd.f32 0.0, %v713
        %715 = vmatmul.bf16.gmra.mxu0 %v587
        %v716 = vpop.f32.mrf.mxu0
        %v717 = vadd.f32 0.0, %v716
        %v718 = vpop.f32.mrf.mxu0
        %v719 = vadd.f32 0.0, %v718
        %720 = vmatmul.bf16.gmra.mxu0 %v588
        %v721 = vpop.f32.mrf.mxu0
        %v722 = vadd.f32 0.0, %v721
        %v723 = vpop.f32.mrf.mxu0
        %v724 = vadd.f32 0.0, %v723
        %725 = vmatmul.bf16.gmra.mxu0 %v589
        %v726 = vpop.f32.mrf.mxu0
        %v727 = vadd.f32 0.0, %v726
        %v728 = vpop.f32.mrf.mxu0
        %v729 = vadd.f32 0.0, %v728
        %730 = vmatmul.bf16.gmra.mxu0 %v590
        %v731 = vpop.f32.mrf.mxu0
        %v732 = vadd.f32 0.0, %v731
        %v733 = vpop.f32.mrf.mxu0
        %v734 = vadd.f32 0.0, %v733
        %735 = vmatmul.bf16.gmra.mxu0 %v591
        %v736 = vpop.f32.mrf.mxu0
        %v737 = vadd.f32 0.0, %v736
        %v738 = vpop.f32.mrf.mxu0
        %v739 = vadd.f32 0.0, %v738
        %740 = vmatmul.bf16.gmra.mxu0 %v592
        %v741 = vpop.f32.mrf.mxu0
        %v742 = vadd.f32 0.0, %v741
        %v743 = vpop.f32.mrf.mxu0
        %v744 = vadd.f32 0.0, %v743
        %745 = vdwg.mxu0
        %v746 = vld [vmem:[%s374] sm:$0xf]
        %v747 = vld [vmem:[%s374 + $0x4] sm:$0xf]
        %v748 = vld [vmem:[%s374 + $0x8] sm:$0xf]
        %v749 = vld [vmem:[%s374 + $0xc] sm:$0xf]
        %v750 = vld [vmem:[%s374 + $0x10] sm:$0xf]
        %v751 = vld [vmem:[%s374 + $0x14] sm:$0xf]
        %v752 = vld [vmem:[%s374 + $0x18] sm:$0xf]
        %v753 = vld [vmem:[%s374 + $0x1c] sm:$0xf]
        %v754 = vld [vmem:[%s374 + $0x20] sm:$0xf]
        %v755 = vld [vmem:[%s374 + $0x24] sm:$0xf]
        %v756 = vld [vmem:[%s374 + $0x28] sm:$0xf]
        %v757 = vld [vmem:[%s374 + $0x2c] sm:$0xf]
        %v758 = vld [vmem:[%s374 + $0x30] sm:$0xf]
        %v759 = vld [vmem:[%s374 + $0x34] sm:$0xf]
        %v760 = vld [vmem:[%s374 + $0x38] sm:$0xf]
        %v761 = vld [vmem:[%s374 + $0x3c] sm:$0xf]
        %v762 = vld [vmem:[%s374 + $0x40] sm:$0xf]
        %v763 = vld [vmem:[%s374 + $0x44] sm:$0xf]
        %v764 = vld [vmem:[%s374 + $0x48] sm:$0xf]
        %v765 = vld [vmem:[%s374 + $0x4c] sm:$0xf]
        %v766 = vld [vmem:[%s374 + $0x50] sm:$0xf]
        %v767 = vld [vmem:[%s374 + $0x54] sm:$0xf]
        %v768 = vld [vmem:[%s374 + $0x58] sm:$0xf]
        %v769 = vld [vmem:[%s374 + $0x5c] sm:$0xf]
        %v770 = vld [vmem:[%s374 + $0x60] sm:$0xf]
        %v771 = vld [vmem:[%s374 + $0x64] sm:$0xf]
        %v772 = vld [vmem:[%s374 + $0x68] sm:$0xf]
        %v773 = vld [vmem:[%s374 + $0x6c] sm:$0xf]
        %v774 = vld [vmem:[%s374 + $0x70] sm:$0xf]
        %v775 = vld [vmem:[%s374 + $0x74] sm:$0xf]
        %v776 = vld [vmem:[%s374 + $0x78] sm:$0xf]
        %v777 = vld [vmem:[%s374 + $0x7c] sm:$0xf]
        %v778 = vunpack.c.l.bf16 %v746
        %v779 = vunpack.c.l.bf16 %v747
        %v780 = vunpack.c.l.bf16 %v748
        %v781 = vunpack.c.l.bf16 %v749
        %v782 = vunpack.c.l.bf16 %v750
        %v783 = vunpack.c.l.bf16 %v751
        %v784 = vunpack.c.l.bf16 %v752
        %v785 = vunpack.c.l.bf16 %v753
        %v786 = vunpack.c.l.bf16 %v754
        %v787 = vunpack.c.l.bf16 %v755
        %v788 = vunpack.c.l.bf16 %v756
        %v789 = vunpack.c.l.bf16 %v757
        %v790 = vunpack.c.l.bf16 %v758
        %v791 = vunpack.c.l.bf16 %v759
        %v792 = vunpack.c.l.bf16 %v760
        %v793 = vunpack.c.l.bf16 %v761
        %v794 = vunpack.c.l.bf16 %v762
        %v795 = vunpack.c.l.bf16 %v763
        %v796 = vunpack.c.l.bf16 %v764
        %v797 = vunpack.c.l.bf16 %v765
        %v798 = vunpack.c.l.bf16 %v766
        %v799 = vunpack.c.l.bf16 %v767
        %v800 = vunpack.c.l.bf16 %v768
        %v801 = vunpack.c.l.bf16 %v769
        %v802 = vunpack.c.l.bf16 %v770
        %v803 = vunpack.c.l.bf16 %v771
        %v804 = vunpack.c.l.bf16 %v772
        %v805 = vunpack.c.l.bf16 %v773
        %v806 = vunpack.c.l.bf16 %v774
        %v807 = vunpack.c.l.bf16 %v775
        %v808 = vunpack.c.l.bf16 %v776
        %v809 = vunpack.c.l.bf16 %v777
        %v810 = vmul.f32 %v778, %v667
        %v811 = vmul.f32 %v779, %v669
        %v812 = vmul.f32 %v780, %v672
        %v813 = vmul.f32 %v781, %v674
        %v814 = vmul.f32 %v782, %v677
        %v815 = vmul.f32 %v783, %v679
        %v816 = vmul.f32 %v784, %v682
        %v817 = vmul.f32 %v785, %v684
        %v818 = vmul.f32 %v786, %v687
        %v819 = vmul.f32 %v787, %v689
        %v820 = vmul.f32 %v788, %v692
        %v821 = vmul.f32 %v789, %v694
        %v822 = vmul.f32 %v790, %v697
        %v823 = vmul.f32 %v791, %v699
        %v824 = vmul.f32 %v792, %v702
        %v825 = vmul.f32 %v793, %v704
        %v826 = vmul.f32 %v794, %v707
        %v827 = vmul.f32 %v795, %v709
        %v828 = vmul.f32 %v796, %v712
        %v829 = vmul.f32 %v797, %v714
        %v830 = vmul.f32 %v798, %v717
        %v831 = vmul.f32 %v799, %v719
        %v832 = vmul.f32 %v800, %v722
        %v833 = vmul.f32 %v801, %v724
        %v834 = vmul.f32 %v802, %v727
        %v835 = vmul.f32 %v803, %v729
        %v836 = vmul.f32 %v804, %v732
        %v837 = vmul.f32 %v805, %v734
        %v838 = vmul.f32 %v806, %v737
        %v839 = vmul.f32 %v807, %v739
        %v840 = vmul.f32 %v808, %v742
        %v841 = vmul.f32 %v809, %v744
        %v842 = vpack.c.bf16 %v811, %v810
        %v843 = vpack.c.bf16 %v813, %v812
        %v844 = vpack.c.bf16 %v815, %v814
        %v845 = vpack.c.bf16 %v817, %v816
        %v846 = vpack.c.bf16 %v819, %v818
        %v847 = vpack.c.bf16 %v821, %v820
        %v848 = vpack.c.bf16 %v823, %v822
        %v849 = vpack.c.bf16 %v825, %v824
        %v850 = vpack.c.bf16 %v827, %v826
        %v851 = vpack.c.bf16 %v829, %v828
        %v852 = vpack.c.bf16 %v831, %v830
        %v853 = vpack.c.bf16 %v833, %v832
        %v854 = vpack.c.bf16 %v835, %v834
        %v855 = vpack.c.bf16 %v837, %v836
        %v856 = vpack.c.bf16 %v839, %v838
        %v857 = vpack.c.bf16 %v841, %v840
        %v858 = vlaneseq
        %v859 = vshrl.u32 %v858, 7
        %v860 = vadd.s32 %v859, 8
        %v861 = vadd.s32 %v859, 16
        %v862 = vadd.s32 %v859, 24
        %v863 = vadd.s32 %v859, 32
        %v864 = vadd.s32 %v859, 40
        %v865 = vadd.s32 %v859, 48
        %v866 = vadd.s32 %v859, 56
        %v867 = vadd.s32 %v859, 64
        %v868 = vadd.s32 %v859, 72
        %v869 = vadd.s32 %v859, 80
        %v870 = vadd.s32 %v859, 88
        %v871 = vadd.s32 %v859, 96
        %v872 = vadd.s32 %v859, 104
        %v873 = vadd.s32 %v859, 112
        %v874 = vadd.s32 %v859, 120
        %s875 = smul.u32 %s35, 128
        %v876 = vstv %s875
        %v877 = vadd.s32 %v859, %v876
        %v878 = vadd.s32 %v860, %v876
        %v879 = vadd.s32 %v861, %v876
        %v880 = vadd.s32 %v862, %v876
        %v881 = vadd.s32 %v863, %v876
        %v882 = vadd.s32 %v864, %v876
        %v883 = vadd.s32 %v865, %v876
        %v884 = vadd.s32 %v866, %v876
        %v885 = vadd.s32 %v867, %v876
        %v886 = vadd.s32 %v868, %v876
        %v887 = vadd.s32 %v869, %v876
        %v888 = vadd.s32 %v870, %v876
        %v889 = vadd.s32 %v871, %v876
        %v890 = vadd.s32 %v872, %v876
        %v891 = vadd.s32 %v873, %v876
        %v892 = vadd.s32 %v874, %v876
        %v893 = vld [vmem:[%s364] sm:$0x3]
        %v894 = vperm.slane %v893, 0
        %v895 = vperm.slane %v893, 1
        %vm896 = vcmp.eq.s32.totalorder %v877, %v894
        %vm897 = vcmp.eq.s32.totalorder %v877, %v895
        %vm898 = vcmp.eq.s32.totalorder %v878, %v894
        %vm899 = vcmp.eq.s32.totalorder %v878, %v895
        %vm900 = vcmp.eq.s32.totalorder %v879, %v894
        %vm901 = vcmp.eq.s32.totalorder %v879, %v895
        %vm902 = vcmp.eq.s32.totalorder %v880, %v894
        %vm903 = vcmp.eq.s32.totalorder %v880, %v895
        %vm904 = vcmp.eq.s32.totalorder %v881, %v894
        %vm905 = vcmp.eq.s32.totalorder %v881, %v895
        %vm906 = vcmp.eq.s32.totalorder %v882, %v894
        %vm907 = vcmp.eq.s32.totalorder %v882, %v895
        %vm908 = vcmp.eq.s32.totalorder %v883, %v894
        %vm909 = vcmp.eq.s32.totalorder %v883, %v895
        %vm910 = vcmp.eq.s32.totalorder %v884, %v894
        %vm911 = vcmp.eq.s32.totalorder %v884, %v895
        %vm912 = vcmp.eq.s32.totalorder %v885, %v894
        %vm913 = vcmp.eq.s32.totalorder %v885, %v895
        %vm914 = vcmp.eq.s32.totalorder %v886, %v894
        %vm915 = vcmp.eq.s32.totalorder %v886, %v895
        %vm916 = vcmp.eq.s32.totalorder %v887, %v894
        %vm917 = vcmp.eq.s32.totalorder %v887, %v895
        %vm918 = vcmp.eq.s32.totalorder %v888, %v894
        %vm919 = vcmp.eq.s32.totalorder %v888, %v895
        %vm920 = vcmp.eq.s32.totalorder %v889, %v894
        %vm921 = vcmp.eq.s32.totalorder %v889, %v895
        %vm922 = vcmp.eq.s32.totalorder %v890, %v894
        %vm923 = vcmp.eq.s32.totalorder %v890, %v895
        %vm924 = vcmp.eq.s32.totalorder %v891, %v894
        %vm925 = vcmp.eq.s32.totalorder %v891, %v895
        %vm926 = vcmp.eq.s32.totalorder %v892, %v894
        %vm927 = vcmp.eq.s32.totalorder %v892, %v895
        %v928 = vsel %vm896, 1, 0
        %v929 = vsel %vm897, 1, 0
        %v930 = vsel %vm898, 1, 0
        %v931 = vsel %vm899, 1, 0
        %v932 = vsel %vm900, 1, 0
        %v933 = vsel %vm901, 1, 0
        %v934 = vsel %vm902, 1, 0
        %v935 = vsel %vm903, 1, 0
        %v936 = vsel %vm904, 1, 0
        %v937 = vsel %vm905, 1, 0
        %v938 = vsel %vm906, 1, 0
        %v939 = vsel %vm907, 1, 0
        %v940 = vsel %vm908, 1, 0
        %v941 = vsel %vm909, 1, 0
        %v942 = vsel %vm910, 1, 0
        %v943 = vsel %vm911, 1, 0
        %v944 = vsel %vm912, 1, 0
        %v945 = vsel %vm913, 1, 0
        %v946 = vsel %vm914, 1, 0
        %v947 = vsel %vm915, 1, 0
        %v948 = vsel %vm916, 1, 0
        %v949 = vsel %vm917, 1, 0
        %v950 = vsel %vm918, 1, 0
        %v951 = vsel %vm919, 1, 0
        %v952 = vsel %vm920, 1, 0
        %v953 = vsel %vm921, 1, 0
        %v954 = vsel %vm922, 1, 0
        %v955 = vsel %vm923, 1, 0
        %v956 = vsel %vm924, 1, 0
        %v957 = vsel %vm925, 1, 0
        %v958 = vsel %vm926, 1, 0
        %v959 = vsel %vm927, 1, 0
        %v960 = vcvt.s32.f32 %v928
        %v961 = vcvt.s32.f32 %v929
        %v962 = vcvt.s32.f32 %v930
        %v963 = vcvt.s32.f32 %v931
        %v964 = vcvt.s32.f32 %v932
        %v965 = vcvt.s32.f32 %v933
        %v966 = vcvt.s32.f32 %v934
        %v967 = vcvt.s32.f32 %v935
        %v968 = vcvt.s32.f32 %v936
        %v969 = vcvt.s32.f32 %v937
        %v970 = vcvt.s32.f32 %v938
        %v971 = vcvt.s32.f32 %v939
        %v972 = vcvt.s32.f32 %v940
        %v973 = vcvt.s32.f32 %v941
        %v974 = vcvt.s32.f32 %v942
        %v975 = vcvt.s32.f32 %v943
        %v976 = vcvt.s32.f32 %v944
        %v977 = vcvt.s32.f32 %v945
        %v978 = vcvt.s32.f32 %v946
        %v979 = vcvt.s32.f32 %v947
        %v980 = vcvt.s32.f32 %v948
        %v981 = vcvt.s32.f32 %v949
        %v982 = vcvt.s32.f32 %v950
        %v983 = vcvt.s32.f32 %v951
        %v984 = vcvt.s32.f32 %v952
        %v985 = vcvt.s32.f32 %v953
        %v986 = vcvt.s32.f32 %v954
        %v987 = vcvt.s32.f32 %v955
        %v988 = vcvt.s32.f32 %v956
        %v989 = vcvt.s32.f32 %v957
        %v990 = vcvt.s32.f32 %v958
        %v991 = vcvt.s32.f32 %v959
        %v992 = vpack.c.bf16 %v962, %v960
        %v993 = vpack.c.bf16 %v963, %v961
        %v994 = vpack.c.bf16 %v966, %v964
        %v995 = vpack.c.bf16 %v967, %v965
        %v996 = vpack.c.bf16 %v970, %v968
        %v997 = vpack.c.bf16 %v971, %v969
        %v998 = vpack.c.bf16 %v974, %v972
        %v999 = vpack.c.bf16 %v975, %v973
        %v1000 = vpack.c.bf16 %v978, %v976
        %v1001 = vpack.c.bf16 %v979, %v977
        %v1002 = vpack.c.bf16 %v982, %v980
        %v1003 = vpack.c.bf16 %v983, %v981
        %v1004 = vpack.c.bf16 %v986, %v984
        %v1005 = vpack.c.bf16 %v987, %v985
        %v1006 = vpack.c.bf16 %v990, %v988
        %v1007 = vpack.c.bf16 %v991, %v989
        %v1008 = vld [vmem:[#allocation2] sm:$0xff]
        %v1009 = vld [vmem:[#allocation2 + $0x8] sm:$0xff]
        %v1010 = vld [vmem:[#allocation2 + $0x10] sm:$0xff]
        %v1011 = vld [vmem:[#allocation2 + $0x18] sm:$0xff]
        %v1012 = vld [vmem:[#allocation2 + $0x20] sm:$0xff]
        %v1013 = vld [vmem:[#allocation2 + $0x28] sm:$0xff]
        %v1014 = vld [vmem:[#allocation2 + $0x30] sm:$0xff]
        %v1015 = vld [vmem:[#allocation2 + $0x38] sm:$0xff]
        %v1016 = vld [vmem:[#allocation2 + $0x40] sm:$0xff]
        %v1017 = vld [vmem:[#allocation2 + $0x48] sm:$0xff]
        %v1018 = vld [vmem:[#allocation2 + $0x50] sm:$0xff]
        %v1019 = vld [vmem:[#allocation2 + $0x58] sm:$0xff]
        %v1020 = vld [vmem:[#allocation2 + $0x60] sm:$0xff]
        %v1021 = vld [vmem:[#allocation2 + $0x68] sm:$0xff]
        %v1022 = vld [vmem:[#allocation2 + $0x70] sm:$0xff]
        %v1023 = vld [vmem:[#allocation2 + $0x78] sm:$0xff]
        %1024 = vmatpush.bf16.msra.mxu0 %v849
        %1025 = vmatpush.bf16.msra.mxu0 %v848
        %1026 = vmatpush.bf16.msra.mxu0 %v847
        %1027 = vmatpush.bf16.msra.mxu0 %v846
        %1028 = vmatpush.bf16.msra.mxu0 %v845
        %1029 = vmatpush.bf16.msra.mxu0 %v844
        %1030 = vmatpush.bf16.msra.mxu0 %v843
        %1031 = vmatpush.bf16.msra.mxu0 %v842
        %1032 = vmatmul.bf16.gmra.mxu0 %v992
        %v1033 = vpop.f32.mrf.mxu0
        %v1034 = vadd.f32 0.0, %v1033
        %v1035 = vpop.f32.mrf.mxu0
        %v1036 = vadd.f32 0.0, %v1035
        %1037 = vmatmul.bf16.gmra.mxu0 %v994
        %v1038 = vpop.f32.mrf.mxu0
        %v1039 = vadd.f32 0.0, %v1038
        %v1040 = vpop.f32.mrf.mxu0
        %v1041 = vadd.f32 0.0, %v1040
        %1042 = vmatmul.bf16.gmra.mxu0 %v996
        %v1043 = vpop.f32.mrf.mxu0
        %v1044 = vadd.f32 0.0, %v1043
        %v1045 = vpop.f32.mrf.mxu0
        %v1046 = vadd.f32 0.0, %v1045
        %1047 = vmatmul.bf16.gmra.mxu0 %v998
        %v1048 = vpop.f32.mrf.mxu0
        %v1049 = vadd.f32 0.0, %v1048
        %v1050 = vpop.f32.mrf.mxu0
        %v1051 = vadd.f32 0.0, %v1050
        %1052 = vmatmul.bf16.gmra.mxu0 %v1000
        %v1053 = vpop.f32.mrf.mxu0
        %v1054 = vadd.f32 0.0, %v1053
        %v1055 = vpop.f32.mrf.mxu0
        %v1056 = vadd.f32 0.0, %v1055
        %1057 = vmatmul.bf16.gmra.mxu0 %v1002
        %v1058 = vpop.f32.mrf.mxu0
        %v1059 = vadd.f32 0.0, %v1058
        %v1060 = vpop.f32.mrf.mxu0
        %v1061 = vadd.f32 0.0, %v1060
        %1062 = vmatmul.bf16.gmra.mxu0 %v1004
        %v1063 = vpop.f32.mrf.mxu0
        %v1064 = vadd.f32 0.0, %v1063
        %v1065 = vpop.f32.mrf.mxu0
        %v1066 = vadd.f32 0.0, %v1065
        %1067 = vmatmul.bf16.gmra.mxu0 %v1006
        %v1068 = vpop.f32.mrf.mxu0
        %v1069 = vadd.f32 0.0, %v1068
        %v1070 = vpop.f32.mrf.mxu0
        %v1071 = vadd.f32 0.0, %v1070
        %1072 = vdwg.mxu0
        %1073 = vmatpush.bf16.msra.mxu0 %v857
        %1074 = vmatpush.bf16.msra.mxu0 %v856
        %1075 = vmatpush.bf16.msra.mxu0 %v855
        %1076 = vmatpush.bf16.msra.mxu0 %v854
        %1077 = vmatpush.bf16.msra.mxu0 %v853
        %1078 = vmatpush.bf16.msra.mxu0 %v852
        %1079 = vmatpush.bf16.msra.mxu0 %v851
        %1080 = vmatpush.bf16.msra.mxu0 %v850
        %1081 = vmatmul.bf16.gmra.mxu0 %v993
        %v1082 = vpop.f32.mrf.mxu0
        %v1083 = vadd.f32 %v1034, %v1082
        %v1084 = vpop.f32.mrf.mxu0
        %v1085 = vadd.f32 %v1036, %v1084
        %1086 = vmatmul.bf16.gmra.mxu0 %v995
        %v1087 = vpop.f32.mrf.mxu0
        %v1088 = vadd.f32 %v1039, %v1087
        %v1089 = vpop.f32.mrf.mxu0
        %v1090 = vadd.f32 %v1041, %v1089
        %1091 = vmatmul.bf16.gmra.mxu0 %v997
        %v1092 = vpop.f32.mrf.mxu0
        %v1093 = vadd.f32 %v1044, %v1092
        %v1094 = vpop.f32.mrf.mxu0
        %v1095 = vadd.f32 %v1046, %v1094
        %1096 = vmatmul.bf16.gmra.mxu0 %v999
        %v1097 = vpop.f32.mrf.mxu0
        %v1098 = vadd.f32 %v1049, %v1097
        %v1099 = vpop.f32.mrf.mxu0
        %v1100 = vadd.f32 %v1051, %v1099
        %1101 = vmatmul.bf16.gmra.mxu0 %v1001
        %v1102 = vpop.f32.mrf.mxu0
        %v1103 = vadd.f32 %v1054, %v1102
        %v1104 = vpop.f32.mrf.mxu0
        %v1105 = vadd.f32 %v1056, %v1104
        %1106 = vmatmul.bf16.gmra.mxu0 %v1003
        %v1107 = vpop.f32.mrf.mxu0
        %v1108 = vadd.f32 %v1059, %v1107
        %v1109 = vpop.f32.mrf.mxu0
        %v1110 = vadd.f32 %v1061, %v1109
        %1111 = vmatmul.bf16.gmra.mxu0 %v1005
        %v1112 = vpop.f32.mrf.mxu0
        %v1113 = vadd.f32 %v1064, %v1112
        %v1114 = vpop.f32.mrf.mxu0
        %v1115 = vadd.f32 %v1066, %v1114
        %1116 = vmatmul.bf16.gmra.mxu0 %v1007
        %v1117 = vpop.f32.mrf.mxu0
        %v1118 = vadd.f32 %v1069, %v1117
        %v1119 = vpop.f32.mrf.mxu0
        %v1120 = vadd.f32 %v1071, %v1119
        %1121 = vdwg.mxu0
        %v1122 = vadd.f32 %v1008, %v1083
        %v1123 = vadd.f32 %v1009, %v1085
        %v1124 = vadd.f32 %v1010, %v1088
        %v1125 = vadd.f32 %v1011, %v1090
        %v1126 = vadd.f32 %v1012, %v1093
        %v1127 = vadd.f32 %v1013, %v1095
        %v1128 = vadd.f32 %v1014, %v1098
        %v1129 = vadd.f32 %v1015, %v1100
        %v1130 = vadd.f32 %v1016, %v1103
        %v1131 = vadd.f32 %v1017, %v1105
        %v1132 = vadd.f32 %v1018, %v1108
        %v1133 = vadd.f32 %v1019, %v1110
        %v1134 = vadd.f32 %v1020, %v1113
        %v1135 = vadd.f32 %v1021, %v1115
        %v1136 = vadd.f32 %v1022, %v1118
        %v1137 = vadd.f32 %v1023, %v1120
        %1138 = vst [vmem:[#allocation2] sm:$0xff] %v1122
        %1139 = vst [vmem:[#allocation2 + $0x8] sm:$0xff] %v1123
        %1140 = vst [vmem:[#allocation2 + $0x10] sm:$0xff] %v1124
        %1141 = vst [vmem:[#allocation2 + $0x18] sm:$0xff] %v1125
        %1142 = vst [vmem:[#allocation2 + $0x20] sm:$0xff] %v1126
        %1143 = vst [vmem:[#allocation2 + $0x28] sm:$0xff] %v1127
        %1144 = vst [vmem:[#allocation2 + $0x30] sm:$0xff] %v1128
        %1145 = vst [vmem:[#allocation2 + $0x38] sm:$0xff] %v1129
        %1146 = vst [vmem:[#allocation2 + $0x40] sm:$0xff] %v1130
        %1147 = vst [vmem:[#allocation2 + $0x48] sm:$0xff] %v1131
        %1148 = vst [vmem:[#allocation2 + $0x50] sm:$0xff] %v1132
        %1149 = vst [vmem:[#allocation2 + $0x58] sm:$0xff] %v1133
        %1150 = vst [vmem:[#allocation2 + $0x60] sm:$0xff] %v1134
        %1151 = vst [vmem:[#allocation2 + $0x68] sm:$0xff] %v1135
        %1152 = vst [vmem:[#allocation2 + $0x70] sm:$0xff] %v1136
        %1153 = vst [vmem:[#allocation2 + $0x78] sm:$0xff] %v1137
        %p1154 = scmp.eq.s32.totalorder %s36, 1
        // Predicated region
        $region77: #{tpu_custom_call.1} parent=47 // pred_check
          %p1155 = pneg %p1154
        $region78: #{tpu_custom_call.1} parent=47 // pred_check_branch
          %1157 = sbr.rel (%p1155) target = $region80
        $region79: #{tpu_custom_call.1} parent=47 // pred_region
          %v1158 = vld [vmem:[#allocation2] sm:$0xff]
          %v1159 = vld [vmem:[#allocation2 + $0x8] sm:$0xff]
          %v1160 = vld [vmem:[#allocation2 + $0x10] sm:$0xff]
          %v1161 = vld [vmem:[#allocation2 + $0x18] sm:$0xff]
          %v1162 = vld [vmem:[#allocation2 + $0x20] sm:$0xff]
          %v1163 = vld [vmem:[#allocation2 + $0x28] sm:$0xff]
          %v1164 = vld [vmem:[#allocation2 + $0x30] sm:$0xff]
          %v1165 = vld [vmem:[#allocation2 + $0x38] sm:$0xff]
          %v1166 = vld [vmem:[#allocation2 + $0x40] sm:$0xff]
          %v1167 = vld [vmem:[#allocation2 + $0x48] sm:$0xff]
          %v1168 = vld [vmem:[#allocation2 + $0x50] sm:$0xff]
          %v1169 = vld [vmem:[#allocation2 + $0x58] sm:$0xff]
          %v1170 = vld [vmem:[#allocation2 + $0x60] sm:$0xff]
          %v1171 = vld [vmem:[#allocation2 + $0x68] sm:$0xff]
          %v1172 = vld [vmem:[#allocation2 + $0x70] sm:$0xff]
          %v1173 = vld [vmem:[#allocation2 + $0x78] sm:$0xff]
          %v1174 = vld [vmem:[#allocation3] sm:$0x1]
          %v1176 = vperm.slane %v1174, 0
          %1177 = vset.pattern.permute.xlu0 0
          %1178 = vperm.xlu0 %1177, %v1176
          %v1179 = vpop.permute.xlu0 %1178
          %v1181 = vmul.f32 %v1158, %v1179
          %v1182 = vmul.f32 %v1159, %v1179
          %v1183 = vmul.f32 %v1160, %v1179
          %v1184 = vmul.f32 %v1161, %v1179
          %v1185 = vmul.f32 %v1162, %v1179
          %v1186 = vmul.f32 %v1163, %v1179
          %v1187 = vmul.f32 %v1164, %v1179
          %v1188 = vmul.f32 %v1165, %v1179
          %v1189 = vmul.f32 %v1166, %v1179
          %v1190 = vmul.f32 %v1167, %v1179
          %v1191 = vmul.f32 %v1168, %v1179
          %v1192 = vmul.f32 %v1169, %v1179
          %v1193 = vmul.f32 %v1170, %v1179
          %v1194 = vmul.f32 %v1171, %v1179
          %v1195 = vmul.f32 %v1172, %v1179
          %v1196 = vmul.f32 %v1173, %v1179
          %v1197 = vpack.c.bf16 %v1182, %v1181
          %v1198 = vpack.c.bf16 %v1184, %v1183
          %v1199 = vpack.c.bf16 %v1186, %v1185
          %v1200 = vpack.c.bf16 %v1188, %v1187
          %v1201 = vpack.c.bf16 %v1190, %v1189
          %v1202 = vpack.c.bf16 %v1192, %v1191
          %v1203 = vpack.c.bf16 %v1194, %v1193
          %v1204 = vpack.c.bf16 %v1196, %v1195
          %v1205 = vld [vmem:[#allocation12] sm:$0xf]
          %v1206 = vld [vmem:[#allocation12 + $0x4] sm:$0xf]
          %v1207 = vld [vmem:[#allocation12 + $0x8] sm:$0xf]
          %v1208 = vld [vmem:[#allocation12 + $0xc] sm:$0xf]
          %v1209 = vld [vmem:[#allocation12 + $0x10] sm:$0xf]
          %v1210 = vld [vmem:[#allocation12 + $0x14] sm:$0xf]
          %v1211 = vld [vmem:[#allocation12 + $0x18] sm:$0xf]
          %v1212 = vld [vmem:[#allocation12 + $0x1c] sm:$0xf]
          %v1213 = vld [vmem:[#allocation12 + $0x20] sm:$0xf]
          %v1214 = vld [vmem:[#allocation12 + $0x24] sm:$0xf]
          %v1215 = vld [vmem:[#allocation12 + $0x28] sm:$0xf]
          %v1216 = vld [vmem:[#allocation12 + $0x2c] sm:$0xf]
          %v1217 = vld [vmem:[#allocation12 + $0x30] sm:$0xf]
          %v1218 = vld [vmem:[#allocation12 + $0x34] sm:$0xf]
          %v1219 = vld [vmem:[#allocation12 + $0x38] sm:$0xf]
          %v1220 = vld [vmem:[#allocation12 + $0x3c] sm:$0xf]
          %v1237 = vunpack.c.l.b16 %v1205
          %v1238 = vunpack.c.l.b16 %v1206
          %v1239 = vunpack.c.l.b16 %v1207
          %v1240 = vunpack.c.l.b16 %v1208
          %v1241 = vunpack.c.l.b16 %v1209
          %v1242 = vunpack.c.l.b16 %v1210
          %v1243 = vunpack.c.l.b16 %v1211
          %v1244 = vunpack.c.l.b16 %v1212
          %v1245 = vunpack.c.l.b16 %v1213
          %v1246 = vunpack.c.l.b16 %v1214
          %v1247 = vunpack.c.l.b16 %v1215
          %v1248 = vunpack.c.l.b16 %v1216
          %v1249 = vunpack.c.l.b16 %v1217
          %v1250 = vunpack.c.l.b16 %v1218
          %v1251 = vunpack.c.l.b16 %v1219
          %v1252 = vunpack.c.l.b16 %v1220
          %v1253 = vpack.c.b16 %v1238, %v1237
          %v1254 = vpack.c.b16 %v1240, %v1239
          %v1255 = vpack.c.b16 %v1242, %v1241
          %v1256 = vpack.c.b16 %v1244, %v1243
          %v1257 = vpack.c.b16 %v1246, %v1245
          %v1258 = vpack.c.b16 %v1248, %v1247
          %v1259 = vpack.c.b16 %v1250, %v1249
          %v1260 = vpack.c.b16 %v1252, %v1251
          %1269 = vmatpush.bf16.msra.mxu0 %v1260
          %1270 = vmatpush.bf16.msra.mxu0 %v1259
          %1271 = vmatpush.bf16.msra.mxu0 %v1258
          %1272 = vmatpush.bf16.msra.mxu0 %v1257
          %1273 = vmatpush.bf16.msra.mxu0 %v1256
          %1274 = vmatpush.bf16.msra.mxu0 %v1255
          %1275 = vmatpush.bf16.msra.mxu0 %v1254
          %1276 = vmatpush.bf16.msra.mxu0 %v1253
          %1277 = vmatmul.bf16.gmra.mxu0 %v1197
          %v1278 = vpop.f32.mrf.mxu0
          %v1279 = vadd.f32 0.0, %v1278
          %v1280 = vpop.f32.mrf.mxu0
          %v1281 = vadd.f32 0.0, %v1280
          %1282 = vmatmul.bf16.gmra.mxu0 %v1198
          %v1283 = vpop.f32.mrf.mxu0
          %v1284 = vadd.f32 0.0, %v1283
          %v1285 = vpop.f32.mrf.mxu0
          %v1286 = vadd.f32 0.0, %v1285
          %1287 = vmatmul.bf16.gmra.mxu0 %v1199
          %v1288 = vpop.f32.mrf.mxu0
          %v1289 = vadd.f32 0.0, %v1288
          %v1290 = vpop.f32.mrf.mxu0
          %v1291 = vadd.f32 0.0, %v1290
          %1292 = vmatmul.bf16.gmra.mxu0 %v1200
          %v1293 = vpop.f32.mrf.mxu0
          %v1294 = vadd.f32 0.0, %v1293
          %v1295 = vpop.f32.mrf.mxu0
          %v1296 = vadd.f32 0.0, %v1295
          %1297 = vmatmul.bf16.gmra.mxu0 %v1201
          %v1298 = vpop.f32.mrf.mxu0
          %v1299 = vadd.f32 0.0, %v1298
          %v1300 = vpop.f32.mrf.mxu0
          %v1301 = vadd.f32 0.0, %v1300
          %1302 = vmatmul.bf16.gmra.mxu0 %v1202
          %v1303 = vpop.f32.mrf.mxu0
          %v1304 = vadd.f32 0.0, %v1303
          %v1305 = vpop.f32.mrf.mxu0
          %v1306 = vadd.f32 0.0, %v1305
          %1307 = vmatmul.bf16.gmra.mxu0 %v1203
          %v1308 = vpop.f32.mrf.mxu0
          %v1309 = vadd.f32 0.0, %v1308
          %v1310 = vpop.f32.mrf.mxu0
          %v1311 = vadd.f32 0.0, %v1310
          %1312 = vmatmul.bf16.gmra.mxu0 %v1204
          %v1313 = vpop.f32.mrf.mxu0
          %v1314 = vadd.f32 0.0, %v1313
          %v1315 = vpop.f32.mrf.mxu0
          %v1316 = vadd.f32 0.0, %v1315
          %1317 = vdwg.mxu0
          %v1318 = vxor.u32 %v1279, 2147483648
          %v1319 = vxor.u32 %v1281, 2147483648
          %v1320 = vxor.u32 %v1284, 2147483648
          %v1321 = vxor.u32 %v1286, 2147483648
          %v1322 = vxor.u32 %v1289, 2147483648
          %v1323 = vxor.u32 %v1291, 2147483648
          %v1324 = vxor.u32 %v1294, 2147483648
          %v1325 = vxor.u32 %v1296, 2147483648
          %v1326 = vxor.u32 %v1299, 2147483648
          %v1327 = vxor.u32 %v1301, 2147483648
          %v1328 = vxor.u32 %v1304, 2147483648
          %v1329 = vxor.u32 %v1306, 2147483648
          %v1330 = vxor.u32 %v1309, 2147483648
          %v1331 = vxor.u32 %v1311, 2147483648
          %v1332 = vxor.u32 %v1314, 2147483648
          %v1333 = vxor.u32 %v1316, 2147483648
          %v1334 = vmul.f32 %v1318, 1.442695
          %v1335 = vpow.pop %v1334
          %v1336 = vmul.f32 %v1319, 1.442695
          %v1337 = vpow.pop %v1336
          %v1338 = vmul.f32 %v1320, 1.442695
          %v1339 = vpow.pop %v1338
          %v1340 = vmul.f32 %v1321, 1.442695
          %v1341 = vpow.pop %v1340
          %v1342 = vmul.f32 %v1322, 1.442695
          %v1343 = vpow.pop %v1342
          %v1344 = vmul.f32 %v1323, 1.442695
          %v1345 = vpow.pop %v1344
          %v1346 = vmul.f32 %v1324, 1.442695
          %v1347 = vpow.pop %v1346
          %v1348 = vmul.f32 %v1325, 1.442695
          %v1349 = vpow.pop %v1348
          %v1350 = vmul.f32 %v1326, 1.442695
          %v1351 = vpow.pop %v1350
          %v1352 = vmul.f32 %v1327, 1.442695
          %v1353 = vpow.pop %v1352
          %v1354 = vmul.f32 %v1328, 1.442695
          %v1355 = vpow.pop %v1354
          %v1356 = vmul.f32 %v1329, 1.442695
          %v1357 = vpow.pop %v1356
          %v1358 = vmul.f32 %v1330, 1.442695
          %v1359 = vpow.pop %v1358
          %v1360 = vmul.f32 %v1331, 1.442695
          %v1361 = vpow.pop %v1360
          %v1362 = vmul.f32 %v1332, 1.442695
          %v1363 = vpow.pop %v1362
          %v1364 = vmul.f32 %v1333, 1.442695
          %v1365 = vpow.pop %v1364
          %v1366 = vadd.f32 %v1335, 1.0
          %v1367 = vadd.f32 %v1337, 1.0
          %v1368 = vadd.f32 %v1339, 1.0
          %v1369 = vadd.f32 %v1341, 1.0
          %v1370 = vadd.f32 %v1343, 1.0
          %v1371 = vadd.f32 %v1345, 1.0
          %v1372 = vadd.f32 %v1347, 1.0
          %v1373 = vadd.f32 %v1349, 1.0
          %v1374 = vadd.f32 %v1351, 1.0
          %v1375 = vadd.f32 %v1353, 1.0
          %v1376 = vadd.f32 %v1355, 1.0
          %v1377 = vadd.f32 %v1357, 1.0
          %v1378 = vadd.f32 %v1359, 1.0
          %v1379 = vadd.f32 %v1361, 1.0
          %v1380 = vadd.f32 %v1363, 1.0
          %v1381 = vadd.f32 %v1365, 1.0
          %v1382 = vrcp.pop %v1366
          %v1383 = vmul.f32 %v1366, %v1382
          %v1384 = vsub.f32 1.0, %v1383
          %v1385 = vmul.f32 %v1382, %v1384
          %v1386 = vadd.f32 %v1382, %v1385
          %vm1387 = vweird.f32 %v1366
          %vm1388 = vweird.f32 %v1382
          %vm1389 = vmor %vm1387, %vm1388
          %v1390 = vsel %vm1389, %v1382, %v1386
          %v1391 = vand.u32 2147483647, %v1366
          %vm1392 = vcmp.eq.f32.partialorder %v1391, 8.507059e+37
          %v1393 = vand.u32 %v1366, 2147483648
          %v1394 = vor.u32 1.1754944e-38, %v1393
          %v1395 = vsel %vm1392, %v1394, %v1390
          %v1396 = vmul.f32 1.0, %v1395
          %v1397 = vrcp.pop %v1367
          %v1398 = vmul.f32 %v1367, %v1397
          %v1399 = vsub.f32 1.0, %v1398
          %v1400 = vmul.f32 %v1397, %v1399
          %v1401 = vadd.f32 %v1397, %v1400
          %vm1402 = vweird.f32 %v1367
          %vm1403 = vweird.f32 %v1397
          %vm1404 = vmor %vm1402, %vm1403
          %v1405 = vsel %vm1404, %v1397, %v1401
          %v1406 = vand.u32 2147483647, %v1367
          %vm1407 = vcmp.eq.f32.partialorder %v1406, 8.507059e+37
          %v1408 = vand.u32 %v1367, 2147483648
          %v1409 = vor.u32 1.1754944e-38, %v1408
          %v1410 = vsel %vm1407, %v1409, %v1405
          %v1411 = vmul.f32 1.0, %v1410
          %v1412 = vrcp.pop %v1368
          %v1413 = vmul.f32 %v1368, %v1412
          %v1414 = vsub.f32 1.0, %v1413
          %v1415 = vmul.f32 %v1412, %v1414
          %v1416 = vadd.f32 %v1412, %v1415
          %vm1417 = vweird.f32 %v1368
          %vm1418 = vweird.f32 %v1412
          %vm1419 = vmor %vm1417, %vm1418
          %v1420 = vsel %vm1419, %v1412, %v1416
          %v1421 = vand.u32 2147483647, %v1368
          %vm1422 = vcmp.eq.f32.partialorder %v1421, 8.507059e+37
          %v1423 = vand.u32 %v1368, 2147483648
          %v1424 = vor.u32 1.1754944e-38, %v1423
          %v1425 = vsel %vm1422, %v1424, %v1420
          %v1426 = vmul.f32 1.0, %v1425
          %v1427 = vrcp.pop %v1369
          %v1428 = vmul.f32 %v1369, %v1427
          %v1429 = vsub.f32 1.0, %v1428
          %v1430 = vmul.f32 %v1427, %v1429
          %v1431 = vadd.f32 %v1427, %v1430
          %vm1432 = vweird.f32 %v1369
          %vm1433 = vweird.f32 %v1427
          %vm1434 = vmor %vm1432, %vm1433
          %v1435 = vsel %vm1434, %v1427, %v1431
          %v1436 = vand.u32 2147483647, %v1369
          %vm1437 = vcmp.eq.f32.partialorder %v1436, 8.507059e+37
          %v1438 = vand.u32 %v1369, 2147483648
          %v1439 = vor.u32 1.1754944e-38, %v1438
          %v1440 = vsel %vm1437, %v1439, %v1435
          %v1441 = vmul.f32 1.0, %v1440
          %v1442 = vrcp.pop %v1370
          %v1443 = vmul.f32 %v1370, %v1442
          %v1444 = vsub.f32 1.0, %v1443
          %v1445 = vmul.f32 %v1442, %v1444
          %v1446 = vadd.f32 %v1442, %v1445
          %vm1447 = vweird.f32 %v1370
          %vm1448 = vweird.f32 %v1442
          %vm1449 = vmor %vm1447, %vm1448
          %v1450 = vsel %vm1449, %v1442, %v1446
          %v1451 = vand.u32 2147483647, %v1370
          %vm1452 = vcmp.eq.f32.partialorder %v1451, 8.507059e+37
          %v1453 = vand.u32 %v1370, 2147483648
          %v1454 = vor.u32 1.1754944e-38, %v1453
          %v1455 = vsel %vm1452, %v1454, %v1450
          %v1456 = vmul.f32 1.0, %v1455
          %v1457 = vrcp.pop %v1371
          %v1458 = vmul.f32 %v1371, %v1457
          %v1459 = vsub.f32 1.0, %v1458
          %v1460 = vmul.f32 %v1457, %v1459
          %v1461 = vadd.f32 %v1457, %v1460
          %vm1462 = vweird.f32 %v1371
          %vm1463 = vweird.f32 %v1457
          %vm1464 = vmor %vm1462, %vm1463
          %v1465 = vsel %vm1464, %v1457, %v1461
          %v1466 = vand.u32 2147483647, %v1371
          %vm1467 = vcmp.eq.f32.partialorder %v1466, 8.507059e+37
          %v1468 = vand.u32 %v1371, 2147483648
          %v1469 = vor.u32 1.1754944e-38, %v1468
          %v1470 = vsel %vm1467, %v1469, %v1465
          %v1471 = vmul.f32 1.0, %v1470
          %v1472 = vrcp.pop %v1372
          %v1473 = vmul.f32 %v1372, %v1472
          %v1474 = vsub.f32 1.0, %v1473
          %v1475 = vmul.f32 %v1472, %v1474
          %v1476 = vadd.f32 %v1472, %v1475
          %vm1477 = vweird.f32 %v1372
          %vm1478 = vweird.f32 %v1472
          %vm1479 = vmor %vm1477, %vm1478
          %v1480 = vsel %vm1479, %v1472, %v1476
          %v1481 = vand.u32 2147483647, %v1372
          %vm1482 = vcmp.eq.f32.partialorder %v1481, 8.507059e+37
          %v1483 = vand.u32 %v1372, 2147483648
          %v1484 = vor.u32 1.1754944e-38, %v1483
          %v1485 = vsel %vm1482, %v1484, %v1480
          %v1486 = vmul.f32 1.0, %v1485
          %v1487 = vrcp.pop %v1373
          %v1488 = vmul.f32 %v1373, %v1487
          %v1489 = vsub.f32 1.0, %v1488
          %v1490 = vmul.f32 %v1487, %v1489
          %v1491 = vadd.f32 %v1487, %v1490
          %vm1492 = vweird.f32 %v1373
          %vm1493 = vweird.f32 %v1487
          %vm1494 = vmor %vm1492, %vm1493
          %v1495 = vsel %vm1494, %v1487, %v1491
          %v1496 = vand.u32 2147483647, %v1373
          %vm1497 = vcmp.eq.f32.partialorder %v1496, 8.507059e+37
          %v1498 = vand.u32 %v1373, 2147483648
          %v1499 = vor.u32 1.1754944e-38, %v1498
          %v1500 = vsel %vm1497, %v1499, %v1495
          %v1501 = vmul.f32 1.0, %v1500
          %v1502 = vrcp.pop %v1374
          %v1503 = vmul.f32 %v1374, %v1502
          %v1504 = vsub.f32 1.0, %v1503
          %v1505 = vmul.f32 %v1502, %v1504
          %v1506 = vadd.f32 %v1502, %v1505
          %vm1507 = vweird.f32 %v1374
          %vm1508 = vweird.f32 %v1502
          %vm1509 = vmor %vm1507, %vm1508
          %v1510 = vsel %vm1509, %v1502, %v1506
          %v1511 = vand.u32 2147483647, %v1374
          %vm1512 = vcmp.eq.f32.partialorder %v1511, 8.507059e+37
          %v1513 = vand.u32 %v1374, 2147483648
          %v1514 = vor.u32 1.1754944e-38, %v1513
          %v1515 = vsel %vm1512, %v1514, %v1510
          %v1516 = vmul.f32 1.0, %v1515
          %v1517 = vrcp.pop %v1375
          %v1518 = vmul.f32 %v1375, %v1517
          %v1519 = vsub.f32 1.0, %v1518
          %v1520 = vmul.f32 %v1517, %v1519
          %v1521 = vadd.f32 %v1517, %v1520
          %vm1522 = vweird.f32 %v1375
          %vm1523 = vweird.f32 %v1517
          %vm1524 = vmor %vm1522, %vm1523
          %v1525 = vsel %vm1524, %v1517, %v1521
          %v1526 = vand.u32 2147483647, %v1375
          %vm1527 = vcmp.eq.f32.partialorder %v1526, 8.507059e+37
          %v1528 = vand.u32 %v1375, 2147483648
          %v1529 = vor.u32 1.1754944e-38, %v1528
          %v1530 = vsel %vm1527, %v1529, %v1525
          %v1531 = vmul.f32 1.0, %v1530
          %v1532 = vrcp.pop %v1376
          %v1533 = vmul.f32 %v1376, %v1532
          %v1534 = vsub.f32 1.0, %v1533
          %v1535 = vmul.f32 %v1532, %v1534
          %v1536 = vadd.f32 %v1532, %v1535
          %vm1537 = vweird.f32 %v1376
          %vm1538 = vweird.f32 %v1532
          %vm1539 = vmor %vm1537, %vm1538
          %v1540 = vsel %vm1539, %v1532, %v1536
          %v1541 = vand.u32 2147483647, %v1376
          %vm1542 = vcmp.eq.f32.partialorder %v1541, 8.507059e+37
          %v1543 = vand.u32 %v1376, 2147483648
          %v1544 = vor.u32 1.1754944e-38, %v1543
          %v1545 = vsel %vm1542, %v1544, %v1540
          %v1546 = vmul.f32 1.0, %v1545
          %v1547 = vrcp.pop %v1377
          %v1548 = vmul.f32 %v1377, %v1547
          %v1549 = vsub.f32 1.0, %v1548
          %v1550 = vmul.f32 %v1547, %v1549
          %v1551 = vadd.f32 %v1547, %v1550
          %vm1552 = vweird.f32 %v1377
          %vm1553 = vweird.f32 %v1547
          %vm1554 = vmor %vm1552, %vm1553
          %v1555 = vsel %vm1554, %v1547, %v1551
          %v1556 = vand.u32 2147483647, %v1377
          %vm1557 = vcmp.eq.f32.partialorder %v1556, 8.507059e+37
          %v1558 = vand.u32 %v1377, 2147483648
          %v1559 = vor.u32 1.1754944e-38, %v1558
          %v1560 = vsel %vm1557, %v1559, %v1555
          %v1561 = vmul.f32 1.0, %v1560
          %v1562 = vrcp.pop %v1378
          %v1563 = vmul.f32 %v1378, %v1562
          %v1564 = vsub.f32 1.0, %v1563
          %v1565 = vmul.f32 %v1562, %v1564
          %v1566 = vadd.f32 %v1562, %v1565
          %vm1567 = vweird.f32 %v1378
          %vm1568 = vweird.f32 %v1562
          %vm1569 = vmor %vm1567, %vm1568
          %v1570 = vsel %vm1569, %v1562, %v1566
          %v1571 = vand.u32 2147483647, %v1378
          %vm1572 = vcmp.eq.f32.partialorder %v1571, 8.507059e+37
          %v1573 = vand.u32 %v1378, 2147483648
          %v1574 = vor.u32 1.1754944e-38, %v1573
          %v1575 = vsel %vm1572, %v1574, %v1570
          %v1576 = vmul.f32 1.0, %v1575
          %v1577 = vrcp.pop %v1379
          %v1578 = vmul.f32 %v1379, %v1577
          %v1579 = vsub.f32 1.0, %v1578
          %v1580 = vmul.f32 %v1577, %v1579
          %v1581 = vadd.f32 %v1577, %v1580
          %vm1582 = vweird.f32 %v1379
          %vm1583 = vweird.f32 %v1577
          %vm1584 = vmor %vm1582, %vm1583
          %v1585 = vsel %vm1584, %v1577, %v1581
          %v1586 = vand.u32 2147483647, %v1379
          %vm1587 = vcmp.eq.f32.partialorder %v1586, 8.507059e+37
          %v1588 = vand.u32 %v1379, 2147483648
          %v1589 = vor.u32 1.1754944e-38, %v1588
          %v1590 = vsel %vm1587, %v1589, %v1585
          %v1591 = vmul.f32 1.0, %v1590
          %v1592 = vrcp.pop %v1380
          %v1593 = vmul.f32 %v1380, %v1592
          %v1594 = vsub.f32 1.0, %v1593
          %v1595 = vmul.f32 %v1592, %v1594
          %v1596 = vadd.f32 %v1592, %v1595
          %vm1597 = vweird.f32 %v1380
          %vm1598 = vweird.f32 %v1592
          %vm1599 = vmor %vm1597, %vm1598
          %v1600 = vsel %vm1599, %v1592, %v1596
          %v1601 = vand.u32 2147483647, %v1380
          %vm1602 = vcmp.eq.f32.partialorder %v1601, 8.507059e+37
          %v1603 = vand.u32 %v1380, 2147483648
          %v1604 = vor.u32 1.1754944e-38, %v1603
          %v1605 = vsel %vm1602, %v1604, %v1600
          %v1606 = vmul.f32 1.0, %v1605
          %v1607 = vrcp.pop %v1381
          %v1608 = vmul.f32 %v1381, %v1607
          %v1609 = vsub.f32 1.0, %v1608
          %v1610 = vmul.f32 %v1607, %v1609
          %v1611 = vadd.f32 %v1607, %v1610
          %vm1612 = vweird.f32 %v1381
          %vm1613 = vweird.f32 %v1607
          %vm1614 = vmor %vm1612, %vm1613
          %v1615 = vsel %vm1614, %v1607, %v1611
          %v1616 = vand.u32 2147483647, %v1381
          %vm1617 = vcmp.eq.f32.partialorder %v1616, 8.507059e+37
          %v1618 = vand.u32 %v1381, 2147483648
          %v1619 = vor.u32 1.1754944e-38, %v1618
          %v1620 = vsel %vm1617, %v1619, %v1615
          %v1621 = vmul.f32 1.0, %v1620
          %v1622 = vmul.f32 %v1279, %v1396
          %v1623 = vmul.f32 %v1281, %v1411
          %v1624 = vmul.f32 %v1284, %v1426
          %v1625 = vmul.f32 %v1286, %v1441
          %v1626 = vmul.f32 %v1289, %v1456
          %v1627 = vmul.f32 %v1291, %v1471
          %v1628 = vmul.f32 %v1294, %v1486
          %v1629 = vmul.f32 %v1296, %v1501
          %v1630 = vmul.f32 %v1299, %v1516
          %v1631 = vmul.f32 %v1301, %v1531
          %v1632 = vmul.f32 %v1304, %v1546
          %v1633 = vmul.f32 %v1306, %v1561
          %v1634 = vmul.f32 %v1309, %v1576
          %v1635 = vmul.f32 %v1311, %v1591
          %v1636 = vmul.f32 %v1314, %v1606
          %v1637 = vmul.f32 %v1316, %v1621
          %v1638 = vpack.c.bf16 %v1623, %v1622
          %v1639 = vpack.c.bf16 %v1625, %v1624
          %v1640 = vpack.c.bf16 %v1627, %v1626
          %v1641 = vpack.c.bf16 %v1629, %v1628
          %v1642 = vpack.c.bf16 %v1631, %v1630
          %v1643 = vpack.c.bf16 %v1633, %v1632
          %v1644 = vpack.c.bf16 %v1635, %v1634
          %v1645 = vpack.c.bf16 %v1637, %v1636
          %v1646 = vld [vmem:[#allocation13] sm:$0xf]
          %v1647 = vld [vmem:[#allocation13 + $0x4] sm:$0xf]
          %v1648 = vld [vmem:[#allocation13 + $0x8] sm:$0xf]
          %v1649 = vld [vmem:[#allocation13 + $0xc] sm:$0xf]
          %v1650 = vld [vmem:[#allocation13 + $0x10] sm:$0xf]
          %v1651 = vld [vmem:[#allocation13 + $0x14] sm:$0xf]
          %v1652 = vld [vmem:[#allocation13 + $0x18] sm:$0xf]
          %v1653 = vld [vmem:[#allocation13 + $0x1c] sm:$0xf]
          %v1654 = vld [vmem:[#allocation13 + $0x20] sm:$0xf]
          %v1655 = vld [vmem:[#allocation13 + $0x24] sm:$0xf]
          %v1656 = vld [vmem:[#allocation13 + $0x28] sm:$0xf]
          %v1657 = vld [vmem:[#allocation13 + $0x2c] sm:$0xf]
          %v1658 = vld [vmem:[#allocation13 + $0x30] sm:$0xf]
          %v1659 = vld [vmem:[#allocation13 + $0x34] sm:$0xf]
          %v1660 = vld [vmem:[#allocation13 + $0x38] sm:$0xf]
          %v1661 = vld [vmem:[#allocation13 + $0x3c] sm:$0xf]
          %v1678 = vunpack.c.l.b16 %v1646
          %v1679 = vunpack.c.l.b16 %v1647
          %v1680 = vunpack.c.l.b16 %v1648
          %v1681 = vunpack.c.l.b16 %v1649
          %v1682 = vunpack.c.l.b16 %v1650
          %v1683 = vunpack.c.l.b16 %v1651
          %v1684 = vunpack.c.l.b16 %v1652
          %v1685 = vunpack.c.l.b16 %v1653
          %v1686 = vunpack.c.l.b16 %v1654
          %v1687 = vunpack.c.l.b16 %v1655
          %v1688 = vunpack.c.l.b16 %v1656
          %v1689 = vunpack.c.l.b16 %v1657
          %v1690 = vunpack.c.l.b16 %v1658
          %v1691 = vunpack.c.l.b16 %v1659
          %v1692 = vunpack.c.l.b16 %v1660
          %v1693 = vunpack.c.l.b16 %v1661
          %v1694 = vpack.c.b16 %v1679, %v1678
          %v1695 = vpack.c.b16 %v1681, %v1680
          %v1696 = vpack.c.b16 %v1683, %v1682
          %v1697 = vpack.c.b16 %v1685, %v1684
          %v1698 = vpack.c.b16 %v1687, %v1686
          %v1699 = vpack.c.b16 %v1689, %v1688
          %v1700 = vpack.c.b16 %v1691, %v1690
          %v1701 = vpack.c.b16 %v1693, %v1692
          %1710 = vmatpush.bf16.msra.mxu0 %v1701
          %1711 = vmatpush.bf16.msra.mxu0 %v1700
          %1712 = vmatpush.bf16.msra.mxu0 %v1699
          %1713 = vmatpush.bf16.msra.mxu0 %v1698
          %1714 = vmatpush.bf16.msra.mxu0 %v1697
          %1715 = vmatpush.bf16.msra.mxu0 %v1696
          %1716 = vmatpush.bf16.msra.mxu0 %v1695
          %1717 = vmatpush.bf16.msra.mxu0 %v1694
          %1718 = vmatmul.bf16.gmra.mxu0 %v1638
          %v1719 = vpop.f32.mrf.mxu0
          %v1720 = vadd.f32 0.0, %v1719
          %v1721 = vpop.f32.mrf.mxu0
          %v1722 = vadd.f32 0.0, %v1721
          %1723 = vmatmul.bf16.gmra.mxu0 %v1639
          %v1724 = vpop.f32.mrf.mxu0
          %v1725 = vadd.f32 0.0, %v1724
          %v1726 = vpop.f32.mrf.mxu0
          %v1727 = vadd.f32 0.0, %v1726
          %1728 = vmatmul.bf16.gmra.mxu0 %v1640
          %v1729 = vpop.f32.mrf.mxu0
          %v1730 = vadd.f32 0.0, %v1729
          %v1731 = vpop.f32.mrf.mxu0
          %v1732 = vadd.f32 0.0, %v1731
          %1733 = vmatmul.bf16.gmra.mxu0 %v1641
          %v1734 = vpop.f32.mrf.mxu0
          %v1735 = vadd.f32 0.0, %v1734
          %v1736 = vpop.f32.mrf.mxu0
          %v1737 = vadd.f32 0.0, %v1736
          %1738 = vmatmul.bf16.gmra.mxu0 %v1642
          %v1739 = vpop.f32.mrf.mxu0
          %v1740 = vadd.f32 0.0, %v1739
          %v1741 = vpop.f32.mrf.mxu0
          %v1742 = vadd.f32 0.0, %v1741
          %1743 = vmatmul.bf16.gmra.mxu0 %v1643
          %v1744 = vpop.f32.mrf.mxu0
          %v1745 = vadd.f32 0.0, %v1744
          %v1746 = vpop.f32.mrf.mxu0
          %v1747 = vadd.f32 0.0, %v1746
          %1748 = vmatmul.bf16.gmra.mxu0 %v1644
          %v1749 = vpop.f32.mrf.mxu0
          %v1750 = vadd.f32 0.0, %v1749
          %v1751 = vpop.f32.mrf.mxu0
          %v1752 = vadd.f32 0.0, %v1751
          %1753 = vmatmul.bf16.gmra.mxu0 %v1645
          %v1754 = vpop.f32.mrf.mxu0
          %v1755 = vadd.f32 0.0, %v1754
          %v1756 = vpop.f32.mrf.mxu0
          %v1757 = vadd.f32 0.0, %v1756
          %1758 = vdwg.mxu0
          %v1759 = vxor.u32 %v1720, 2147483648
          %v1760 = vxor.u32 %v1722, 2147483648
          %v1761 = vxor.u32 %v1725, 2147483648
          %v1762 = vxor.u32 %v1727, 2147483648
          %v1763 = vxor.u32 %v1730, 2147483648
          %v1764 = vxor.u32 %v1732, 2147483648
          %v1765 = vxor.u32 %v1735, 2147483648
          %v1766 = vxor.u32 %v1737, 2147483648
          %v1767 = vxor.u32 %v1740, 2147483648
          %v1768 = vxor.u32 %v1742, 2147483648
          %v1769 = vxor.u32 %v1745, 2147483648
          %v1770 = vxor.u32 %v1747, 2147483648
          %v1771 = vxor.u32 %v1750, 2147483648
          %v1772 = vxor.u32 %v1752, 2147483648
          %v1773 = vxor.u32 %v1755, 2147483648
          %v1774 = vxor.u32 %v1757, 2147483648
          %v1775 = vmul.f32 %v1759, 1.442695
          %v1776 = vpow.pop %v1775
          %v1777 = vmul.f32 %v1760, 1.442695
          %v1778 = vpow.pop %v1777
          %v1779 = vmul.f32 %v1761, 1.442695
          %v1780 = vpow.pop %v1779
          %v1781 = vmul.f32 %v1762, 1.442695
          %v1782 = vpow.pop %v1781
          %v1783 = vmul.f32 %v1763, 1.442695
          %v1784 = vpow.pop %v1783
          %v1785 = vmul.f32 %v1764, 1.442695
          %v1786 = vpow.pop %v1785
          %v1787 = vmul.f32 %v1765, 1.442695
          %v1788 = vpow.pop %v1787
          %v1789 = vmul.f32 %v1766, 1.442695
          %v1790 = vpow.pop %v1789
          %v1791 = vmul.f32 %v1767, 1.442695
          %v1792 = vpow.pop %v1791
          %v1793 = vmul.f32 %v1768, 1.442695
          %v1794 = vpow.pop %v1793
          %v1795 = vmul.f32 %v1769, 1.442695
          %v1796 = vpow.pop %v1795
          %v1797 = vmul.f32 %v1770, 1.442695
          %v1798 = vpow.pop %v1797
          %v1799 = vmul.f32 %v1771, 1.442695
          %v1800 = vpow.pop %v1799
          %v1801 = vmul.f32 %v1772, 1.442695
          %v1802 = vpow.pop %v1801
          %v1803 = vmul.f32 %v1773, 1.442695
          %v1804 = vpow.pop %v1803
          %v1805 = vmul.f32 %v1774, 1.442695
          %v1806 = vpow.pop %v1805
          %v1807 = vadd.f32 %v1776, 1.0
          %v1808 = vadd.f32 %v1778, 1.0
          %v1809 = vadd.f32 %v1780, 1.0
          %v1810 = vadd.f32 %v1782, 1.0
          %v1811 = vadd.f32 %v1784, 1.0
          %v1812 = vadd.f32 %v1786, 1.0
          %v1813 = vadd.f32 %v1788, 1.0
          %v1814 = vadd.f32 %v1790, 1.0
          %v1815 = vadd.f32 %v1792, 1.0
          %v1816 = vadd.f32 %v1794, 1.0
          %v1817 = vadd.f32 %v1796, 1.0
          %v1818 = vadd.f32 %v1798, 1.0
          %v1819 = vadd.f32 %v1800, 1.0
          %v1820 = vadd.f32 %v1802, 1.0
          %v1821 = vadd.f32 %v1804, 1.0
          %v1822 = vadd.f32 %v1806, 1.0
          %v1823 = vrcp.pop %v1807
          %v1824 = vmul.f32 %v1807, %v1823
          %v1825 = vsub.f32 1.0, %v1824
          %v1826 = vmul.f32 %v1823, %v1825
          %v1827 = vadd.f32 %v1823, %v1826
          %vm1828 = vweird.f32 %v1807
          %vm1829 = vweird.f32 %v1823
          %vm1830 = vmor %vm1828, %vm1829
          %v1831 = vsel %vm1830, %v1823, %v1827
          %v1832 = vand.u32 2147483647, %v1807
          %vm1833 = vcmp.eq.f32.partialorder %v1832, 8.507059e+37
          %v1834 = vand.u32 %v1807, 2147483648
          %v1835 = vor.u32 1.1754944e-38, %v1834
          %v1836 = vsel %vm1833, %v1835, %v1831
          %v1837 = vmul.f32 1.0, %v1836
          %v1838 = vrcp.pop %v1808
          %v1839 = vmul.f32 %v1808, %v1838
          %v1840 = vsub.f32 1.0, %v1839
          %v1841 = vmul.f32 %v1838, %v1840
          %v1842 = vadd.f32 %v1838, %v1841
          %vm1843 = vweird.f32 %v1808
          %vm1844 = vweird.f32 %v1838
          %vm1845 = vmor %vm1843, %vm1844
          %v1846 = vsel %vm1845, %v1838, %v1842
          %v1847 = vand.u32 2147483647, %v1808
          %vm1848 = vcmp.eq.f32.partialorder %v1847, 8.507059e+37
          %v1849 = vand.u32 %v1808, 2147483648
          %v1850 = vor.u32 1.1754944e-38, %v1849
          %v1851 = vsel %vm1848, %v1850, %v1846
          %v1852 = vmul.f32 1.0, %v1851
          %v1853 = vrcp.pop %v1809
          %v1854 = vmul.f32 %v1809, %v1853
          %v1855 = vsub.f32 1.0, %v1854
          %v1856 = vmul.f32 %v1853, %v1855
          %v1857 = vadd.f32 %v1853, %v1856
          %vm1858 = vweird.f32 %v1809
          %vm1859 = vweird.f32 %v1853
          %vm1860 = vmor %vm1858, %vm1859
          %v1861 = vsel %vm1860, %v1853, %v1857
          %v1862 = vand.u32 2147483647, %v1809
          %vm1863 = vcmp.eq.f32.partialorder %v1862, 8.507059e+37
          %v1864 = vand.u32 %v1809, 2147483648
          %v1865 = vor.u32 1.1754944e-38, %v1864
          %v1866 = vsel %vm1863, %v1865, %v1861
          %v1867 = vmul.f32 1.0, %v1866
          %v1868 = vrcp.pop %v1810
          %v1869 = vmul.f32 %v1810, %v1868
          %v1870 = vsub.f32 1.0, %v1869
          %v1871 = vmul.f32 %v1868, %v1870
          %v1872 = vadd.f32 %v1868, %v1871
          %vm1873 = vweird.f32 %v1810
          %vm1874 = vweird.f32 %v1868
          %vm1875 = vmor %vm1873, %vm1874
          %v1876 = vsel %vm1875, %v1868, %v1872
          %v1877 = vand.u32 2147483647, %v1810
          %vm1878 = vcmp.eq.f32.partialorder %v1877, 8.507059e+37
          %v1879 = vand.u32 %v1810, 2147483648
          %v1880 = vor.u32 1.1754944e-38, %v1879
          %v1881 = vsel %vm1878, %v1880, %v1876
          %v1882 = vmul.f32 1.0, %v1881
          %v1883 = vrcp.pop %v1811
          %v1884 = vmul.f32 %v1811, %v1883
          %v1885 = vsub.f32 1.0, %v1884
          %v1886 = vmul.f32 %v1883, %v1885
          %v1887 = vadd.f32 %v1883, %v1886
          %vm1888 = vweird.f32 %v1811
          %vm1889 = vweird.f32 %v1883
          %vm1890 = vmor %vm1888, %vm1889
          %v1891 = vsel %vm1890, %v1883, %v1887
          %v1892 = vand.u32 2147483647, %v1811
          %vm1893 = vcmp.eq.f32.partialorder %v1892, 8.507059e+37
          %v1894 = vand.u32 %v1811, 2147483648
          %v1895 = vor.u32 1.1754944e-38, %v1894
          %v1896 = vsel %vm1893, %v1895, %v1891
          %v1897 = vmul.f32 1.0, %v1896
          %v1898 = vrcp.pop %v1812
          %v1899 = vmul.f32 %v1812, %v1898
          %v1900 = vsub.f32 1.0, %v1899
          %v1901 = vmul.f32 %v1898, %v1900
          %v1902 = vadd.f32 %v1898, %v1901
          %vm1903 = vweird.f32 %v1812
          %vm1904 = vweird.f32 %v1898
          %vm1905 = vmor %vm1903, %vm1904
          %v1906 = vsel %vm1905, %v1898, %v1902
          %v1907 = vand.u32 2147483647, %v1812
          %vm1908 = vcmp.eq.f32.partialorder %v1907, 8.507059e+37
          %v1909 = vand.u32 %v1812, 2147483648
          %v1910 = vor.u32 1.1754944e-38, %v1909
          %v1911 = vsel %vm1908, %v1910, %v1906
          %v1912 = vmul.f32 1.0, %v1911
          %v1913 = vrcp.pop %v1813
          %v1914 = vmul.f32 %v1813, %v1913
          %v1915 = vsub.f32 1.0, %v1914
          %v1916 = vmul.f32 %v1913, %v1915
          %v1917 = vadd.f32 %v1913, %v1916
          %vm1918 = vweird.f32 %v1813
          %vm1919 = vweird.f32 %v1913
          %vm1920 = vmor %vm1918, %vm1919
          %v1921 = vsel %vm1920, %v1913, %v1917
          %v1922 = vand.u32 2147483647, %v1813
          %vm1923 = vcmp.eq.f32.partialorder %v1922, 8.507059e+37
          %v1924 = vand.u32 %v1813, 2147483648
          %v1925 = vor.u32 1.1754944e-38, %v1924
          %v1926 = vsel %vm1923, %v1925, %v1921
          %v1927 = vmul.f32 1.0, %v1926
          %v1928 = vrcp.pop %v1814
          %v1929 = vmul.f32 %v1814, %v1928
          %v1930 = vsub.f32 1.0, %v1929
          %v1931 = vmul.f32 %v1928, %v1930
          %v1932 = vadd.f32 %v1928, %v1931
          %vm1933 = vweird.f32 %v1814
          %vm1934 = vweird.f32 %v1928
          %vm1935 = vmor %vm1933, %vm1934
          %v1936 = vsel %vm1935, %v1928, %v1932
          %v1937 = vand.u32 2147483647, %v1814
          %vm1938 = vcmp.eq.f32.partialorder %v1937, 8.507059e+37
          %v1939 = vand.u32 %v1814, 2147483648
          %v1940 = vor.u32 1.1754944e-38, %v1939
          %v1941 = vsel %vm1938, %v1940, %v1936
          %v1942 = vmul.f32 1.0, %v1941
          %v1943 = vrcp.pop %v1815
          %v1944 = vmul.f32 %v1815, %v1943
          %v1945 = vsub.f32 1.0, %v1944
          %v1946 = vmul.f32 %v1943, %v1945
          %v1947 = vadd.f32 %v1943, %v1946
          %vm1948 = vweird.f32 %v1815
          %vm1949 = vweird.f32 %v1943
          %vm1950 = vmor %vm1948, %vm1949
          %v1951 = vsel %vm1950, %v1943, %v1947
          %v1952 = vand.u32 2147483647, %v1815
          %vm1953 = vcmp.eq.f32.partialorder %v1952, 8.507059e+37
          %v1954 = vand.u32 %v1815, 2147483648
          %v1955 = vor.u32 1.1754944e-38, %v1954
          %v1956 = vsel %vm1953, %v1955, %v1951
          %v1957 = vmul.f32 1.0, %v1956
          %v1958 = vrcp.pop %v1816
          %v1959 = vmul.f32 %v1816, %v1958
          %v1960 = vsub.f32 1.0, %v1959
          %v1961 = vmul.f32 %v1958, %v1960
          %v1962 = vadd.f32 %v1958, %v1961
          %vm1963 = vweird.f32 %v1816
          %vm1964 = vweird.f32 %v1958
          %vm1965 = vmor %vm1963, %vm1964
          %v1966 = vsel %vm1965, %v1958, %v1962
          %v1967 = vand.u32 2147483647, %v1816
          %vm1968 = vcmp.eq.f32.partialorder %v1967, 8.507059e+37
          %v1969 = vand.u32 %v1816, 2147483648
          %v1970 = vor.u32 1.1754944e-38, %v1969
          %v1971 = vsel %vm1968, %v1970, %v1966
          %v1972 = vmul.f32 1.0, %v1971
          %v1973 = vrcp.pop %v1817
          %v1974 = vmul.f32 %v1817, %v1973
          %v1975 = vsub.f32 1.0, %v1974
          %v1976 = vmul.f32 %v1973, %v1975
          %v1977 = vadd.f32 %v1973, %v1976
          %vm1978 = vweird.f32 %v1817
          %vm1979 = vweird.f32 %v1973
          %vm1980 = vmor %vm1978, %vm1979
          %v1981 = vsel %vm1980, %v1973, %v1977
          %v1982 = vand.u32 2147483647, %v1817
          %vm1983 = vcmp.eq.f32.partialorder %v1982, 8.507059e+37
          %v1984 = vand.u32 %v1817, 2147483648
          %v1985 = vor.u32 1.1754944e-38, %v1984
          %v1986 = vsel %vm1983, %v1985, %v1981
          %v1987 = vmul.f32 1.0, %v1986
          %v1988 = vrcp.pop %v1818
          %v1989 = vmul.f32 %v1818, %v1988
          %v1990 = vsub.f32 1.0, %v1989
          %v1991 = vmul.f32 %v1988, %v1990
          %v1992 = vadd.f32 %v1988, %v1991
          %vm1993 = vweird.f32 %v1818
          %vm1994 = vweird.f32 %v1988
          %vm1995 = vmor %vm1993, %vm1994
          %v1996 = vsel %vm1995, %v1988, %v1992
          %v1997 = vand.u32 2147483647, %v1818
          %vm1998 = vcmp.eq.f32.partialorder %v1997, 8.507059e+37
          %v1999 = vand.u32 %v1818, 2147483648
          %v2000 = vor.u32 1.1754944e-38, %v1999
          %v2001 = vsel %vm1998, %v2000, %v1996
          %v2002 = vmul.f32 1.0, %v2001
          %v2003 = vrcp.pop %v1819
          %v2004 = vmul.f32 %v1819, %v2003
          %v2005 = vsub.f32 1.0, %v2004
          %v2006 = vmul.f32 %v2003, %v2005
          %v2007 = vadd.f32 %v2003, %v2006
          %vm2008 = vweird.f32 %v1819
          %vm2009 = vweird.f32 %v2003
          %vm2010 = vmor %vm2008, %vm2009
          %v2011 = vsel %vm2010, %v2003, %v2007
          %v2012 = vand.u32 2147483647, %v1819
          %vm2013 = vcmp.eq.f32.partialorder %v2012, 8.507059e+37
          %v2014 = vand.u32 %v1819, 2147483648
          %v2015 = vor.u32 1.1754944e-38, %v2014
          %v2016 = vsel %vm2013, %v2015, %v2011
          %v2017 = vmul.f32 1.0, %v2016
          %v2018 = vrcp.pop %v1820
          %v2019 = vmul.f32 %v1820, %v2018
          %v2020 = vsub.f32 1.0, %v2019
          %v2021 = vmul.f32 %v2018, %v2020
          %v2022 = vadd.f32 %v2018, %v2021
          %vm2023 = vweird.f32 %v1820
          %vm2024 = vweird.f32 %v2018
          %vm2025 = vmor %vm2023, %vm2024
          %v2026 = vsel %vm2025, %v2018, %v2022
          %v2027 = vand.u32 2147483647, %v1820
          %vm2028 = vcmp.eq.f32.partialorder %v2027, 8.507059e+37
          %v2029 = vand.u32 %v1820, 2147483648
          %v2030 = vor.u32 1.1754944e-38, %v2029
          %v2031 = vsel %vm2028, %v2030, %v2026
          %v2032 = vmul.f32 1.0, %v2031
          %v2033 = vrcp.pop %v1821
          %v2034 = vmul.f32 %v1821, %v2033
          %v2035 = vsub.f32 1.0, %v2034
          %v2036 = vmul.f32 %v2033, %v2035
          %v2037 = vadd.f32 %v2033, %v2036
          %vm2038 = vweird.f32 %v1821
          %vm2039 = vweird.f32 %v2033
          %vm2040 = vmor %vm2038, %vm2039
          %v2041 = vsel %vm2040, %v2033, %v2037
          %v2042 = vand.u32 2147483647, %v1821
          %vm2043 = vcmp.eq.f32.partialorder %v2042, 8.507059e+37
          %v2044 = vand.u32 %v1821, 2147483648
          %v2045 = vor.u32 1.1754944e-38, %v2044
          %v2046 = vsel %vm2043, %v2045, %v2041
          %v2047 = vmul.f32 1.0, %v2046
          %v2048 = vrcp.pop %v1822
          %v2049 = vmul.f32 %v1822, %v2048
          %v2050 = vsub.f32 1.0, %v2049
          %v2051 = vmul.f32 %v2048, %v2050
          %v2052 = vadd.f32 %v2048, %v2051
          %vm2053 = vweird.f32 %v1822
          %vm2054 = vweird.f32 %v2048
          %vm2055 = vmor %vm2053, %vm2054
          %v2056 = vsel %vm2055, %v2048, %v2052
          %v2057 = vand.u32 2147483647, %v1822
          %vm2058 = vcmp.eq.f32.partialorder %v2057, 8.507059e+37
          %v2059 = vand.u32 %v1822, 2147483648
          %v2060 = vor.u32 1.1754944e-38, %v2059
          %v2061 = vsel %vm2058, %v2060, %v2056
          %v2062 = vmul.f32 1.0, %v2061
          %v2063 = vmul.f32 %v1720, %v1837
          %v2064 = vmul.f32 %v1722, %v1852
          %v2065 = vmul.f32 %v1725, %v1867
          %v2066 = vmul.f32 %v1727, %v1882
          %v2067 = vmul.f32 %v1730, %v1897
          %v2068 = vmul.f32 %v1732, %v1912
          %v2069 = vmul.f32 %v1735, %v1927
          %v2070 = vmul.f32 %v1737, %v1942
          %v2071 = vmul.f32 %v1740, %v1957
          %v2072 = vmul.f32 %v1742, %v1972
          %v2073 = vmul.f32 %v1745, %v1987
          %v2074 = vmul.f32 %v1747, %v2002
          %v2075 = vmul.f32 %v1750, %v2017
          %v2076 = vmul.f32 %v1752, %v2032
          %v2077 = vmul.f32 %v1755, %v2047
          %v2078 = vmul.f32 %v1757, %v2062
          %v2079 = vpack.c.bf16 %v2064, %v2063
          %v2080 = vpack.c.bf16 %v2066, %v2065
          %v2081 = vpack.c.bf16 %v2068, %v2067
          %v2082 = vpack.c.bf16 %v2070, %v2069
          %v2083 = vpack.c.bf16 %v2072, %v2071
          %v2084 = vpack.c.bf16 %v2074, %v2073
          %v2085 = vpack.c.bf16 %v2076, %v2075
          %v2086 = vpack.c.bf16 %v2078, %v2077
          %s2087 = scalar_lea.vmem [#allocation13], 64
          %v2088 = vld [vmem:[%s2087] sm:$0xf]
          %v2089 = vld [vmem:[%s2087 + $0x4] sm:$0xf]
          %v2090 = vld [vmem:[%s2087 + $0x8] sm:$0xf]
          %v2091 = vld [vmem:[%s2087 + $0xc] sm:$0xf]
          %v2092 = vld [vmem:[%s2087 + $0x10] sm:$0xf]
          %v2093 = vld [vmem:[%s2087 + $0x14] sm:$0xf]
          %v2094 = vld [vmem:[%s2087 + $0x18] sm:$0xf]
          %v2095 = vld [vmem:[%s2087 + $0x1c] sm:$0xf]
          %v2096 = vld [vmem:[%s2087 + $0x20] sm:$0xf]
          %v2097 = vld [vmem:[%s2087 + $0x24] sm:$0xf]
          %v2098 = vld [vmem:[%s2087 + $0x28] sm:$0xf]
          %v2099 = vld [vmem:[%s2087 + $0x2c] sm:$0xf]
          %v2100 = vld [vmem:[%s2087 + $0x30] sm:$0xf]
          %v2101 = vld [vmem:[%s2087 + $0x34] sm:$0xf]
          %v2102 = vld [vmem:[%s2087 + $0x38] sm:$0xf]
          %v2103 = vld [vmem:[%s2087 + $0x3c] sm:$0xf]
          %v2120 = vunpack.c.l.b16 %v2088
          %v2121 = vunpack.c.l.b16 %v2089
          %v2122 = vunpack.c.l.b16 %v2090
          %v2123 = vunpack.c.l.b16 %v2091
          %v2124 = vunpack.c.l.b16 %v2092
          %v2125 = vunpack.c.l.b16 %v2093
          %v2126 = vunpack.c.l.b16 %v2094
          %v2127 = vunpack.c.l.b16 %v2095
          %v2128 = vunpack.c.l.b16 %v2096
          %v2129 = vunpack.c.l.b16 %v2097
          %v2130 = vunpack.c.l.b16 %v2098
          %v2131 = vunpack.c.l.b16 %v2099
          %v2132 = vunpack.c.l.b16 %v2100
          %v2133 = vunpack.c.l.b16 %v2101
          %v2134 = vunpack.c.l.b16 %v2102
          %v2135 = vunpack.c.l.b16 %v2103
          %v2136 = vpack.c.b16 %v2121, %v2120
          %v2137 = vpack.c.b16 %v2123, %v2122
          %v2138 = vpack.c.b16 %v2125, %v2124
          %v2139 = vpack.c.b16 %v2127, %v2126
          %v2140 = vpack.c.b16 %v2129, %v2128
          %v2141 = vpack.c.b16 %v2131, %v2130
          %v2142 = vpack.c.b16 %v2133, %v2132
          %v2143 = vpack.c.b16 %v2135, %v2134
          %2152 = vmatpush.bf16.msra.mxu0 %v2143
          %2153 = vmatpush.bf16.msra.mxu0 %v2142
          %2154 = vmatpush.bf16.msra.mxu0 %v2141
          %2155 = vmatpush.bf16.msra.mxu0 %v2140
          %2156 = vmatpush.bf16.msra.mxu0 %v2139
          %2157 = vmatpush.bf16.msra.mxu0 %v2138
          %2158 = vmatpush.bf16.msra.mxu0 %v2137
          %2159 = vmatpush.bf16.msra.mxu0 %v2136
          %2160 = vmatmul.bf16.gmra.mxu0 %v2079
          %v2161 = vpop.f32.mrf.mxu0
          %v2162 = vadd.f32 0.0, %v2161
          %v2163 = vpop.f32.mrf.mxu0
          %v2164 = vadd.f32 0.0, %v2163
          %2165 = vmatmul.bf16.gmra.mxu0 %v2080
          %v2166 = vpop.f32.mrf.mxu0
          %v2167 = vadd.f32 0.0, %v2166
          %v2168 = vpop.f32.mrf.mxu0
          %v2169 = vadd.f32 0.0, %v2168
          %2170 = vmatmul.bf16.gmra.mxu0 %v2081
          %v2171 = vpop.f32.mrf.mxu0
          %v2172 = vadd.f32 0.0, %v2171
          %v2173 = vpop.f32.mrf.mxu0
          %v2174 = vadd.f32 0.0, %v2173
          %2175 = vmatmul.bf16.gmra.mxu0 %v2082
          %v2176 = vpop.f32.mrf.mxu0
          %v2177 = vadd.f32 0.0, %v2176
          %v2178 = vpop.f32.mrf.mxu0
          %v2179 = vadd.f32 0.0, %v2178
          %2180 = vmatmul.bf16.gmra.mxu0 %v2083
          %v2181 = vpop.f32.mrf.mxu0
          %v2182 = vadd.f32 0.0, %v2181
          %v2183 = vpop.f32.mrf.mxu0
          %v2184 = vadd.f32 0.0, %v2183
          %2185 = vmatmul.bf16.gmra.mxu0 %v2084
          %v2186 = vpop.f32.mrf.mxu0
          %v2187 = vadd.f32 0.0, %v2186
          %v2188 = vpop.f32.mrf.mxu0
          %v2189 = vadd.f32 0.0, %v2188
          %2190 = vmatmul.bf16.gmra.mxu0 %v2085
          %v2191 = vpop.f32.mrf.mxu0
          %v2192 = vadd.f32 0.0, %v2191
          %v2193 = vpop.f32.mrf.mxu0
          %v2194 = vadd.f32 0.0, %v2193
          %2195 = vmatmul.bf16.gmra.mxu0 %v2086
          %v2196 = vpop.f32.mrf.mxu0
          %v2197 = vadd.f32 0.0, %v2196
          %v2198 = vpop.f32.mrf.mxu0
          %v2199 = vadd.f32 0.0, %v2198
          %2200 = vdwg.mxu0
          %v2201 = vxor.u32 %v2162, 2147483648
          %v2202 = vxor.u32 %v2164, 2147483648
          %v2203 = vxor.u32 %v2167, 2147483648
          %v2204 = vxor.u32 %v2169, 2147483648
          %v2205 = vxor.u32 %v2172, 2147483648
          %v2206 = vxor.u32 %v2174, 2147483648
          %v2207 = vxor.u32 %v2177, 2147483648
          %v2208 = vxor.u32 %v2179, 2147483648
          %v2209 = vxor.u32 %v2182, 2147483648
          %v2210 = vxor.u32 %v2184, 2147483648
          %v2211 = vxor.u32 %v2187, 2147483648
          %v2212 = vxor.u32 %v2189, 2147483648
          %v2213 = vxor.u32 %v2192, 2147483648
          %v2214 = vxor.u32 %v2194, 2147483648
          %v2215 = vxor.u32 %v2197, 2147483648
          %v2216 = vxor.u32 %v2199, 2147483648
          %v2217 = vmul.f32 %v2201, 1.442695
          %v2218 = vpow.pop %v2217
          %v2219 = vmul.f32 %v2202, 1.442695
          %v2220 = vpow.pop %v2219
          %v2221 = vmul.f32 %v2203, 1.442695
          %v2222 = vpow.pop %v2221
          %v2223 = vmul.f32 %v2204, 1.442695
          %v2224 = vpow.pop %v2223
          %v2225 = vmul.f32 %v2205, 1.442695
          %v2226 = vpow.pop %v2225
          %v2227 = vmul.f32 %v2206, 1.442695
          %v2228 = vpow.pop %v2227
          %v2229 = vmul.f32 %v2207, 1.442695
          %v2230 = vpow.pop %v2229
          %v2231 = vmul.f32 %v2208, 1.442695
          %v2232 = vpow.pop %v2231
          %v2233 = vmul.f32 %v2209, 1.442695
          %v2234 = vpow.pop %v2233
          %v2235 = vmul.f32 %v2210, 1.442695
          %v2236 = vpow.pop %v2235
          %v2237 = vmul.f32 %v2211, 1.442695
          %v2238 = vpow.pop %v2237
          %v2239 = vmul.f32 %v2212, 1.442695
          %v2240 = vpow.pop %v2239
          %v2241 = vmul.f32 %v2213, 1.442695
          %v2242 = vpow.pop %v2241
          %v2243 = vmul.f32 %v2214, 1.442695
          %v2244 = vpow.pop %v2243
          %v2245 = vmul.f32 %v2215, 1.442695
          %v2246 = vpow.pop %v2245
          %v2247 = vmul.f32 %v2216, 1.442695
          %v2248 = vpow.pop %v2247
          %v2249 = vadd.f32 %v2218, 1.0
          %v2250 = vadd.f32 %v2220, 1.0
          %v2251 = vadd.f32 %v2222, 1.0
          %v2252 = vadd.f32 %v2224, 1.0
          %v2253 = vadd.f32 %v2226, 1.0
          %v2254 = vadd.f32 %v2228, 1.0
          %v2255 = vadd.f32 %v2230, 1.0
          %v2256 = vadd.f32 %v2232, 1.0
          %v2257 = vadd.f32 %v2234, 1.0
          %v2258 = vadd.f32 %v2236, 1.0
          %v2259 = vadd.f32 %v2238, 1.0
          %v2260 = vadd.f32 %v2240, 1.0
          %v2261 = vadd.f32 %v2242, 1.0
          %v2262 = vadd.f32 %v2244, 1.0
          %v2263 = vadd.f32 %v2246, 1.0
          %v2264 = vadd.f32 %v2248, 1.0
          %v2265 = vrcp.pop %v2249
          %v2266 = vmul.f32 %v2249, %v2265
          %v2267 = vsub.f32 1.0, %v2266
          %v2268 = vmul.f32 %v2265, %v2267
          %v2269 = vadd.f32 %v2265, %v2268
          %vm2270 = vweird.f32 %v2249
          %vm2271 = vweird.f32 %v2265
          %vm2272 = vmor %vm2270, %vm2271
          %v2273 = vsel %vm2272, %v2265, %v2269
          %v2274 = vand.u32 2147483647, %v2249
          %vm2275 = vcmp.eq.f32.partialorder %v2274, 8.507059e+37
          %v2276 = vand.u32 %v2249, 2147483648
          %v2277 = vor.u32 1.1754944e-38, %v2276
          %v2278 = vsel %vm2275, %v2277, %v2273
          %v2279 = vmul.f32 1.0, %v2278
          %v2280 = vrcp.pop %v2250
          %v2281 = vmul.f32 %v2250, %v2280
          %v2282 = vsub.f32 1.0, %v2281
          %v2283 = vmul.f32 %v2280, %v2282
          %v2284 = vadd.f32 %v2280, %v2283
          %vm2285 = vweird.f32 %v2250
          %vm2286 = vweird.f32 %v2280
          %vm2287 = vmor %vm2285, %vm2286
          %v2288 = vsel %vm2287, %v2280, %v2284
          %v2289 = vand.u32 2147483647, %v2250
          %vm2290 = vcmp.eq.f32.partialorder %v2289, 8.507059e+37
          %v2291 = vand.u32 %v2250, 2147483648
          %v2292 = vor.u32 1.1754944e-38, %v2291
          %v2293 = vsel %vm2290, %v2292, %v2288
          %v2294 = vmul.f32 1.0, %v2293
          %v2295 = vrcp.pop %v2251
          %v2296 = vmul.f32 %v2251, %v2295
          %v2297 = vsub.f32 1.0, %v2296
          %v2298 = vmul.f32 %v2295, %v2297
          %v2299 = vadd.f32 %v2295, %v2298
          %vm2300 = vweird.f32 %v2251
          %vm2301 = vweird.f32 %v2295
          %vm2302 = vmor %vm2300, %vm2301
          %v2303 = vsel %vm2302, %v2295, %v2299
          %v2304 = vand.u32 2147483647, %v2251
          %vm2305 = vcmp.eq.f32.partialorder %v2304, 8.507059e+37
          %v2306 = vand.u32 %v2251, 2147483648
          %v2307 = vor.u32 1.1754944e-38, %v2306
          %v2308 = vsel %vm2305, %v2307, %v2303
          %v2309 = vmul.f32 1.0, %v2308
          %v2310 = vrcp.pop %v2252
          %v2311 = vmul.f32 %v2252, %v2310
          %v2312 = vsub.f32 1.0, %v2311
          %v2313 = vmul.f32 %v2310, %v2312
          %v2314 = vadd.f32 %v2310, %v2313
          %vm2315 = vweird.f32 %v2252
          %vm2316 = vweird.f32 %v2310
          %vm2317 = vmor %vm2315, %vm2316
          %v2318 = vsel %vm2317, %v2310, %v2314
          %v2319 = vand.u32 2147483647, %v2252
          %vm2320 = vcmp.eq.f32.partialorder %v2319, 8.507059e+37
          %v2321 = vand.u32 %v2252, 2147483648
          %v2322 = vor.u32 1.1754944e-38, %v2321
          %v2323 = vsel %vm2320, %v2322, %v2318
          %v2324 = vmul.f32 1.0, %v2323
          %v2325 = vrcp.pop %v2253
          %v2326 = vmul.f32 %v2253, %v2325
          %v2327 = vsub.f32 1.0, %v2326
          %v2328 = vmul.f32 %v2325, %v2327
          %v2329 = vadd.f32 %v2325, %v2328
          %vm2330 = vweird.f32 %v2253
          %vm2331 = vweird.f32 %v2325
          %vm2332 = vmor %vm2330, %vm2331
          %v2333 = vsel %vm2332, %v2325, %v2329
          %v2334 = vand.u32 2147483647, %v2253
          %vm2335 = vcmp.eq.f32.partialorder %v2334, 8.507059e+37
          %v2336 = vand.u32 %v2253, 2147483648
          %v2337 = vor.u32 1.1754944e-38, %v2336
          %v2338 = vsel %vm2335, %v2337, %v2333
          %v2339 = vmul.f32 1.0, %v2338
          %v2340 = vrcp.pop %v2254
          %v2341 = vmul.f32 %v2254, %v2340
          %v2342 = vsub.f32 1.0, %v2341
          %v2343 = vmul.f32 %v2340, %v2342
          %v2344 = vadd.f32 %v2340, %v2343
          %vm2345 = vweird.f32 %v2254
          %vm2346 = vweird.f32 %v2340
          %vm2347 = vmor %vm2345, %vm2346
          %v2348 = vsel %vm2347, %v2340, %v2344
          %v2349 = vand.u32 2147483647, %v2254
          %vm2350 = vcmp.eq.f32.partialorder %v2349, 8.507059e+37
          %v2351 = vand.u32 %v2254, 2147483648
          %v2352 = vor.u32 1.1754944e-38, %v2351
          %v2353 = vsel %vm2350, %v2352, %v2348
          %v2354 = vmul.f32 1.0, %v2353
          %v2355 = vrcp.pop %v2255
          %v2356 = vmul.f32 %v2255, %v2355
          %v2357 = vsub.f32 1.0, %v2356
          %v2358 = vmul.f32 %v2355, %v2357
          %v2359 = vadd.f32 %v2355, %v2358
          %vm2360 = vweird.f32 %v2255
          %vm2361 = vweird.f32 %v2355
          %vm2362 = vmor %vm2360, %vm2361
          %v2363 = vsel %vm2362, %v2355, %v2359
          %v2364 = vand.u32 2147483647, %v2255
          %vm2365 = vcmp.eq.f32.partialorder %v2364, 8.507059e+37
          %v2366 = vand.u32 %v2255, 2147483648
          %v2367 = vor.u32 1.1754944e-38, %v2366
          %v2368 = vsel %vm2365, %v2367, %v2363
          %v2369 = vmul.f32 1.0, %v2368
          %v2370 = vrcp.pop %v2256
          %v2371 = vmul.f32 %v2256, %v2370
          %v2372 = vsub.f32 1.0, %v2371
          %v2373 = vmul.f32 %v2370, %v2372
          %v2374 = vadd.f32 %v2370, %v2373
          %vm2375 = vweird.f32 %v2256
          %vm2376 = vweird.f32 %v2370
          %vm2377 = vmor %vm2375, %vm2376
          %v2378 = vsel %vm2377, %v2370, %v2374
          %v2379 = vand.u32 2147483647, %v2256
          %vm2380 = vcmp.eq.f32.partialorder %v2379, 8.507059e+37
          %v2381 = vand.u32 %v2256, 2147483648
          %v2382 = vor.u32 1.1754944e-38, %v2381
          %v2383 = vsel %vm2380, %v2382, %v2378
          %v2384 = vmul.f32 1.0, %v2383
          %v2385 = vrcp.pop %v2257
          %v2386 = vmul.f32 %v2257, %v2385
          %v2387 = vsub.f32 1.0, %v2386
          %v2388 = vmul.f32 %v2385, %v2387
          %v2389 = vadd.f32 %v2385, %v2388
          %vm2390 = vweird.f32 %v2257
          %vm2391 = vweird.f32 %v2385
          %vm2392 = vmor %vm2390, %vm2391
          %v2393 = vsel %vm2392, %v2385, %v2389
          %v2394 = vand.u32 2147483647, %v2257
          %vm2395 = vcmp.eq.f32.partialorder %v2394, 8.507059e+37
          %v2396 = vand.u32 %v2257, 2147483648
          %v2397 = vor.u32 1.1754944e-38, %v2396
          %v2398 = vsel %vm2395, %v2397, %v2393
          %v2399 = vmul.f32 1.0, %v2398
          %v2400 = vrcp.pop %v2258
          %v2401 = vmul.f32 %v2258, %v2400
          %v2402 = vsub.f32 1.0, %v2401
          %v2403 = vmul.f32 %v2400, %v2402
          %v2404 = vadd.f32 %v2400, %v2403
          %vm2405 = vweird.f32 %v2258
          %vm2406 = vweird.f32 %v2400
          %vm2407 = vmor %vm2405, %vm2406
          %v2408 = vsel %vm2407, %v2400, %v2404
          %v2409 = vand.u32 2147483647, %v2258
          %vm2410 = vcmp.eq.f32.partialorder %v2409, 8.507059e+37
          %v2411 = vand.u32 %v2258, 2147483648
          %v2412 = vor.u32 1.1754944e-38, %v2411
          %v2413 = vsel %vm2410, %v2412, %v2408
          %v2414 = vmul.f32 1.0, %v2413
          %v2415 = vrcp.pop %v2259
          %v2416 = vmul.f32 %v2259, %v2415
          %v2417 = vsub.f32 1.0, %v2416
          %v2418 = vmul.f32 %v2415, %v2417
          %v2419 = vadd.f32 %v2415, %v2418
          %vm2420 = vweird.f32 %v2259
          %vm2421 = vweird.f32 %v2415
          %vm2422 = vmor %vm2420, %vm2421
          %v2423 = vsel %vm2422, %v2415, %v2419
          %v2424 = vand.u32 2147483647, %v2259
          %vm2425 = vcmp.eq.f32.partialorder %v2424, 8.507059e+37
          %v2426 = vand.u32 %v2259, 2147483648
          %v2427 = vor.u32 1.1754944e-38, %v2426
          %v2428 = vsel %vm2425, %v2427, %v2423
          %v2429 = vmul.f32 1.0, %v2428
          %v2430 = vrcp.pop %v2260
          %v2431 = vmul.f32 %v2260, %v2430
          %v2432 = vsub.f32 1.0, %v2431
          %v2433 = vmul.f32 %v2430, %v2432
          %v2434 = vadd.f32 %v2430, %v2433
          %vm2435 = vweird.f32 %v2260
          %vm2436 = vweird.f32 %v2430
          %vm2437 = vmor %vm2435, %vm2436
          %v2438 = vsel %vm2437, %v2430, %v2434
          %v2439 = vand.u32 2147483647, %v2260
          %vm2440 = vcmp.eq.f32.partialorder %v2439, 8.507059e+37
          %v2441 = vand.u32 %v2260, 2147483648
          %v2442 = vor.u32 1.1754944e-38, %v2441
          %v2443 = vsel %vm2440, %v2442, %v2438
          %v2444 = vmul.f32 1.0, %v2443
          %v2445 = vrcp.pop %v2261
          %v2446 = vmul.f32 %v2261, %v2445
          %v2447 = vsub.f32 1.0, %v2446
          %v2448 = vmul.f32 %v2445, %v2447
          %v2449 = vadd.f32 %v2445, %v2448
          %vm2450 = vweird.f32 %v2261
          %vm2451 = vweird.f32 %v2445
          %vm2452 = vmor %vm2450, %vm2451
          %v2453 = vsel %vm2452, %v2445, %v2449
          %v2454 = vand.u32 2147483647, %v2261
          %vm2455 = vcmp.eq.f32.partialorder %v2454, 8.507059e+37
          %v2456 = vand.u32 %v2261, 2147483648
          %v2457 = vor.u32 1.1754944e-38, %v2456
          %v2458 = vsel %vm2455, %v2457, %v2453
          %v2459 = vmul.f32 1.0, %v2458
          %v2460 = vrcp.pop %v2262
          %v2461 = vmul.f32 %v2262, %v2460
          %v2462 = vsub.f32 1.0, %v2461
          %v2463 = vmul.f32 %v2460, %v2462
          %v2464 = vadd.f32 %v2460, %v2463
          %vm2465 = vweird.f32 %v2262
          %vm2466 = vweird.f32 %v2460
          %vm2467 = vmor %vm2465, %vm2466
          %v2468 = vsel %vm2467, %v2460, %v2464
          %v2469 = vand.u32 2147483647, %v2262
          %vm2470 = vcmp.eq.f32.partialorder %v2469, 8.507059e+37
          %v2471 = vand.u32 %v2262, 2147483648
          %v2472 = vor.u32 1.1754944e-38, %v2471
          %v2473 = vsel %vm2470, %v2472, %v2468
          %v2474 = vmul.f32 1.0, %v2473
          %v2475 = vrcp.pop %v2263
          %v2476 = vmul.f32 %v2263, %v2475
          %v2477 = vsub.f32 1.0, %v2476
          %v2478 = vmul.f32 %v2475, %v2477
          %v2479 = vadd.f32 %v2475, %v2478
          %vm2480 = vweird.f32 %v2263
          %vm2481 = vweird.f32 %v2475
          %vm2482 = vmor %vm2480, %vm2481
          %v2483 = vsel %vm2482, %v2475, %v2479
          %v2484 = vand.u32 2147483647, %v2263
          %vm2485 = vcmp.eq.f32.partialorder %v2484, 8.507059e+37
          %v2486 = vand.u32 %v2263, 2147483648
          %v2487 = vor.u32 1.1754944e-38, %v2486
          %v2488 = vsel %vm2485, %v2487, %v2483
          %v2489 = vmul.f32 1.0, %v2488
          %v2490 = vrcp.pop %v2264
          %v2491 = vmul.f32 %v2264, %v2490
          %v2492 = vsub.f32 1.0, %v2491
          %v2493 = vmul.f32 %v2490, %v2492
          %v2494 = vadd.f32 %v2490, %v2493
          %vm2495 = vweird.f32 %v2264
          %vm2496 = vweird.f32 %v2490
          %vm2497 = vmor %vm2495, %vm2496
          %v2498 = vsel %vm2497, %v2490, %v2494
          %v2499 = vand.u32 2147483647, %v2264
          %vm2500 = vcmp.eq.f32.partialorder %v2499, 8.507059e+37
          %v2501 = vand.u32 %v2264, 2147483648
          %v2502 = vor.u32 1.1754944e-38, %v2501
          %v2503 = vsel %vm2500, %v2502, %v2498
          %v2504 = vmul.f32 1.0, %v2503
          %v2505 = vmul.f32 %v2162, %v2279
          %v2506 = vmul.f32 %v2164, %v2294
          %v2507 = vmul.f32 %v2167, %v2309
          %v2508 = vmul.f32 %v2169, %v2324
          %v2509 = vmul.f32 %v2172, %v2339
          %v2510 = vmul.f32 %v2174, %v2354
          %v2511 = vmul.f32 %v2177, %v2369
          %v2512 = vmul.f32 %v2179, %v2384
          %v2513 = vmul.f32 %v2182, %v2399
          %v2514 = vmul.f32 %v2184, %v2414
          %v2515 = vmul.f32 %v2187, %v2429
          %v2516 = vmul.f32 %v2189, %v2444
          %v2517 = vmul.f32 %v2192, %v2459
          %v2518 = vmul.f32 %v2194, %v2474
          %v2519 = vmul.f32 %v2197, %v2489
          %v2520 = vmul.f32 %v2199, %v2504
          %v2521 = vadd.f32 %v1622, %v2505
          %v2522 = vadd.f32 %v1623, %v2506
          %v2523 = vadd.f32 %v1624, %v2507
          %v2524 = vadd.f32 %v1625, %v2508
          %v2525 = vadd.f32 %v1626, %v2509
          %v2526 = vadd.f32 %v1627, %v2510
          %v2527 = vadd.f32 %v1628, %v2511
          %v2528 = vadd.f32 %v1629, %v2512
          %v2529 = vadd.f32 %v1630, %v2513
          %v2530 = vadd.f32 %v1631, %v2514
          %v2531 = vadd.f32 %v1632, %v2515
          %v2532 = vadd.f32 %v1633, %v2516
          %v2533 = vadd.f32 %v1634, %v2517
          %v2534 = vadd.f32 %v1635, %v2518
          %v2535 = vadd.f32 %v1636, %v2519
          %v2536 = vadd.f32 %v1637, %v2520
          %v2537 = vmul.f32 %v2521, 0.70710677
          %v2538 = vmul.f32 %v2522, 0.70710677
          %v2539 = vmul.f32 %v2523, 0.70710677
          %v2540 = vmul.f32 %v2524, 0.70710677
          %v2541 = vmul.f32 %v2525, 0.70710677
          %v2542 = vmul.f32 %v2526, 0.70710677
          %v2543 = vmul.f32 %v2527, 0.70710677
          %v2544 = vmul.f32 %v2528, 0.70710677
          %v2545 = vmul.f32 %v2529, 0.70710677
          %v2546 = vmul.f32 %v2530, 0.70710677
          %v2547 = vmul.f32 %v2531, 0.70710677
          %v2548 = vmul.f32 %v2532, 0.70710677
          %v2549 = vmul.f32 %v2533, 0.70710677
          %v2550 = vmul.f32 %v2534, 0.70710677
          %v2551 = vmul.f32 %v2535, 0.70710677
          %v2552 = vmul.f32 %v2536, 0.70710677
          %v2553 = vpack.c.bf16 %v2538, %v2537
          %v2554 = vpack.c.bf16 %v2540, %v2539
          %v2555 = vpack.c.bf16 %v2542, %v2541
          %v2556 = vpack.c.bf16 %v2544, %v2543
          %v2557 = vpack.c.bf16 %v2546, %v2545
          %v2558 = vpack.c.bf16 %v2548, %v2547
          %v2559 = vpack.c.bf16 %v2550, %v2549
          %v2560 = vpack.c.bf16 %v2552, %v2551
          %s2561 = scalar_lea.vmem [#allocation13], 128
          %v2562 = vld [vmem:[%s2561] sm:$0xf]
          %v2563 = vld [vmem:[%s2561 + $0x4] sm:$0xf]
          %v2564 = vld [vmem:[%s2561 + $0x8] sm:$0xf]
          %v2565 = vld [vmem:[%s2561 + $0xc] sm:$0xf]
          %v2566 = vld [vmem:[%s2561 + $0x10] sm:$0xf]
          %v2567 = vld [vmem:[%s2561 + $0x14] sm:$0xf]
          %v2568 = vld [vmem:[%s2561 + $0x18] sm:$0xf]
          %v2569 = vld [vmem:[%s2561 + $0x1c] sm:$0xf]
          %v2570 = vld [vmem:[%s2561 + $0x20] sm:$0xf]
          %v2571 = vld [vmem:[%s2561 + $0x24] sm:$0xf]
          %v2572 = vld [vmem:[%s2561 + $0x28] sm:$0xf]
          %v2573 = vld [vmem:[%s2561 + $0x2c] sm:$0xf]
          %v2574 = vld [vmem:[%s2561 + $0x30] sm:$0xf]
          %v2575 = vld [vmem:[%s2561 + $0x34] sm:$0xf]
          %v2576 = vld [vmem:[%s2561 + $0x38] sm:$0xf]
          %v2577 = vld [vmem:[%s2561 + $0x3c] sm:$0xf]
          %v2594 = vunpack.c.l.b16 %v2562
          %v2595 = vunpack.c.l.b16 %v2563
          %v2596 = vunpack.c.l.b16 %v2564
          %v2597 = vunpack.c.l.b16 %v2565
          %v2598 = vunpack.c.l.b16 %v2566
          %v2599 = vunpack.c.l.b16 %v2567
          %v2600 = vunpack.c.l.b16 %v2568
          %v2601 = vunpack.c.l.b16 %v2569
          %v2602 = vunpack.c.l.b16 %v2570
          %v2603 = vunpack.c.l.b16 %v2571
          %v2604 = vunpack.c.l.b16 %v2572
          %v2605 = vunpack.c.l.b16 %v2573
          %v2606 = vunpack.c.l.b16 %v2574
          %v2607 = vunpack.c.l.b16 %v2575
          %v2608 = vunpack.c.l.b16 %v2576
          %v2609 = vunpack.c.l.b16 %v2577
          %v2610 = vpack.c.b16 %v2595, %v2594
          %v2611 = vpack.c.b16 %v2597, %v2596
          %v2612 = vpack.c.b16 %v2599, %v2598
          %v2613 = vpack.c.b16 %v2601, %v2600
          %v2614 = vpack.c.b16 %v2603, %v2602
          %v2615 = vpack.c.b16 %v2605, %v2604
          %v2616 = vpack.c.b16 %v2607, %v2606
          %v2617 = vpack.c.b16 %v2609, %v2608
          %2626 = vmatpush.bf16.msra.mxu0 %v2617
          %2627 = vmatpush.bf16.msra.mxu0 %v2616
          %2628 = vmatpush.bf16.msra.mxu0 %v2615
          %2629 = vmatpush.bf16.msra.mxu0 %v2614
          %2630 = vmatpush.bf16.msra.mxu0 %v2613
          %2631 = vmatpush.bf16.msra.mxu0 %v2612
          %2632 = vmatpush.bf16.msra.mxu0 %v2611
          %2633 = vmatpush.bf16.msra.mxu0 %v2610
          %2634 = vmatmul.bf16.gmra.mxu0 %v2553
          %v2635 = vpop.f32.mrf.mxu0
          %v2636 = vadd.f32 0.0, %v2635
          %v2637 = vpop.f32.mrf.mxu0
          %v2638 = vadd.f32 0.0, %v2637
          %2639 = vmatmul.bf16.gmra.mxu0 %v2554
          %v2640 = vpop.f32.mrf.mxu0
          %v2641 = vadd.f32 0.0, %v2640
          %v2642 = vpop.f32.mrf.mxu0
          %v2643 = vadd.f32 0.0, %v2642
          %2644 = vmatmul.bf16.gmra.mxu0 %v2555
          %v2645 = vpop.f32.mrf.mxu0
          %v2646 = vadd.f32 0.0, %v2645
          %v2647 = vpop.f32.mrf.mxu0
          %v2648 = vadd.f32 0.0, %v2647
          %2649 = vmatmul.bf16.gmra.mxu0 %v2556
          %v2650 = vpop.f32.mrf.mxu0
          %v2651 = vadd.f32 0.0, %v2650
          %v2652 = vpop.f32.mrf.mxu0
          %v2653 = vadd.f32 0.0, %v2652
          %2654 = vmatmul.bf16.gmra.mxu0 %v2557
          %v2655 = vpop.f32.mrf.mxu0
          %v2656 = vadd.f32 0.0, %v2655
          %v2657 = vpop.f32.mrf.mxu0
          %v2658 = vadd.f32 0.0, %v2657
          %2659 = vmatmul.bf16.gmra.mxu0 %v2558
          %v2660 = vpop.f32.mrf.mxu0
          %v2661 = vadd.f32 0.0, %v2660
          %v2662 = vpop.f32.mrf.mxu0
          %v2663 = vadd.f32 0.0, %v2662
          %2664 = vmatmul.bf16.gmra.mxu0 %v2559
          %v2665 = vpop.f32.mrf.mxu0
          %v2666 = vadd.f32 0.0, %v2665
          %v2667 = vpop.f32.mrf.mxu0
          %v2668 = vadd.f32 0.0, %v2667
          %2669 = vmatmul.bf16.gmra.mxu0 %v2560
          %v2670 = vpop.f32.mrf.mxu0
          %v2671 = vadd.f32 0.0, %v2670
          %v2672 = vpop.f32.mrf.mxu0
          %v2673 = vadd.f32 0.0, %v2672
          %2674 = vdwg.mxu0
          %v2675 = vxor.u32 %v2636, 2147483648
          %v2676 = vxor.u32 %v2638, 2147483648
          %v2677 = vxor.u32 %v2641, 2147483648
          %v2678 = vxor.u32 %v2643, 2147483648
          %v2679 = vxor.u32 %v2646, 2147483648
          %v2680 = vxor.u32 %v2648, 2147483648
          %v2681 = vxor.u32 %v2651, 2147483648
          %v2682 = vxor.u32 %v2653, 2147483648
          %v2683 = vxor.u32 %v2656, 2147483648
          %v2684 = vxor.u32 %v2658, 2147483648
          %v2685 = vxor.u32 %v2661, 2147483648
          %v2686 = vxor.u32 %v2663, 2147483648
          %v2687 = vxor.u32 %v2666, 2147483648
          %v2688 = vxor.u32 %v2668, 2147483648
          %v2689 = vxor.u32 %v2671, 2147483648
          %v2690 = vxor.u32 %v2673, 2147483648
          %v2691 = vmul.f32 %v2675, 1.442695
          %v2692 = vpow.pop %v2691
          %v2693 = vmul.f32 %v2676, 1.442695
          %v2694 = vpow.pop %v2693
          %v2695 = vmul.f32 %v2677, 1.442695
          %v2696 = vpow.pop %v2695
          %v2697 = vmul.f32 %v2678, 1.442695
          %v2698 = vpow.pop %v2697
          %v2699 = vmul.f32 %v2679, 1.442695
          %v2700 = vpow.pop %v2699
          %v2701 = vmul.f32 %v2680, 1.442695
          %v2702 = vpow.pop %v2701
          %v2703 = vmul.f32 %v2681, 1.442695
          %v2704 = vpow.pop %v2703
          %v2705 = vmul.f32 %v2682, 1.442695
          %v2706 = vpow.pop %v2705
          %v2707 = vmul.f32 %v2683, 1.442695
          %v2708 = vpow.pop %v2707
          %v2709 = vmul.f32 %v2684, 1.442695
          %v2710 = vpow.pop %v2709
          %v2711 = vmul.f32 %v2685, 1.442695
          %v2712 = vpow.pop %v2711
          %v2713 = vmul.f32 %v2686, 1.442695
          %v2714 = vpow.pop %v2713
          %v2715 = vmul.f32 %v2687, 1.442695
          %v2716 = vpow.pop %v2715
          %v2717 = vmul.f32 %v2688, 1.442695
          %v2718 = vpow.pop %v2717
          %v2719 = vmul.f32 %v2689, 1.442695
          %v2720 = vpow.pop %v2719
          %v2721 = vmul.f32 %v2690, 1.442695
          %v2722 = vpow.pop %v2721
          %v2723 = vadd.f32 %v2692, 1.0
          %v2724 = vadd.f32 %v2694, 1.0
          %v2725 = vadd.f32 %v2696, 1.0
          %v2726 = vadd.f32 %v2698, 1.0
          %v2727 = vadd.f32 %v2700, 1.0
          %v2728 = vadd.f32 %v2702, 1.0
          %v2729 = vadd.f32 %v2704, 1.0
          %v2730 = vadd.f32 %v2706, 1.0
          %v2731 = vadd.f32 %v2708, 1.0
          %v2732 = vadd.f32 %v2710, 1.0
          %v2733 = vadd.f32 %v2712, 1.0
          %v2734 = vadd.f32 %v2714, 1.0
          %v2735 = vadd.f32 %v2716, 1.0
          %v2736 = vadd.f32 %v2718, 1.0
          %v2737 = vadd.f32 %v2720, 1.0
          %v2738 = vadd.f32 %v2722, 1.0
          %v2739 = vrcp.pop %v2723
          %v2740 = vmul.f32 %v2723, %v2739
          %v2741 = vsub.f32 1.0, %v2740
          %v2742 = vmul.f32 %v2739, %v2741
          %v2743 = vadd.f32 %v2739, %v2742
          %vm2744 = vweird.f32 %v2723
          %vm2745 = vweird.f32 %v2739
          %vm2746 = vmor %vm2744, %vm2745
          %v2747 = vsel %vm2746, %v2739, %v2743
          %v2748 = vand.u32 2147483647, %v2723
          %vm2749 = vcmp.eq.f32.partialorder %v2748, 8.507059e+37
          %v2750 = vand.u32 %v2723, 2147483648
          %v2751 = vor.u32 1.1754944e-38, %v2750
          %v2752 = vsel %vm2749, %v2751, %v2747
          %v2753 = vmul.f32 1.0, %v2752
          %v2754 = vrcp.pop %v2724
          %v2755 = vmul.f32 %v2724, %v2754
          %v2756 = vsub.f32 1.0, %v2755
          %v2757 = vmul.f32 %v2754, %v2756
          %v2758 = vadd.f32 %v2754, %v2757
          %vm2759 = vweird.f32 %v2724
          %vm2760 = vweird.f32 %v2754
          %vm2761 = vmor %vm2759, %vm2760
          %v2762 = vsel %vm2761, %v2754, %v2758
          %v2763 = vand.u32 2147483647, %v2724
          %vm2764 = vcmp.eq.f32.partialorder %v2763, 8.507059e+37
          %v2765 = vand.u32 %v2724, 2147483648
          %v2766 = vor.u32 1.1754944e-38, %v2765
          %v2767 = vsel %vm2764, %v2766, %v2762
          %v2768 = vmul.f32 1.0, %v2767
          %v2769 = vrcp.pop %v2725
          %v2770 = vmul.f32 %v2725, %v2769
          %v2771 = vsub.f32 1.0, %v2770
          %v2772 = vmul.f32 %v2769, %v2771
          %v2773 = vadd.f32 %v2769, %v2772
          %vm2774 = vweird.f32 %v2725
          %vm2775 = vweird.f32 %v2769
          %vm2776 = vmor %vm2774, %vm2775
          %v2777 = vsel %vm2776, %v2769, %v2773
          %v2778 = vand.u32 2147483647, %v2725
          %vm2779 = vcmp.eq.f32.partialorder %v2778, 8.507059e+37
          %v2780 = vand.u32 %v2725, 2147483648
          %v2781 = vor.u32 1.1754944e-38, %v2780
          %v2782 = vsel %vm2779, %v2781, %v2777
          %v2783 = vmul.f32 1.0, %v2782
          %v2784 = vrcp.pop %v2726
          %v2785 = vmul.f32 %v2726, %v2784
          %v2786 = vsub.f32 1.0, %v2785
          %v2787 = vmul.f32 %v2784, %v2786
          %v2788 = vadd.f32 %v2784, %v2787
          %vm2789 = vweird.f32 %v2726
          %vm2790 = vweird.f32 %v2784
          %vm2791 = vmor %vm2789, %vm2790
          %v2792 = vsel %vm2791, %v2784, %v2788
          %v2793 = vand.u32 2147483647, %v2726
          %vm2794 = vcmp.eq.f32.partialorder %v2793, 8.507059e+37
          %v2795 = vand.u32 %v2726, 2147483648
          %v2796 = vor.u32 1.1754944e-38, %v2795
          %v2797 = vsel %vm2794, %v2796, %v2792
          %v2798 = vmul.f32 1.0, %v2797
          %v2799 = vrcp.pop %v2727
          %v2800 = vmul.f32 %v2727, %v2799
          %v2801 = vsub.f32 1.0, %v2800
          %v2802 = vmul.f32 %v2799, %v2801
          %v2803 = vadd.f32 %v2799, %v2802
          %vm2804 = vweird.f32 %v2727
          %vm2805 = vweird.f32 %v2799
          %vm2806 = vmor %vm2804, %vm2805
          %v2807 = vsel %vm2806, %v2799, %v2803
          %v2808 = vand.u32 2147483647, %v2727
          %vm2809 = vcmp.eq.f32.partialorder %v2808, 8.507059e+37
          %v2810 = vand.u32 %v2727, 2147483648
          %v2811 = vor.u32 1.1754944e-38, %v2810
          %v2812 = vsel %vm2809, %v2811, %v2807
          %v2813 = vmul.f32 1.0, %v2812
          %v2814 = vrcp.pop %v2728
          %v2815 = vmul.f32 %v2728, %v2814
          %v2816 = vsub.f32 1.0, %v2815
          %v2817 = vmul.f32 %v2814, %v2816
          %v2818 = vadd.f32 %v2814, %v2817
          %vm2819 = vweird.f32 %v2728
          %vm2820 = vweird.f32 %v2814
          %vm2821 = vmor %vm2819, %vm2820
          %v2822 = vsel %vm2821, %v2814, %v2818
          %v2823 = vand.u32 2147483647, %v2728
          %vm2824 = vcmp.eq.f32.partialorder %v2823, 8.507059e+37
          %v2825 = vand.u32 %v2728, 2147483648
          %v2826 = vor.u32 1.1754944e-38, %v2825
          %v2827 = vsel %vm2824, %v2826, %v2822
          %v2828 = vmul.f32 1.0, %v2827
          %v2829 = vrcp.pop %v2729
          %v2830 = vmul.f32 %v2729, %v2829
          %v2831 = vsub.f32 1.0, %v2830
          %v2832 = vmul.f32 %v2829, %v2831
          %v2833 = vadd.f32 %v2829, %v2832
          %vm2834 = vweird.f32 %v2729
          %vm2835 = vweird.f32 %v2829
          %vm2836 = vmor %vm2834, %vm2835
          %v2837 = vsel %vm2836, %v2829, %v2833
          %v2838 = vand.u32 2147483647, %v2729
          %vm2839 = vcmp.eq.f32.partialorder %v2838, 8.507059e+37
          %v2840 = vand.u32 %v2729, 2147483648
          %v2841 = vor.u32 1.1754944e-38, %v2840
          %v2842 = vsel %vm2839, %v2841, %v2837
          %v2843 = vmul.f32 1.0, %v2842
          %v2844 = vrcp.pop %v2730
          %v2845 = vmul.f32 %v2730, %v2844
          %v2846 = vsub.f32 1.0, %v2845
          %v2847 = vmul.f32 %v2844, %v2846
          %v2848 = vadd.f32 %v2844, %v2847
          %vm2849 = vweird.f32 %v2730
          %vm2850 = vweird.f32 %v2844
          %vm2851 = vmor %vm2849, %vm2850
          %v2852 = vsel %vm2851, %v2844, %v2848
          %v2853 = vand.u32 2147483647, %v2730
          %vm2854 = vcmp.eq.f32.partialorder %v2853, 8.507059e+37
          %v2855 = vand.u32 %v2730, 2147483648
          %v2856 = vor.u32 1.1754944e-38, %v2855
          %v2857 = vsel %vm2854, %v2856, %v2852
          %v2858 = vmul.f32 1.0, %v2857
          %v2859 = vrcp.pop %v2731
          %v2860 = vmul.f32 %v2731, %v2859
          %v2861 = vsub.f32 1.0, %v2860
          %v2862 = vmul.f32 %v2859, %v2861
          %v2863 = vadd.f32 %v2859, %v2862
          %vm2864 = vweird.f32 %v2731
          %vm2865 = vweird.f32 %v2859
          %vm2866 = vmor %vm2864, %vm2865
          %v2867 = vsel %vm2866, %v2859, %v2863
          %v2868 = vand.u32 2147483647, %v2731
          %vm2869 = vcmp.eq.f32.partialorder %v2868, 8.507059e+37
          %v2870 = vand.u32 %v2731, 2147483648
          %v2871 = vor.u32 1.1754944e-38, %v2870
          %v2872 = vsel %vm2869, %v2871, %v2867
          %v2873 = vmul.f32 1.0, %v2872
          %v2874 = vrcp.pop %v2732
          %v2875 = vmul.f32 %v2732, %v2874
          %v2876 = vsub.f32 1.0, %v2875
          %v2877 = vmul.f32 %v2874, %v2876
          %v2878 = vadd.f32 %v2874, %v2877
          %vm2879 = vweird.f32 %v2732
          %vm2880 = vweird.f32 %v2874
          %vm2881 = vmor %vm2879, %vm2880
          %v2882 = vsel %vm2881, %v2874, %v2878
          %v2883 = vand.u32 2147483647, %v2732
          %vm2884 = vcmp.eq.f32.partialorder %v2883, 8.507059e+37
          %v2885 = vand.u32 %v2732, 2147483648
          %v2886 = vor.u32 1.1754944e-38, %v2885
          %v2887 = vsel %vm2884, %v2886, %v2882
          %v2888 = vmul.f32 1.0, %v2887
          %v2889 = vrcp.pop %v2733
          %v2890 = vmul.f32 %v2733, %v2889
          %v2891 = vsub.f32 1.0, %v2890
          %v2892 = vmul.f32 %v2889, %v2891
          %v2893 = vadd.f32 %v2889, %v2892
          %vm2894 = vweird.f32 %v2733
          %vm2895 = vweird.f32 %v2889
          %vm2896 = vmor %vm2894, %vm2895
          %v2897 = vsel %vm2896, %v2889, %v2893
          %v2898 = vand.u32 2147483647, %v2733
          %vm2899 = vcmp.eq.f32.partialorder %v2898, 8.507059e+37
          %v2900 = vand.u32 %v2733, 2147483648
          %v2901 = vor.u32 1.1754944e-38, %v2900
          %v2902 = vsel %vm2899, %v2901, %v2897
          %v2903 = vmul.f32 1.0, %v2902
          %v2904 = vrcp.pop %v2734
          %v2905 = vmul.f32 %v2734, %v2904
          %v2906 = vsub.f32 1.0, %v2905
          %v2907 = vmul.f32 %v2904, %v2906
          %v2908 = vadd.f32 %v2904, %v2907
          %vm2909 = vweird.f32 %v2734
          %vm2910 = vweird.f32 %v2904
          %vm2911 = vmor %vm2909, %vm2910
          %v2912 = vsel %vm2911, %v2904, %v2908
          %v2913 = vand.u32 2147483647, %v2734
          %vm2914 = vcmp.eq.f32.partialorder %v2913, 8.507059e+37
          %v2915 = vand.u32 %v2734, 2147483648
          %v2916 = vor.u32 1.1754944e-38, %v2915
          %v2917 = vsel %vm2914, %v2916, %v2912
          %v2918 = vmul.f32 1.0, %v2917
          %v2919 = vrcp.pop %v2735
          %v2920 = vmul.f32 %v2735, %v2919
          %v2921 = vsub.f32 1.0, %v2920
          %v2922 = vmul.f32 %v2919, %v2921
          %v2923 = vadd.f32 %v2919, %v2922
          %vm2924 = vweird.f32 %v2735
          %vm2925 = vweird.f32 %v2919
          %vm2926 = vmor %vm2924, %vm2925
          %v2927 = vsel %vm2926, %v2919, %v2923
          %v2928 = vand.u32 2147483647, %v2735
          %vm2929 = vcmp.eq.f32.partialorder %v2928, 8.507059e+37
          %v2930 = vand.u32 %v2735, 2147483648
          %v2931 = vor.u32 1.1754944e-38, %v2930
          %v2932 = vsel %vm2929, %v2931, %v2927
          %v2933 = vmul.f32 1.0, %v2932
          %v2934 = vrcp.pop %v2736
          %v2935 = vmul.f32 %v2736, %v2934
          %v2936 = vsub.f32 1.0, %v2935
          %v2937 = vmul.f32 %v2934, %v2936
          %v2938 = vadd.f32 %v2934, %v2937
          %vm2939 = vweird.f32 %v2736
          %vm2940 = vweird.f32 %v2934
          %vm2941 = vmor %vm2939, %vm2940
          %v2942 = vsel %vm2941, %v2934, %v2938
          %v2943 = vand.u32 2147483647, %v2736
          %vm2944 = vcmp.eq.f32.partialorder %v2943, 8.507059e+37
          %v2945 = vand.u32 %v2736, 2147483648
          %v2946 = vor.u32 1.1754944e-38, %v2945
          %v2947 = vsel %vm2944, %v2946, %v2942
          %v2948 = vmul.f32 1.0, %v2947
          %v2949 = vrcp.pop %v2737
          %v2950 = vmul.f32 %v2737, %v2949
          %v2951 = vsub.f32 1.0, %v2950
          %v2952 = vmul.f32 %v2949, %v2951
          %v2953 = vadd.f32 %v2949, %v2952
          %vm2954 = vweird.f32 %v2737
          %vm2955 = vweird.f32 %v2949
          %vm2956 = vmor %vm2954, %vm2955
          %v2957 = vsel %vm2956, %v2949, %v2953
          %v2958 = vand.u32 2147483647, %v2737
          %vm2959 = vcmp.eq.f32.partialorder %v2958, 8.507059e+37
          %v2960 = vand.u32 %v2737, 2147483648
          %v2961 = vor.u32 1.1754944e-38, %v2960
          %v2962 = vsel %vm2959, %v2961, %v2957
          %v2963 = vmul.f32 1.0, %v2962
          %v2964 = vrcp.pop %v2738
          %v2965 = vmul.f32 %v2738, %v2964
          %v2966 = vsub.f32 1.0, %v2965
          %v2967 = vmul.f32 %v2964, %v2966
          %v2968 = vadd.f32 %v2964, %v2967
          %vm2969 = vweird.f32 %v2738
          %vm2970 = vweird.f32 %v2964
          %vm2971 = vmor %vm2969, %vm2970
          %v2972 = vsel %vm2971, %v2964, %v2968
          %v2973 = vand.u32 2147483647, %v2738
          %vm2974 = vcmp.eq.f32.partialorder %v2973, 8.507059e+37
          %v2975 = vand.u32 %v2738, 2147483648
          %v2976 = vor.u32 1.1754944e-38, %v2975
          %v2977 = vsel %vm2974, %v2976, %v2972
          %v2978 = vmul.f32 1.0, %v2977
          %v2979 = vmul.f32 %v2636, %v2753
          %v2980 = vmul.f32 %v2638, %v2768
          %v2981 = vmul.f32 %v2641, %v2783
          %v2982 = vmul.f32 %v2643, %v2798
          %v2983 = vmul.f32 %v2646, %v2813
          %v2984 = vmul.f32 %v2648, %v2828
          %v2985 = vmul.f32 %v2651, %v2843
          %v2986 = vmul.f32 %v2653, %v2858
          %v2987 = vmul.f32 %v2656, %v2873
          %v2988 = vmul.f32 %v2658, %v2888
          %v2989 = vmul.f32 %v2661, %v2903
          %v2990 = vmul.f32 %v2663, %v2918
          %v2991 = vmul.f32 %v2666, %v2933
          %v2992 = vmul.f32 %v2668, %v2948
          %v2993 = vmul.f32 %v2671, %v2963
          %v2994 = vmul.f32 %v2673, %v2978
          %v2995 = vpack.c.bf16 %v2980, %v2979
          %v2996 = vpack.c.bf16 %v2982, %v2981
          %v2997 = vpack.c.bf16 %v2984, %v2983
          %v2998 = vpack.c.bf16 %v2986, %v2985
          %v2999 = vpack.c.bf16 %v2988, %v2987
          %v3000 = vpack.c.bf16 %v2990, %v2989
          %v3001 = vpack.c.bf16 %v2992, %v2991
          %v3002 = vpack.c.bf16 %v2994, %v2993
          %s3003 = scalar_lea.vmem [#allocation13], 192
          %v3004 = vld [vmem:[%s3003] sm:$0xf]
          %v3005 = vld [vmem:[%s3003 + $0x4] sm:$0xf]
          %v3006 = vld [vmem:[%s3003 + $0x8] sm:$0xf]
          %v3007 = vld [vmem:[%s3003 + $0xc] sm:$0xf]
          %v3008 = vld [vmem:[%s3003 + $0x10] sm:$0xf]
          %v3009 = vld [vmem:[%s3003 + $0x14] sm:$0xf]
          %v3010 = vld [vmem:[%s3003 + $0x18] sm:$0xf]
          %v3011 = vld [vmem:[%s3003 + $0x1c] sm:$0xf]
          %v3012 = vld [vmem:[%s3003 + $0x20] sm:$0xf]
          %v3013 = vld [vmem:[%s3003 + $0x24] sm:$0xf]
          %v3014 = vld [vmem:[%s3003 + $0x28] sm:$0xf]
          %v3015 = vld [vmem:[%s3003 + $0x2c] sm:$0xf]
          %v3016 = vld [vmem:[%s3003 + $0x30] sm:$0xf]
          %v3017 = vld [vmem:[%s3003 + $0x34] sm:$0xf]
          %v3018 = vld [vmem:[%s3003 + $0x38] sm:$0xf]
          %v3019 = vld [vmem:[%s3003 + $0x3c] sm:$0xf]
          %v3036 = vunpack.c.l.b16 %v3004
          %v3037 = vunpack.c.l.b16 %v3005
          %v3038 = vunpack.c.l.b16 %v3006
          %v3039 = vunpack.c.l.b16 %v3007
          %v3040 = vunpack.c.l.b16 %v3008
          %v3041 = vunpack.c.l.b16 %v3009
          %v3042 = vunpack.c.l.b16 %v3010
          %v3043 = vunpack.c.l.b16 %v3011
          %v3044 = vunpack.c.l.b16 %v3012
          %v3045 = vunpack.c.l.b16 %v3013
          %v3046 = vunpack.c.l.b16 %v3014
          %v3047 = vunpack.c.l.b16 %v3015
          %v3048 = vunpack.c.l.b16 %v3016
          %v3049 = vunpack.c.l.b16 %v3017
          %v3050 = vunpack.c.l.b16 %v3018
          %v3051 = vunpack.c.l.b16 %v3019
          %v3052 = vpack.c.b16 %v3037, %v3036
          %v3053 = vpack.c.b16 %v3039, %v3038
          %v3054 = vpack.c.b16 %v3041, %v3040
          %v3055 = vpack.c.b16 %v3043, %v3042
          %v3056 = vpack.c.b16 %v3045, %v3044
          %v3057 = vpack.c.b16 %v3047, %v3046
          %v3058 = vpack.c.b16 %v3049, %v3048
          %v3059 = vpack.c.b16 %v3051, %v3050
          %3068 = vmatpush.bf16.msra.mxu0 %v3059
          %3069 = vmatpush.bf16.msra.mxu0 %v3058
          %3070 = vmatpush.bf16.msra.mxu0 %v3057
          %3071 = vmatpush.bf16.msra.mxu0 %v3056
          %3072 = vmatpush.bf16.msra.mxu0 %v3055
          %3073 = vmatpush.bf16.msra.mxu0 %v3054
          %3074 = vmatpush.bf16.msra.mxu0 %v3053
          %3075 = vmatpush.bf16.msra.mxu0 %v3052
          %3076 = vmatmul.bf16.gmra.mxu0 %v2995
          %v3077 = vpop.f32.mrf.mxu0
          %v3078 = vadd.f32 0.0, %v3077
          %v3079 = vpop.f32.mrf.mxu0
          %v3080 = vadd.f32 0.0, %v3079
          %3081 = vmatmul.bf16.gmra.mxu0 %v2996
          %v3082 = vpop.f32.mrf.mxu0
          %v3083 = vadd.f32 0.0, %v3082
          %v3084 = vpop.f32.mrf.mxu0
          %v3085 = vadd.f32 0.0, %v3084
          %3086 = vmatmul.bf16.gmra.mxu0 %v2997
          %v3087 = vpop.f32.mrf.mxu0
          %v3088 = vadd.f32 0.0, %v3087
          %v3089 = vpop.f32.mrf.mxu0
          %v3090 = vadd.f32 0.0, %v3089
          %3091 = vmatmul.bf16.gmra.mxu0 %v2998
          %v3092 = vpop.f32.mrf.mxu0
          %v3093 = vadd.f32 0.0, %v3092
          %v3094 = vpop.f32.mrf.mxu0
          %v3095 = vadd.f32 0.0, %v3094
          %3096 = vmatmul.bf16.gmra.mxu0 %v2999
          %v3097 = vpop.f32.mrf.mxu0
          %v3098 = vadd.f32 0.0, %v3097
          %v3099 = vpop.f32.mrf.mxu0
          %v3100 = vadd.f32 0.0, %v3099
          %3101 = vmatmul.bf16.gmra.mxu0 %v3000
          %v3102 = vpop.f32.mrf.mxu0
          %v3103 = vadd.f32 0.0, %v3102
          %v3104 = vpop.f32.mrf.mxu0
          %v3105 = vadd.f32 0.0, %v3104
          %3106 = vmatmul.bf16.gmra.mxu0 %v3001
          %v3107 = vpop.f32.mrf.mxu0
          %v3108 = vadd.f32 0.0, %v3107
          %v3109 = vpop.f32.mrf.mxu0
          %v3110 = vadd.f32 0.0, %v3109
          %3111 = vmatmul.bf16.gmra.mxu0 %v3002
          %v3112 = vpop.f32.mrf.mxu0
          %v3113 = vadd.f32 0.0, %v3112
          %v3114 = vpop.f32.mrf.mxu0
          %v3115 = vadd.f32 0.0, %v3114
          %3116 = vdwg.mxu0
          %v3117 = vxor.u32 %v3078, 2147483648
          %v3118 = vxor.u32 %v3080, 2147483648
          %v3119 = vxor.u32 %v3083, 2147483648
          %v3120 = vxor.u32 %v3085, 2147483648
          %v3121 = vxor.u32 %v3088, 2147483648
          %v3122 = vxor.u32 %v3090, 2147483648
          %v3123 = vxor.u32 %v3093, 2147483648
          %v3124 = vxor.u32 %v3095, 2147483648
          %v3125 = vxor.u32 %v3098, 2147483648
          %v3126 = vxor.u32 %v3100, 2147483648
          %v3127 = vxor.u32 %v3103, 2147483648
          %v3128 = vxor.u32 %v3105, 2147483648
          %v3129 = vxor.u32 %v3108, 2147483648
          %v3130 = vxor.u32 %v3110, 2147483648
          %v3131 = vxor.u32 %v3113, 2147483648
          %v3132 = vxor.u32 %v3115, 2147483648
          %v3133 = vmul.f32 %v3117, 1.442695
          %v3134 = vpow.pop %v3133
          %v3135 = vmul.f32 %v3118, 1.442695
          %v3136 = vpow.pop %v3135
          %v3137 = vmul.f32 %v3119, 1.442695
          %v3138 = vpow.pop %v3137
          %v3139 = vmul.f32 %v3120, 1.442695
          %v3140 = vpow.pop %v3139
          %v3141 = vmul.f32 %v3121, 1.442695
          %v3142 = vpow.pop %v3141
          %v3143 = vmul.f32 %v3122, 1.442695
          %v3144 = vpow.pop %v3143
          %v3145 = vmul.f32 %v3123, 1.442695
          %v3146 = vpow.pop %v3145
          %v3147 = vmul.f32 %v3124, 1.442695
          %v3148 = vpow.pop %v3147
          %v3149 = vmul.f32 %v3125, 1.442695
          %v3150 = vpow.pop %v3149
          %v3151 = vmul.f32 %v3126, 1.442695
          %v3152 = vpow.pop %v3151
          %v3153 = vmul.f32 %v3127, 1.442695
          %v3154 = vpow.pop %v3153
          %v3155 = vmul.f32 %v3128, 1.442695
          %v3156 = vpow.pop %v3155
          %v3157 = vmul.f32 %v3129, 1.442695
          %v3158 = vpow.pop %v3157
          %v3159 = vmul.f32 %v3130, 1.442695
          %v3160 = vpow.pop %v3159
          %v3161 = vmul.f32 %v3131, 1.442695
          %v3162 = vpow.pop %v3161
          %v3163 = vmul.f32 %v3132, 1.442695
          %v3164 = vpow.pop %v3163
          %v3165 = vadd.f32 %v3134, 1.0
          %v3166 = vadd.f32 %v3136, 1.0
          %v3167 = vadd.f32 %v3138, 1.0
          %v3168 = vadd.f32 %v3140, 1.0
          %v3169 = vadd.f32 %v3142, 1.0
          %v3170 = vadd.f32 %v3144, 1.0
          %v3171 = vadd.f32 %v3146, 1.0
          %v3172 = vadd.f32 %v3148, 1.0
          %v3173 = vadd.f32 %v3150, 1.0
          %v3174 = vadd.f32 %v3152, 1.0
          %v3175 = vadd.f32 %v3154, 1.0
          %v3176 = vadd.f32 %v3156, 1.0
          %v3177 = vadd.f32 %v3158, 1.0
          %v3178 = vadd.f32 %v3160, 1.0
          %v3179 = vadd.f32 %v3162, 1.0
          %v3180 = vadd.f32 %v3164, 1.0
          %v3181 = vrcp.pop %v3165
          %v3182 = vmul.f32 %v3165, %v3181
          %v3183 = vsub.f32 1.0, %v3182
          %v3184 = vmul.f32 %v3181, %v3183
          %v3185 = vadd.f32 %v3181, %v3184
          %vm3186 = vweird.f32 %v3165
          %vm3187 = vweird.f32 %v3181
          %vm3188 = vmor %vm3186, %vm3187
          %v3189 = vsel %vm3188, %v3181, %v3185
          %v3190 = vand.u32 2147483647, %v3165
          %vm3191 = vcmp.eq.f32.partialorder %v3190, 8.507059e+37
          %v3192 = vand.u32 %v3165, 2147483648
          %v3193 = vor.u32 1.1754944e-38, %v3192
          %v3194 = vsel %vm3191, %v3193, %v3189
          %v3195 = vmul.f32 1.0, %v3194
          %v3196 = vrcp.pop %v3166
          %v3197 = vmul.f32 %v3166, %v3196
          %v3198 = vsub.f32 1.0, %v3197
          %v3199 = vmul.f32 %v3196, %v3198
          %v3200 = vadd.f32 %v3196, %v3199
          %vm3201 = vweird.f32 %v3166
          %vm3202 = vweird.f32 %v3196
          %vm3203 = vmor %vm3201, %vm3202
          %v3204 = vsel %vm3203, %v3196, %v3200
          %v3205 = vand.u32 2147483647, %v3166
          %vm3206 = vcmp.eq.f32.partialorder %v3205, 8.507059e+37
          %v3207 = vand.u32 %v3166, 2147483648
          %v3208 = vor.u32 1.1754944e-38, %v3207
          %v3209 = vsel %vm3206, %v3208, %v3204
          %v3210 = vmul.f32 1.0, %v3209
          %v3211 = vrcp.pop %v3167
          %v3212 = vmul.f32 %v3167, %v3211
          %v3213 = vsub.f32 1.0, %v3212
          %v3214 = vmul.f32 %v3211, %v3213
          %v3215 = vadd.f32 %v3211, %v3214
          %vm3216 = vweird.f32 %v3167
          %vm3217 = vweird.f32 %v3211
          %vm3218 = vmor %vm3216, %vm3217
          %v3219 = vsel %vm3218, %v3211, %v3215
          %v3220 = vand.u32 2147483647, %v3167
          %vm3221 = vcmp.eq.f32.partialorder %v3220, 8.507059e+37
          %v3222 = vand.u32 %v3167, 2147483648
          %v3223 = vor.u32 1.1754944e-38, %v3222
          %v3224 = vsel %vm3221, %v3223, %v3219
          %v3225 = vmul.f32 1.0, %v3224
          %v3226 = vrcp.pop %v3168
          %v3227 = vmul.f32 %v3168, %v3226
          %v3228 = vsub.f32 1.0, %v3227
          %v3229 = vmul.f32 %v3226, %v3228
          %v3230 = vadd.f32 %v3226, %v3229
          %vm3231 = vweird.f32 %v3168
          %vm3232 = vweird.f32 %v3226
          %vm3233 = vmor %vm3231, %vm3232
          %v3234 = vsel %vm3233, %v3226, %v3230
          %v3235 = vand.u32 2147483647, %v3168
          %vm3236 = vcmp.eq.f32.partialorder %v3235, 8.507059e+37
          %v3237 = vand.u32 %v3168, 2147483648
          %v3238 = vor.u32 1.1754944e-38, %v3237
          %v3239 = vsel %vm3236, %v3238, %v3234
          %v3240 = vmul.f32 1.0, %v3239
          %v3241 = vrcp.pop %v3169
          %v3242 = vmul.f32 %v3169, %v3241
          %v3243 = vsub.f32 1.0, %v3242
          %v3244 = vmul.f32 %v3241, %v3243
          %v3245 = vadd.f32 %v3241, %v3244
          %vm3246 = vweird.f32 %v3169
          %vm3247 = vweird.f32 %v3241
          %vm3248 = vmor %vm3246, %vm3247
          %v3249 = vsel %vm3248, %v3241, %v3245
          %v3250 = vand.u32 2147483647, %v3169
          %vm3251 = vcmp.eq.f32.partialorder %v3250, 8.507059e+37
          %v3252 = vand.u32 %v3169, 2147483648
          %v3253 = vor.u32 1.1754944e-38, %v3252
          %v3254 = vsel %vm3251, %v3253, %v3249
          %v3255 = vmul.f32 1.0, %v3254
          %v3256 = vrcp.pop %v3170
          %v3257 = vmul.f32 %v3170, %v3256
          %v3258 = vsub.f32 1.0, %v3257
          %v3259 = vmul.f32 %v3256, %v3258
          %v3260 = vadd.f32 %v3256, %v3259
          %vm3261 = vweird.f32 %v3170
          %vm3262 = vweird.f32 %v3256
          %vm3263 = vmor %vm3261, %vm3262
          %v3264 = vsel %vm3263, %v3256, %v3260
          %v3265 = vand.u32 2147483647, %v3170
          %vm3266 = vcmp.eq.f32.partialorder %v3265, 8.507059e+37
          %v3267 = vand.u32 %v3170, 2147483648
          %v3268 = vor.u32 1.1754944e-38, %v3267
          %v3269 = vsel %vm3266, %v3268, %v3264
          %v3270 = vmul.f32 1.0, %v3269
          %v3271 = vrcp.pop %v3171
          %v3272 = vmul.f32 %v3171, %v3271
          %v3273 = vsub.f32 1.0, %v3272
          %v3274 = vmul.f32 %v3271, %v3273
          %v3275 = vadd.f32 %v3271, %v3274
          %vm3276 = vweird.f32 %v3171
          %vm3277 = vweird.f32 %v3271
          %vm3278 = vmor %vm3276, %vm3277
          %v3279 = vsel %vm3278, %v3271, %v3275
          %v3280 = vand.u32 2147483647, %v3171
          %vm3281 = vcmp.eq.f32.partialorder %v3280, 8.507059e+37
          %v3282 = vand.u32 %v3171, 2147483648
          %v3283 = vor.u32 1.1754944e-38, %v3282
          %v3284 = vsel %vm3281, %v3283, %v3279
          %v3285 = vmul.f32 1.0, %v3284
          %v3286 = vrcp.pop %v3172
          %v3287 = vmul.f32 %v3172, %v3286
          %v3288 = vsub.f32 1.0, %v3287
          %v3289 = vmul.f32 %v3286, %v3288
          %v3290 = vadd.f32 %v3286, %v3289
          %vm3291 = vweird.f32 %v3172
          %vm3292 = vweird.f32 %v3286
          %vm3293 = vmor %vm3291, %vm3292
          %v3294 = vsel %vm3293, %v3286, %v3290
          %v3295 = vand.u32 2147483647, %v3172
          %vm3296 = vcmp.eq.f32.partialorder %v3295, 8.507059e+37
          %v3297 = vand.u32 %v3172, 2147483648
          %v3298 = vor.u32 1.1754944e-38, %v3297
          %v3299 = vsel %vm3296, %v3298, %v3294
          %v3300 = vmul.f32 1.0, %v3299
          %v3301 = vrcp.pop %v3173
          %v3302 = vmul.f32 %v3173, %v3301
          %v3303 = vsub.f32 1.0, %v3302
          %v3304 = vmul.f32 %v3301, %v3303
          %v3305 = vadd.f32 %v3301, %v3304
          %vm3306 = vweird.f32 %v3173
          %vm3307 = vweird.f32 %v3301
          %vm3308 = vmor %vm3306, %vm3307
          %v3309 = vsel %vm3308, %v3301, %v3305
          %v3310 = vand.u32 2147483647, %v3173
          %vm3311 = vcmp.eq.f32.partialorder %v3310, 8.507059e+37
          %v3312 = vand.u32 %v3173, 2147483648
          %v3313 = vor.u32 1.1754944e-38, %v3312
          %v3314 = vsel %vm3311, %v3313, %v3309
          %v3315 = vmul.f32 1.0, %v3314
          %v3316 = vrcp.pop %v3174
          %v3317 = vmul.f32 %v3174, %v3316
          %v3318 = vsub.f32 1.0, %v3317
          %v3319 = vmul.f32 %v3316, %v3318
          %v3320 = vadd.f32 %v3316, %v3319
          %vm3321 = vweird.f32 %v3174
          %vm3322 = vweird.f32 %v3316
          %vm3323 = vmor %vm3321, %vm3322
          %v3324 = vsel %vm3323, %v3316, %v3320
          %v3325 = vand.u32 2147483647, %v3174
          %vm3326 = vcmp.eq.f32.partialorder %v3325, 8.507059e+37
          %v3327 = vand.u32 %v3174, 2147483648
          %v3328 = vor.u32 1.1754944e-38, %v3327
          %v3329 = vsel %vm3326, %v3328, %v3324
          %v3330 = vmul.f32 1.0, %v3329
          %v3331 = vrcp.pop %v3175
          %v3332 = vmul.f32 %v3175, %v3331
          %v3333 = vsub.f32 1.0, %v3332
          %v3334 = vmul.f32 %v3331, %v3333
          %v3335 = vadd.f32 %v3331, %v3334
          %vm3336 = vweird.f32 %v3175
          %vm3337 = vweird.f32 %v3331
          %vm3338 = vmor %vm3336, %vm3337
          %v3339 = vsel %vm3338, %v3331, %v3335
          %v3340 = vand.u32 2147483647, %v3175
          %vm3341 = vcmp.eq.f32.partialorder %v3340, 8.507059e+37
          %v3342 = vand.u32 %v3175, 2147483648
          %v3343 = vor.u32 1.1754944e-38, %v3342
          %v3344 = vsel %vm3341, %v3343, %v3339
          %v3345 = vmul.f32 1.0, %v3344
          %v3346 = vrcp.pop %v3176
          %v3347 = vmul.f32 %v3176, %v3346
          %v3348 = vsub.f32 1.0, %v3347
          %v3349 = vmul.f32 %v3346, %v3348
          %v3350 = vadd.f32 %v3346, %v3349
          %vm3351 = vweird.f32 %v3176
          %vm3352 = vweird.f32 %v3346
          %vm3353 = vmor %vm3351, %vm3352
          %v3354 = vsel %vm3353, %v3346, %v3350
          %v3355 = vand.u32 2147483647, %v3176
          %vm3356 = vcmp.eq.f32.partialorder %v3355, 8.507059e+37
          %v3357 = vand.u32 %v3176, 2147483648
          %v3358 = vor.u32 1.1754944e-38, %v3357
          %v3359 = vsel %vm3356, %v3358, %v3354
          %v3360 = vmul.f32 1.0, %v3359
          %v3361 = vrcp.pop %v3177
          %v3362 = vmul.f32 %v3177, %v3361
          %v3363 = vsub.f32 1.0, %v3362
          %v3364 = vmul.f32 %v3361, %v3363
          %v3365 = vadd.f32 %v3361, %v3364
          %vm3366 = vweird.f32 %v3177
          %vm3367 = vweird.f32 %v3361
          %vm3368 = vmor %vm3366, %vm3367
          %v3369 = vsel %vm3368, %v3361, %v3365
          %v3370 = vand.u32 2147483647, %v3177
          %vm3371 = vcmp.eq.f32.partialorder %v3370, 8.507059e+37
          %v3372 = vand.u32 %v3177, 2147483648
          %v3373 = vor.u32 1.1754944e-38, %v3372
          %v3374 = vsel %vm3371, %v3373, %v3369
          %v3375 = vmul.f32 1.0, %v3374
          %v3376 = vrcp.pop %v3178
          %v3377 = vmul.f32 %v3178, %v3376
          %v3378 = vsub.f32 1.0, %v3377
          %v3379 = vmul.f32 %v3376, %v3378
          %v3380 = vadd.f32 %v3376, %v3379
          %vm3381 = vweird.f32 %v3178
          %vm3382 = vweird.f32 %v3376
          %vm3383 = vmor %vm3381, %vm3382
          %v3384 = vsel %vm3383, %v3376, %v3380
          %v3385 = vand.u32 2147483647, %v3178
          %vm3386 = vcmp.eq.f32.partialorder %v3385, 8.507059e+37
          %v3387 = vand.u32 %v3178, 2147483648
          %v3388 = vor.u32 1.1754944e-38, %v3387
          %v3389 = vsel %vm3386, %v3388, %v3384
          %v3390 = vmul.f32 1.0, %v3389
          %v3391 = vrcp.pop %v3179
          %v3392 = vmul.f32 %v3179, %v3391
          %v3393 = vsub.f32 1.0, %v3392
          %v3394 = vmul.f32 %v3391, %v3393
          %v3395 = vadd.f32 %v3391, %v3394
          %vm3396 = vweird.f32 %v3179
          %vm3397 = vweird.f32 %v3391
          %vm3398 = vmor %vm3396, %vm3397
          %v3399 = vsel %vm3398, %v3391, %v3395
          %v3400 = vand.u32 2147483647, %v3179
          %vm3401 = vcmp.eq.f32.partialorder %v3400, 8.507059e+37
          %v3402 = vand.u32 %v3179, 2147483648
          %v3403 = vor.u32 1.1754944e-38, %v3402
          %v3404 = vsel %vm3401, %v3403, %v3399
          %v3405 = vmul.f32 1.0, %v3404
          %v3406 = vrcp.pop %v3180
          %v3407 = vmul.f32 %v3180, %v3406
          %v3408 = vsub.f32 1.0, %v3407
          %v3409 = vmul.f32 %v3406, %v3408
          %v3410 = vadd.f32 %v3406, %v3409
          %vm3411 = vweird.f32 %v3180
          %vm3412 = vweird.f32 %v3406
          %vm3413 = vmor %vm3411, %vm3412
          %v3414 = vsel %vm3413, %v3406, %v3410
          %v3415 = vand.u32 2147483647, %v3180
          %vm3416 = vcmp.eq.f32.partialorder %v3415, 8.507059e+37
          %v3417 = vand.u32 %v3180, 2147483648
          %v3418 = vor.u32 1.1754944e-38, %v3417
          %v3419 = vsel %vm3416, %v3418, %v3414
          %v3420 = vmul.f32 1.0, %v3419
          %v3421 = vmul.f32 %v3078, %v3195
          %v3422 = vmul.f32 %v3080, %v3210
          %v3423 = vmul.f32 %v3083, %v3225
          %v3424 = vmul.f32 %v3085, %v3240
          %v3425 = vmul.f32 %v3088, %v3255
          %v3426 = vmul.f32 %v3090, %v3270
          %v3427 = vmul.f32 %v3093, %v3285
          %v3428 = vmul.f32 %v3095, %v3300
          %v3429 = vmul.f32 %v3098, %v3315
          %v3430 = vmul.f32 %v3100, %v3330
          %v3431 = vmul.f32 %v3103, %v3345
          %v3432 = vmul.f32 %v3105, %v3360
          %v3433 = vmul.f32 %v3108, %v3375
          %v3434 = vmul.f32 %v3110, %v3390
          %v3435 = vmul.f32 %v3113, %v3405
          %v3436 = vmul.f32 %v3115, %v3420
          %v3437 = vadd.f32 %v2537, %v3421
          %v3438 = vadd.f32 %v2538, %v3422
          %v3439 = vadd.f32 %v2539, %v3423
          %v3440 = vadd.f32 %v2540, %v3424
          %v3441 = vadd.f32 %v2541, %v3425
          %v3442 = vadd.f32 %v2542, %v3426
          %v3443 = vadd.f32 %v2543, %v3427
          %v3444 = vadd.f32 %v2544, %v3428
          %v3445 = vadd.f32 %v2545, %v3429
          %v3446 = vadd.f32 %v2546, %v3430
          %v3447 = vadd.f32 %v2547, %v3431
          %v3448 = vadd.f32 %v2548, %v3432
          %v3449 = vadd.f32 %v2549, %v3433
          %v3450 = vadd.f32 %v2550, %v3434
          %v3451 = vadd.f32 %v2551, %v3435
          %v3452 = vadd.f32 %v2552, %v3436
          %v3453 = vmul.f32 %v3437, 0.70710677
          %v3454 = vmul.f32 %v3438, 0.70710677
          %v3455 = vmul.f32 %v3439, 0.70710677
          %v3456 = vmul.f32 %v3440, 0.70710677
          %v3457 = vmul.f32 %v3441, 0.70710677
          %v3458 = vmul.f32 %v3442, 0.70710677
          %v3459 = vmul.f32 %v3443, 0.70710677
          %v3460 = vmul.f32 %v3444, 0.70710677
          %v3461 = vmul.f32 %v3445, 0.70710677
          %v3462 = vmul.f32 %v3446, 0.70710677
          %v3463 = vmul.f32 %v3447, 0.70710677
          %v3464 = vmul.f32 %v3448, 0.70710677
          %v3465 = vmul.f32 %v3449, 0.70710677
          %v3466 = vmul.f32 %v3450, 0.70710677
          %v3467 = vmul.f32 %v3451, 0.70710677
          %v3468 = vmul.f32 %v3452, 0.70710677
          %3469 = vst [vmem:[%s440] sm:$0xff] %v3453
          %3470 = vst [vmem:[%s440 + $0x8] sm:$0xff] %v3454
          %3471 = vst [vmem:[%s440 + $0x10] sm:$0xff] %v3455
          %3472 = vst [vmem:[%s440 + $0x18] sm:$0xff] %v3456
          %3473 = vst [vmem:[%s440 + $0x20] sm:$0xff] %v3457
          %3474 = vst [vmem:[%s440 + $0x28] sm:$0xff] %v3458
          %3475 = vst [vmem:[%s440 + $0x30] sm:$0xff] %v3459
          %3476 = vst [vmem:[%s440 + $0x38] sm:$0xff] %v3460
          %3477 = vst [vmem:[%s440 + $0x40] sm:$0xff] %v3461
          %3478 = vst [vmem:[%s440 + $0x48] sm:$0xff] %v3462
          %3479 = vst [vmem:[%s440 + $0x50] sm:$0xff] %v3463
          %3480 = vst [vmem:[%s440 + $0x58] sm:$0xff] %v3464
          %3481 = vst [vmem:[%s440 + $0x60] sm:$0xff] %v3465
          %3482 = vst [vmem:[%s440 + $0x68] sm:$0xff] %v3466
          %3483 = vst [vmem:[%s440 + $0x70] sm:$0xff] %v3467
          %3484 = vst [vmem:[%s440 + $0x78] sm:$0xff] %v3468
        $region80: #{tpu_custom_call.1} parent=47 // pred_fallthru
          _
        %s3485 = sand.u32 %s213, 1
        %s3486 = scalar_lea.sflag [#allocation6], %s3485
        %s3487 = sand.u32 %s213, 1
        %s3488 = smul.addr %s3487, 128
        %s3489 = scalar_lea.vmem [#allocation15], %s3488
        // Predicated region
        $region81: #{tpu_custom_call.1} parent=47 // pred_check
          %p3490 = pneg %p223
        $region82: #{tpu_custom_call.1} parent=47 // pred_check_branch
          %3492 = sbr.rel (%p3490) target = $region84
        $region83: #{tpu_custom_call.1} parent=47 // pred_region
          %s3493 = smul.u32 16, %s35
          %3495 = vsyncadd %s3486, 0
          %s3496 = smul.addr %s3493, 8
          %s3497 = scalar_lea.hbm %s7, %s3496
          %s3498 = sshll.u32 %s3489, 4
          %s3499 = int_to_ptr.vmem [resolvable:$true] %s3498
          %s3500 = sshll.u32 %s3497, 4
          %s3501 = int_to_ptr.hbm [resolvable:$true] %s3500
          %3506 = dma.vmem_to_hbm [thread:$0]  %s3499, 2048, %s3501, %s3486, 128, 128, 8
        $region84: #{tpu_custom_call.1} parent=47 // pred_fallthru
          _
      $region48: #{tpu_custom_call.1} parent=5 // pred_fallthru
        _
      %p3507 = scmp.le.s32.totalorder 2, %s26
      // Predicated region
      $region85: #{tpu_custom_call.1} parent=5 // pred_check
        %p3508 = pneg %p3507
      $region86: #{tpu_custom_call.1} parent=5 // pred_check_branch
        %3510 = sbr.rel (%p3508) target = $region88
      $region87: #{tpu_custom_call.1} parent=5 // pred_region
        %s3511 = ssub.s32 %s26, 2
        // Predicated region
        $region89: #{tpu_custom_call.1} parent=87 // pred_check
          %p3512 = pneg %p229
        $region90: #{tpu_custom_call.1} parent=87 // pred_check_branch
          %3514 = sbr.rel (%p3512) target = $region92
        $region91: #{tpu_custom_call.1} parent=87 // pred_region
          %s3515 = sand.u32 %s214, 1
          %s3516 = scalar_lea.sflag [#allocation6], %s3515
          %s3517 = sand.u32 %s214, 1
          %s3518 = smul.addr %s3517, 128
          %s3519 = scalar_lea.vmem [#allocation15], %s3518
          %3521 = dma.done %s3516, 2048
        $region92: #{tpu_custom_call.1} parent=87 // pred_fallthru
          _
      $region88: #{tpu_custom_call.1} parent=5 // pred_fallthru
        _
    $region6: #{tpu_custom_call.1} parent=1 // loop_footer
      %s30 = sadd.s32 1, %s26
    $region7: #{tpu_custom_call.1} parent=1 // loop_footer_branch
      %25 = sbr.rel target = $region3
    $region8: #{tpu_custom_call.1} parent=1 // loop_exit
      _
    %3522 = vsyncpa [#allocation5], 1
    %s3523 = scalar_lea.sflag [#allocation5], 1
    %3524 = vsyncpa %s3523, 1
    %3525 = vsyncpa [#allocation8], 1
    %s3526 = scalar_lea.sflag [#allocation8], 1
    %3527 = vsyncpa %s3526, 1
    %3528 = vsyncpa [#allocation11], 1
    %3529 = vsyncpa [#allocation14], 1
    %3530 = vsyncpa [#allocation6], 1
    %s3531 = scalar_lea.sflag [#allocation6], 1
    %3532 = vsyncpa %s3531, 1

</llo_original>
